<compile_context>
chip_gen: v5e
topology: v5e:2x2
jax: 0.10.0
libtpu: 0.0.40
codegen_flags: <defaults>
</compile_context>

<pallas_src>
import jax
import jax.numpy as jnp
from jax import lax
from jax.experimental import pallas as pl
from jax.experimental.pallas import tpu as pltpu

DIM_EMB = 100
NUM_FILTERS = 300
NUM_CLASSES = 2

DIM_PAD = 128          # embedding channels padded to one lane group
F3_PAD = 1024          # 3*300 = 900 real filter columns, padded to 1024 lanes
C_PAD = 128            # classes padded to one lane group (lane-dense output)
K_TAPS = 3             # max conv kernel size
B_TILE = 128           # default sequences per grid step (bt*L = 1024 MXU rows)
NEG = -1e30            # additive mask value (finite; avoids -inf arithmetic)


def cnn_kernel(x_ref, wconv_ref, bconv_ref, wfc_ref, bfc_ref, mask_ref, o_ref):
    bt = o_ref.shape[0]                      # sequences in this tile
    rows = x_ref.shape[0]                    # bt * L
    L = rows // bt
    F3 = wconv_ref.shape[1]

    # LHS taps: x_t, x_{t+1}, x_{t+2}. Rolls are done in f32 (cheap, safe
    # sublane rotate) and cast back to bf16 for the MXU. Rows that wrap across
    # a sequence (or tile) boundary are killed by the additive time mask.
    x0 = x_ref[...]                                           # (rows,128) bf16
    xf = x0.astype(jnp.float32)
    x1 = pltpu.roll(xf, shift=rows - 1, axis=0).astype(jnp.bfloat16)
    x2 = pltpu.roll(xf, shift=rows - 2, axis=0).astype(jnp.bfloat16)

    # Conv matmuls, one per tap (bf16 in, f32 accumulate). Weight row block j
    # holds tap-j filters of all three convs packed contiguously on lanes.
    w0 = wconv_ref[0:DIM_PAD, :]
    w1 = wconv_ref[DIM_PAD:2 * DIM_PAD, :]
    w2 = wconv_ref[2 * DIM_PAD:3 * DIM_PAD, :]
    y = jnp.dot(x0, w0, preferred_element_type=jnp.float32)
    y = y + jnp.dot(x1, w1, preferred_element_type=jnp.float32)
    y = y + jnp.dot(x2, w2, preferred_element_type=jnp.float32)   # (rows, F3)

    # Valid-padding time mask (resident, additive 0/-1e30), then max over time,
    # then hoisted conv bias + ReLU (bias is constant over time).
    y = y.reshape(bt, L, F3) + mask_ref[...]                  # (bt,L,F3)+(L,F3)
    pooled = jnp.max(y, axis=1)                               # (bt, F3)
    act = jnp.maximum(pooled + bconv_ref[...], 0.0)

    # FC: bf16 MXU matmul with f32 accumulation into a lane-dense logits slab.
    logits = jnp.dot(act.astype(jnp.bfloat16), wfc_ref[...],
                     preferred_element_type=jnp.float32) + bfc_ref[...]

    # Numerically-stable log-softmax over the first NUM_CLASSES lanes only.
    lane = lax.broadcasted_iota(jnp.int32, logits.shape, 1)
    valid = lane < NUM_CLASSES
    zmax = jnp.max(jnp.where(valid, logits, NEG), axis=-1, keepdims=True)
    z = logits - zmax
    lse = jnp.log(jnp.sum(jnp.where(valid, jnp.exp(z), 0.0),
                          axis=-1, keepdims=True))
    o_ref[...] = z - lse


def prepare_params(params):
    """Pack torch-layout params into the padded kernel layout (host-side)."""
    w1, b1, w2, b2, w3, b3, wfc, bfc = params
    F = NUM_FILTERS

    # Row block j multiplies x_{t+j}; columns [0,300)=conv1, [300,600)=conv2,
    # [600,900)=conv3, [900,1024) zero padding.
    wconv = jnp.zeros((K_TAPS * DIM_PAD, F3_PAD), jnp.float32)
    wconv = wconv.at[0:DIM_EMB, 0:F].set(w1[0])
    wconv = wconv.at[0:DIM_EMB, F:2 * F].set(w2[0])
    wconv = wconv.at[0:DIM_EMB, 2 * F:3 * F].set(w3[0])
    wconv = wconv.at[DIM_PAD:DIM_PAD + DIM_EMB, F:2 * F].set(w2[1])
    wconv = wconv.at[DIM_PAD:DIM_PAD + DIM_EMB, 2 * F:3 * F].set(w3[1])
    wconv = wconv.at[2 * DIM_PAD:2 * DIM_PAD + DIM_EMB, 2 * F:3 * F].set(w3[2])
    wconv = wconv.astype(jnp.bfloat16)

    bconv = jnp.zeros((1, F3_PAD), jnp.float32)
    bconv = bconv.at[:, 0:F].set(b1)
    bconv = bconv.at[:, F:2 * F].set(b2)
    bconv = bconv.at[:, 2 * F:3 * F].set(b3)

    wfc_p = jnp.zeros((F3_PAD, C_PAD), jnp.float32)
    wfc_p = wfc_p.at[0:F, 0:NUM_CLASSES].set(wfc[0])
    wfc_p = wfc_p.at[F:2 * F, 0:NUM_CLASSES].set(wfc[1])
    wfc_p = wfc_p.at[2 * F:3 * F, 0:NUM_CLASSES].set(wfc[2])
    wfc_p = wfc_p.astype(jnp.bfloat16)

    bfc_p = jnp.zeros((1, C_PAD), jnp.float32).at[:, 0:NUM_CLASSES].set(bfc)
    return wconv, bconv, wfc_p, bfc_p


def make_time_mask(L):
    """(L, F3_PAD) additive mask: 0 where conv output position is valid,
    -1e30 where the kernel-size-k window would run past the sequence end."""
    t = jnp.arange(L)[:, None]
    c = jnp.arange(F3_PAD)[None, :]
    km1 = jnp.where(c < NUM_FILTERS, 0,
          jnp.where(c < 2 * NUM_FILTERS, 1,
          jnp.where(c < 3 * NUM_FILTERS, 2, 0)))
    return jnp.where(t + km1 < L, 0.0, NEG).astype(jnp.float32)


def prepare_inputs(xb, b_tile):
    """Pad channels to 128, cast to bf16, pad batch, flatten to (b_pad*L, 128)."""
    B, L, _ = xb.shape
    b_pad = ((B + b_tile - 1) // b_tile) * b_tile
    xp = jnp.zeros((b_pad, L, DIM_PAD), jnp.bfloat16)
    xp = xp.at[:B, :, :DIM_EMB].set(xb.astype(jnp.bfloat16))
    return xp.reshape(b_pad * L, DIM_PAD), b_pad


def cnn_forward_batch(xb, kparams, b_tile=B_TILE):
    """Batched forward: xb is (B, L, DIM_EMB) f32 -> (B, NUM_CLASSES) f32.

    For v7x, pick b_tile so the grid has >= 2 steps for your batch size, so the
    "parallel" axis can split across the two TensorCores."""
    wconv, bconv, wfc_p, bfc_p = kparams
    B, L, _ = xb.shape
    assert L >= K_TAPS, "sequence length must be >= 3 (as in the PyTorch module)"
    x_flat, b_pad = prepare_inputs(xb, b_tile)
    mask = make_time_mask(L)

    out = pl.pallas_call(
        cnn_kernel,
        out_shape=jax.ShapeDtypeStruct((b_pad, C_PAD), jnp.float32),
        grid=(b_pad // b_tile,),
        in_specs=[
            # x streams per grid step (double-buffered by the pipeline).
            pl.BlockSpec((b_tile * L, DIM_PAD), lambda i: (i, 0)),
            # Weights / biases / mask: constant block index -> VMEM-resident.
            pl.BlockSpec((K_TAPS * DIM_PAD, F3_PAD), lambda i: (0, 0)),
            pl.BlockSpec((1, F3_PAD), lambda i: (0, 0)),
            pl.BlockSpec((F3_PAD, C_PAD), lambda i: (0, 0)),
            pl.BlockSpec((1, C_PAD), lambda i: (0, 0)),
            pl.BlockSpec((L, F3_PAD), lambda i: (0, 0)),
        ],
        out_specs=pl.BlockSpec((b_tile, C_PAD), lambda i: (i, 0)),
        compiler_params=pltpu.CompilerParams(
            dimension_semantics=("parallel",),
            vmem_limit_bytes=48 * 1024 * 1024),   # headroom for b_tile=128-256
    )(x_flat, wconv, bconv, wfc_p, bfc_p, mask)
    return out[:B, :NUM_CLASSES]


def cnn_forward(x, kparams):
    """Single-sequence forward matching the PyTorch module: (L, DIM_EMB) -> (2,)."""
    return cnn_forward_batch(x[None], kparams, b_tile=8)[0]


def ref_forward(x, params):
    """Pure-JAX reference of the PyTorch forward (x / conv / FC weights
    quantized to bf16 to mirror the kernel's matmul input dtypes)."""
    w1, b1, w2, b2, w3, b3, wfc, bfc = params
    q = lambda a: a.astype(jnp.bfloat16).astype(jnp.float32)
    xq = q(x)
    L = x.shape[0]

    def conv_max(w, b, k):
        out = b
        for j in range(k):
            out = out + xq[j:L - k + 1 + j] @ q(w[j])
        return jnp.max(out, axis=0, keepdims=True)

    pooled = jnp.concatenate(
        [conv_max(w1, b1, 1), conv_max(w2, b2, 2), conv_max(w3, b3, 3)], axis=1)
    nonlin = jnp.maximum(pooled, 0.0)
    wfc_full = jnp.concatenate([wfc[0], wfc[1], wfc[2]], axis=0)   # (3F, 2)
    logits = q(nonlin) @ q(wfc_full) + bfc
    return jax.nn.log_softmax(logits, axis=-1).reshape(NUM_CLASSES)


if __name__ == "__main__":
    key = jax.random.PRNGKey(0)
    keys = jax.random.split(key, 10)
    L = 8  # sequence length (small; must be >= 3)

    x = jax.random.normal(keys[0], (L, DIM_EMB), jnp.float32)

    def uinit(k, shape, fan_in):
        bound = 1.0 / (fan_in ** 0.5)
        return jax.random.uniform(k, shape, jnp.float32, -bound, bound)

    # Conv1d(C -> F, k): torch weight (F, C, k) stored here as (k, C, F)
    w1 = uinit(keys[1], (1, DIM_EMB, NUM_FILTERS), DIM_EMB * 1)
    b1 = uinit(keys[2], (1, NUM_FILTERS), DIM_EMB * 1)
    w2 = uinit(keys[3], (2, DIM_EMB, NUM_FILTERS), DIM_EMB * 2)
    b2 = uinit(keys[4], (1, NUM_FILTERS), DIM_EMB * 2)
    w3 = uinit(keys[5], (3, DIM_EMB, NUM_FILTERS), DIM_EMB * 3)
    b3 = uinit(keys[6], (1, NUM_FILTERS), DIM_EMB * 3)
    # Linear(3F -> 2): torch weight (2, 3F) stored here as 3 chunks (3, F, 2)
    wfc = uinit(keys[7], (3, NUM_FILTERS, NUM_CLASSES), NUM_FILTERS * 3)
    bfc = uinit(keys[8], (1, NUM_CLASSES), NUM_FILTERS * 3)

    params = (w1, b1, w2, b2, w3, b3, wfc, bfc)
    kparams = prepare_params(params)

    # 1) Single-example forward (module semantics).
    out1 = jax.block_until_ready(cnn_forward(x, kparams))
    ref1 = ref_forward(x, params)
    assert out1.shape == (NUM_CLASSES,)
    assert jnp.allclose(out1, ref1, atol=5e-3, rtol=5e-3), (out1, ref1)

    # 2) Batched run: 32 sequences, b_tile=16 -> 2 grid steps (exercises the
    #    streaming pipeline and the v7x-parallel grid split) at small shapes.
    B = 32
    xb = jax.random.normal(keys[9], (B, L, DIM_EMB), jnp.float32)
    outb = jax.block_until_ready(cnn_forward_batch(xb, kparams, b_tile=16))
    refb = jnp.stack([ref_forward(xb[i], params) for i in range(B)])
    assert outb.shape == (B, NUM_CLASSES)
    assert jnp.allclose(outb, refb, atol=5e-3, rtol=5e-3), (outb, refb)

    print("KERNEL_OK")
</pallas_src>

<mosaic_0001>
module attributes {stable_mosaic.version = 11 : i64} {
  func.func @cnn_kernel(%arg0: i32, %arg1: memref<64x128xbf16, #tpu.memory_space<vmem>>, %arg2: memref<384x1024xbf16, #tpu.memory_space<vmem>>, %arg3: memref<1x1024xf32, #tpu.memory_space<vmem>>, %arg4: memref<1024x128xbf16, #tpu.memory_space<vmem>>, %arg5: memref<1x128xf32, #tpu.memory_space<vmem>>, %arg6: memref<8x1024xf32, #tpu.memory_space<vmem>>, %arg7: memref<8x128xf32, #tpu.memory_space<vmem>>) attributes {dimension_semantics = [#tpu.dimension_semantics<parallel>], iteration_bounds = array<i64: 1>, scalar_prefetch = 0 : i64, scratch_operands = 0 : i64, tpu.core_type = #tpu.core_type<tc>, window_params = [{transform_indices = @transform_0, window_bounds = array<i64: 64, 128>}, {pipeline_mode = #tpu.pipeline_mode<synchronous>, transform_indices = @transform_1, window_bounds = array<i64: 384, 1024>}, {pipeline_mode = #tpu.pipeline_mode<synchronous>, transform_indices = @transform_2, window_bounds = array<i64: 1, 1024>}, {pipeline_mode = #tpu.pipeline_mode<synchronous>, transform_indices = @transform_3, window_bounds = array<i64: 1024, 128>}, {pipeline_mode = #tpu.pipeline_mode<synchronous>, transform_indices = @transform_4, window_bounds = array<i64: 1, 128>}, {pipeline_mode = #tpu.pipeline_mode<synchronous>, transform_indices = @transform_5, window_bounds = array<i64: 8, 1024>}, {transform_indices = @transform_6, window_bounds = array<i64: 8, 128>}]} {
    %c0 = arith.constant 0 : index
    %c0_0 = arith.constant 0 : index
    %0 = vector.load %arg1[%c0, %c0_0] : memref<64x128xbf16, #tpu.memory_space<vmem>>, vector<64x128xbf16>
    %1 = arith.extf %0 : vector<64x128xbf16> to vector<64x128xf32>
    %c63_i32 = arith.constant 63 : i32
    %2 = tpu.dynamic_rotate %1 by %c63_i32 dim 0 : vector<64x128xf32>, i32 -> vector<64x128xf32>
    %3 = arith.truncf %2 : vector<64x128xf32> to vector<64x128xbf16>
    %c62_i32 = arith.constant 62 : i32
    %4 = tpu.dynamic_rotate %1 by %c62_i32 dim 0 : vector<64x128xf32>, i32 -> vector<64x128xf32>
    %5 = arith.truncf %4 : vector<64x128xf32> to vector<64x128xbf16>
    %c0_1 = arith.constant 0 : index
    %c0_2 = arith.constant 0 : index
    %6 = vector.load %arg2[%c0_1, %c0_2] : memref<384x1024xbf16, #tpu.memory_space<vmem>>, vector<128x1024xbf16>
    %c128 = arith.constant 128 : index
    %c0_3 = arith.constant 0 : index
    %7 = vector.load %arg2[%c128, %c0_3] : memref<384x1024xbf16, #tpu.memory_space<vmem>>, vector<128x1024xbf16>
    %c256 = arith.constant 256 : index
    %c0_4 = arith.constant 0 : index
    %8 = vector.load %arg2[%c256, %c0_4] : memref<384x1024xbf16, #tpu.memory_space<vmem>>, vector<128x1024xbf16>
    %cst = arith.constant dense<0.000000e+00> : vector<64x1024xf32>
    %9 = tpu.matmul %0, %6, %cst {dimension_numbers = #tpu.dot_dimension_numbers<[1], [0], [0], [1], [0, 0, 1, 1], [], []>} : vector<64x128xbf16>, vector<128x1024xbf16>, vector<64x1024xf32> -> vector<64x1024xf32>
    %cst_5 = arith.constant dense<0.000000e+00> : vector<64x1024xf32>
    %10 = tpu.matmul %3, %7, %cst_5 {dimension_numbers = #tpu.dot_dimension_numbers<[1], [0], [0], [1], [0, 0, 1, 1], [], []>} : vector<64x128xbf16>, vector<128x1024xbf16>, vector<64x1024xf32> -> vector<64x1024xf32>
    %11 = arith.addf %9, %10 : vector<64x1024xf32>
    %cst_6 = arith.constant dense<0.000000e+00> : vector<64x1024xf32>
    %12 = tpu.matmul %5, %8, %cst_6 {dimension_numbers = #tpu.dot_dimension_numbers<[1], [0], [0], [1], [0, 0, 1, 1], [], []>} : vector<64x128xbf16>, vector<128x1024xbf16>, vector<64x1024xf32> -> vector<64x1024xf32>
    %13 = arith.addf %11, %12 : vector<64x1024xf32>
    %14 = vector.shape_cast %13 : vector<64x1024xf32> to vector<8x8x1024xf32>
    %c0_7 = arith.constant 0 : index
    %c0_8 = arith.constant 0 : index
    %15 = vector.load %arg6[%c0_7, %c0_8] : memref<8x1024xf32, #tpu.memory_space<vmem>>, vector<8x1024xf32>
    %16 = vector.shape_cast %15 : vector<8x1024xf32> to vector<1x8x1024xf32>
    %17 = vector.broadcast %16 : vector<1x8x1024xf32> to vector<8x8x1024xf32>
    %18 = arith.addf %14, %17 : vector<8x8x1024xf32>
    %cst_9 = arith.constant dense<0xFF800000> : vector<8x1024xf32>
    %19 = vector.multi_reduction <maximumf>, %18, %cst_9 [1] : vector<8x8x1024xf32> to vector<8x1024xf32>
    %c0_10 = arith.constant 0 : index
    %c0_11 = arith.constant 0 : index
    %20 = vector.load %arg3[%c0_10, %c0_11] : memref<1x1024xf32, #tpu.memory_space<vmem>>, vector<1x1024xf32>
    %21 = vector.broadcast %20 : vector<1x1024xf32> to vector<8x1024xf32>
    %22 = arith.addf %19, %21 : vector<8x1024xf32>
    %cst_12 = arith.constant 0.000000e+00 : f32
    %23 = vector.broadcast %cst_12 : f32 to vector<8x1024xf32>
    %24 = arith.maximumf %22, %23 : vector<8x1024xf32>
    %25 = arith.truncf %24 : vector<8x1024xf32> to vector<8x1024xbf16>
    %c0_13 = arith.constant 0 : index
    %c0_14 = arith.constant 0 : index
    %26 = vector.load %arg4[%c0_13, %c0_14] : memref<1024x128xbf16, #tpu.memory_space<vmem>>, vector<1024x128xbf16>
    %cst_15 = arith.constant dense<0.000000e+00> : vector<8x128xf32>
    %27 = tpu.matmul %25, %26, %cst_15 {dimension_numbers = #tpu.dot_dimension_numbers<[1], [0], [0], [1], [0, 0, 1, 1], [], []>} : vector<8x1024xbf16>, vector<1024x128xbf16>, vector<8x128xf32> -> vector<8x128xf32>
    %c0_16 = arith.constant 0 : index
    %c0_17 = arith.constant 0 : index
    %28 = vector.load %arg5[%c0_16, %c0_17] : memref<1x128xf32, #tpu.memory_space<vmem>>, vector<1x128xf32>
    %29 = vector.broadcast %28 : vector<1x128xf32> to vector<8x128xf32>
    %30 = arith.addf %27, %29 : vector<8x128xf32>
    %31 = tpu.iota {dimensions = array<i32: 1>} : vector<8x128xi32>
    %c2_i32 = arith.constant 2 : i32
    %32 = vector.broadcast %c2_i32 : i32 to vector<8x128xi32>
    %33 = arith.cmpi slt, %31, %32 : vector<8x128xi32>
    %cst_18 = arith.constant -1.000000e+30 : f32
    %34 = vector.broadcast %cst_18 : f32 to vector<8x128xf32>
    %35 = arith.select %33, %30, %34 : vector<8x128xi1>, vector<8x128xf32>
    %cst_19 = arith.constant dense<0xFF800000> : vector<8xf32>
    %36 = vector.multi_reduction <maximumf>, %35, %cst_19 [1] : vector<8x128xf32> to vector<8xf32>
    %37 = vector.shape_cast %36 : vector<8xf32> to vector<8x1xf32>
    %38 = vector.broadcast %37 : vector<8x1xf32> to vector<8x128xf32>
    %39 = arith.subf %30, %38 : vector<8x128xf32>
    %40 = math.exp %39 : vector<8x128xf32>
    %cst_20 = arith.constant 0.000000e+00 : f32
    %41 = vector.broadcast %cst_20 : f32 to vector<8x128xf32>
    %42 = arith.select %33, %40, %41 : vector<8x128xi1>, vector<8x128xf32>
    %cst_21 = arith.constant dense<0.000000e+00> : vector<8xf32>
    %43 = vector.multi_reduction <add>, %42, %cst_21 [1] : vector<8x128xf32> to vector<8xf32>
    %44 = vector.shape_cast %43 : vector<8xf32> to vector<8x1xf32>
    %45 = math.log %44 : vector<8x1xf32>
    %46 = vector.broadcast %45 : vector<8x1xf32> to vector<8x128xf32>
    %47 = arith.subf %39, %46 : vector<8x128xf32>
    %c0_22 = arith.constant 0 : index
    %c0_23 = arith.constant 0 : index
    %48 = vector.load %arg7[%c0_22, %c0_23] : memref<8x128xf32, #tpu.memory_space<vmem>>, vector<8x128xf32>
    tpu.vector_store %arg7[%c0_22, %c0_23], %47 {strides = array<i32>} : memref<8x128xf32, #tpu.memory_space<vmem>>, vector<8x128xf32>,
    return
  }
  func.func @transform_0(%arg0: i32) -> (i32, i32) {
    %c0_i32 = arith.constant 0 : i32
    %c0_i32_0 = arith.constant 0 : i32
    return %arg0, %c0_i32 : i32, i32
  }
  func.func @transform_1(%arg0: i32) -> (i32, i32) {
    %c0_i32 = arith.constant 0 : i32
    %c0_i32_0 = arith.constant 0 : i32
    %c0_i32_1 = arith.constant 0 : i32
    return %c0_i32, %c0_i32_0 : i32, i32
  }
  func.func @transform_2(%arg0: i32) -> (i32, i32) {
    %c0_i32 = arith.constant 0 : i32
    %c0_i32_0 = arith.constant 0 : i32
    %c0_i32_1 = arith.constant 0 : i32
    return %c0_i32, %c0_i32_0 : i32, i32
  }
  func.func @transform_3(%arg0: i32) -> (i32, i32) {
    %c0_i32 = arith.constant 0 : i32
    %c0_i32_0 = arith.constant 0 : i32
    %c0_i32_1 = arith.constant 0 : i32
    return %c0_i32, %c0_i32_0 : i32, i32
  }
  func.func @transform_4(%arg0: i32) -> (i32, i32) {
    %c0_i32 = arith.constant 0 : i32
    %c0_i32_0 = arith.constant 0 : i32
    %c0_i32_1 = arith.constant 0 : i32
    return %c0_i32, %c0_i32_0 : i32, i32
  }
  func.func @transform_5(%arg0: i32) -> (i32, i32) {
    %c0_i32 = arith.constant 0 : i32
    %c0_i32_0 = arith.constant 0 : i32
    %c0_i32_1 = arith.constant 0 : i32
    return %c0_i32, %c0_i32_0 : i32, i32
  }
  func.func @transform_6(%arg0: i32) -> (i32, i32) {
    %c0_i32 = arith.constant 0 : i32
    %c0_i32_0 = arith.constant 0 : i32
    return %arg0, %c0_i32 : i32, i32
  }
}

</mosaic_0001>

<llo_original>
// kernel: tpu_custom_call.1
$region0: #{tpu_custom_call.1}
  #allocation0 [shape = 'u32[]', space=smem, size = 0x4, offset = 0x4, fixed_abs, tag = 'smem constant byte address 0x4 - core index']
  #allocation1 [shape = 'u32[72,128]{1,0:T(1,128)}', space=vmem, size = 0x9000, scoped, tag = 'internal scratch']
  %s0 = inlined_call_operand.hbm [shape: bf16[64,128], index: 0, kind: input, shape index: {}]
  %s1 = inlined_call_operand.hbm [shape: bf16[384,1024], index: 1, kind: input, shape index: {}]
  %s2 = inlined_call_operand.hbm [shape: f32[1,1024], index: 2, kind: input, shape index: {}]
  %s3 = inlined_call_operand.hbm [shape: bf16[1024,128], index: 3, kind: input, shape index: {}]
  %s4 = inlined_call_operand.vmem [shape: f32[1,128], index: 4, kind: input, shape index: {}]
  %s5 = inlined_call_operand.hbm [shape: f32[8,1024], index: 5, kind: input, shape index: {}]
  %s6 = inlined_call_operand.hbm [shape: f32[8,128], index: 6, kind: output, shape index: {}]
  %s7 = sld [smem:[#allocation0]]
  $region54: #{tpu_custom_call.1} parent=0
    _
  %s9 = ssub.s32 1, %s7
  %s10 = scalar_select 0, %s9, %s7
  $region1: #{tpu_custom_call.1} parent=0
    #allocation2 [shape = 'u8[16384]{0}', space=vmem, size = 0x4000, scoped, tag = 'input window, operand 0, single buffered']
    #allocation3 [shape = 's32[1]{0}', space=sflag, size = 0x4, scoped, tag = 'scoped memory for tpu_custom_call.1']
    #allocation4 [shape = 's32[1]{0}', space=sflag, size = 0x4, scoped, tag = 'scoped memory for tpu_custom_call.1']
    #allocation5 [shape = 'u8[786432]{0}', space=vmem, size = 0xc0000, scoped, tag = 'input window, operand 1, single buffered']
    #allocation6 [shape = 's32[1]{0}', space=sflag, size = 0x4, scoped, tag = 'scoped memory for tpu_custom_call.1']
    #allocation7 [shape = 'u8[4096]{0}', space=vmem, size = 0x1000, scoped, tag = 'input window, operand 2, single buffered']
    #allocation8 [shape = 'u8[262144]{0}', space=vmem, size = 0x40000, scoped, tag = 'input window, operand 3, single buffered']
    #allocation9 [shape = 's32[1]{0}', space=sflag, size = 0x4, scoped, tag = 'scoped memory for tpu_custom_call.1']
    #allocation10 [shape = 'u8[32768]{0}', space=vmem, size = 0x8000, scoped, tag = 'input window, operand 5, single buffered']
    #allocation11 [shape = 'u8[4096]{0}', space=vmem, size = 0x1000, scoped, tag = 'output window, operand 0, single buffered']
    %11 = vsyncpa [#allocation3], 0
    %12 = vsyncpa [#allocation6], 0
    %13 = vsyncpa [#allocation9], 0
    %14 = vsyncpa [#allocation4], 0
    // Predicated region
    $region2: #{tpu_custom_call.1} parent=1 // pred_check
      _
    $region3: #{tpu_custom_call.1} parent=1 // pred_check_branch
      %16 = sbr.rel (0) target = $region5
    $region4: #{tpu_custom_call.1} parent=1 // pred_region
      %18 = vsyncadd [#allocation3], 0
      %s19 = sshll.u32 %s0, 4
      %s20 = int_to_ptr.hbm [resolvable:$true] %s19
      %s21 = sshll.u32 [#allocation2], 4
      %s22 = int_to_ptr.vmem [resolvable:$true] %s21
      %27 = dma.hbm_to_vmem [thread:$0]  %s20, 512, %s22, [#allocation3], 64, 64, 4
    $region5: #{tpu_custom_call.1} parent=1 // pred_fallthru
      _
    // Predicated region
    $region6: #{tpu_custom_call.1} parent=1 // pred_check
      _
    $region7: #{tpu_custom_call.1} parent=1 // pred_check_branch
      %29 = sbr.rel (0) target = $region9
    $region8: #{tpu_custom_call.1} parent=1 // pred_region
      %31 = vsyncadd [#allocation6], 0
      %s32 = sshll.u32 %s1, 4
      %s33 = int_to_ptr.hbm [resolvable:$true] %s32
      %s34 = sshll.u32 [#allocation5], 4
      %s35 = int_to_ptr.vmem [resolvable:$true] %s34
      %40 = dma.hbm_to_vmem [thread:$0]  %s33, 24576, %s35, [#allocation6], 512, 512, 32
    $region9: #{tpu_custom_call.1} parent=1 // pred_fallthru
      _
    // Predicated region
    $region10: #{tpu_custom_call.1} parent=1 // pred_check
      _
    $region11: #{tpu_custom_call.1} parent=1 // pred_check_branch
      %42 = sbr.rel (0) target = $region13
    $region12: #{tpu_custom_call.1} parent=1 // pred_region
      %44 = vsyncadd [#allocation6], 0
      %s46 = sshll.u32 %s2, 4
      %s47 = int_to_ptr.hbm [resolvable:$true] %s46
      %s48 = sshll.u32 [#allocation7], 4
      %s49 = int_to_ptr.vmem [resolvable:$true] %s48
      %51 = dma.hbm_to_vmem [thread:$0]  %s47, 128, %s49, [#allocation6]
    $region13: #{tpu_custom_call.1} parent=1 // pred_fallthru
      _
    // Predicated region
    $region14: #{tpu_custom_call.1} parent=1 // pred_check
      _
    $region15: #{tpu_custom_call.1} parent=1 // pred_check_branch
      %53 = sbr.rel (0) target = $region17
    $region16: #{tpu_custom_call.1} parent=1 // pred_region
      %55 = vsyncadd [#allocation9], 0
      %s56 = sshll.u32 %s3, 4
      %s57 = int_to_ptr.hbm [resolvable:$true] %s56
      %s58 = sshll.u32 [#allocation8], 4
      %s59 = int_to_ptr.vmem [resolvable:$true] %s58
      %64 = dma.hbm_to_vmem [thread:$0]  %s57, 8192, %s59, [#allocation9], 64, 64, 4
    $region17: #{tpu_custom_call.1} parent=1 // pred_fallthru
      _
    // Predicated region
    $region18: #{tpu_custom_call.1} parent=1 // pred_check
      _
    $region19: #{tpu_custom_call.1} parent=1 // pred_check_branch
      %66 = sbr.rel (0) target = $region21
    $region20: #{tpu_custom_call.1} parent=1 // pred_region
      _
    $region21: #{tpu_custom_call.1} parent=1 // pred_fallthru
      _
    // Predicated region
    $region22: #{tpu_custom_call.1} parent=1 // pred_check
      _
    $region23: #{tpu_custom_call.1} parent=1 // pred_check_branch
      %68 = sbr.rel (0) target = $region25
    $region24: #{tpu_custom_call.1} parent=1 // pred_region
      %70 = vsyncadd [#allocation9], 0
      %s72 = sshll.u32 %s5, 4
      %s73 = int_to_ptr.hbm [resolvable:$true] %s72
      %s74 = sshll.u32 [#allocation10], 4
      %s75 = int_to_ptr.vmem [resolvable:$true] %s74
      %77 = dma.hbm_to_vmem [thread:$0]  %s73, 1024, %s75, [#allocation9]
    $region25: #{tpu_custom_call.1} parent=1 // pred_fallthru
      _
    // Predicated region
    $region26: #{tpu_custom_call.1} parent=1 // pred_check
      _
    $region27: #{tpu_custom_call.1} parent=1 // pred_check_branch
      %79 = sbr.rel (0) target = $region29
    $region28: #{tpu_custom_call.1} parent=1 // pred_region
      %81 = dma.done [#allocation3], 512
    $region29: #{tpu_custom_call.1} parent=1 // pred_fallthru
      _
    // Predicated region
    $region30: #{tpu_custom_call.1} parent=1 // pred_check
      _
    $region31: #{tpu_custom_call.1} parent=1 // pred_check_branch
      %83 = sbr.rel (0) target = $region33
    $region32: #{tpu_custom_call.1} parent=1 // pred_region
      %85 = dma.done [#allocation6], 24576
    $region33: #{tpu_custom_call.1} parent=1 // pred_fallthru
      _
    // Predicated region
    $region34: #{tpu_custom_call.1} parent=1 // pred_check
      _
    $region35: #{tpu_custom_call.1} parent=1 // pred_check_branch
      %87 = sbr.rel (0) target = $region37
    $region36: #{tpu_custom_call.1} parent=1 // pred_region
      %89 = dma.done [#allocation6], 128
    $region37: #{tpu_custom_call.1} parent=1 // pred_fallthru
      _
    // Predicated region
    $region38: #{tpu_custom_call.1} parent=1 // pred_check
      _
    $region39: #{tpu_custom_call.1} parent=1 // pred_check_branch
      %91 = sbr.rel (0) target = $region41
    $region40: #{tpu_custom_call.1} parent=1 // pred_region
      %93 = dma.done [#allocation9], 8192
    $region41: #{tpu_custom_call.1} parent=1 // pred_fallthru
      _
    // Predicated region
    $region42: #{tpu_custom_call.1} parent=1 // pred_check
      _
    $region43: #{tpu_custom_call.1} parent=1 // pred_check_branch
      %95 = sbr.rel (0) target = $region45
    $region44: #{tpu_custom_call.1} parent=1 // pred_region
      %97 = dma.done [#allocation9], 1024
    $region45: #{tpu_custom_call.1} parent=1 // pred_fallthru
      _
    %v98 = vld [vmem:[#allocation2] sm:$0xf]
    %v99 = vld [vmem:[#allocation2 + $0x4] sm:$0xf]
    %v100 = vld [vmem:[#allocation2 + $0x8] sm:$0xf]
    %v101 = vld [vmem:[#allocation2 + $0xc] sm:$0xf]
    %v102 = vld [vmem:[#allocation2 + $0x10] sm:$0xf]
    %v103 = vld [vmem:[#allocation2 + $0x14] sm:$0xf]
    %v104 = vld [vmem:[#allocation2 + $0x18] sm:$0xf]
    %v105 = vld [vmem:[#allocation2 + $0x1c] sm:$0xf]
    %v106 = vunpack.c.l.bf16 %v98
    %v107 = vunpack.c.l.bf16 %v99
    %v108 = vunpack.c.l.bf16 %v100
    %v109 = vunpack.c.l.bf16 %v101
    %v110 = vunpack.c.l.bf16 %v102
    %v111 = vunpack.c.l.bf16 %v103
    %v112 = vunpack.c.l.bf16 %v104
    %v113 = vunpack.c.l.bf16 %v105
    %v114 = vrot.slane %v106, 1
    %v115 = vrot.slane %v107, 1
    %v116 = vrot.slane %v108, 1
    %v117 = vrot.slane %v109, 1
    %v118 = vrot.slane %v110, 1
    %v119 = vrot.slane %v111, 1
    %v120 = vrot.slane %v112, 1
    %v121 = vrot.slane %v113, 1
    %v122 = vlaneseq
    %v123 = vshrl.u32 %v122, 7
    %vm124 = vcmp.lt.s32.totalorder %v123, 7
    %v125 = vsel %vm124, %v120, %v121
    %v126 = vsel %vm124, %v119, %v120
    %v127 = vsel %vm124, %v118, %v119
    %v128 = vsel %vm124, %v117, %v118
    %v129 = vsel %vm124, %v116, %v117
    %v130 = vsel %vm124, %v115, %v116
    %v131 = vsel %vm124, %v114, %v115
    %v132 = vsel %vm124, %v121, %v114
    %v133 = vpack.c.bf16 %v130, %v131
    %v134 = vpack.c.bf16 %v128, %v129
    %v135 = vpack.c.bf16 %v126, %v127
    %v136 = vpack.c.bf16 %v132, %v125
    %v137 = vrot.slane %v106, 2
    %v138 = vrot.slane %v107, 2
    %v139 = vrot.slane %v108, 2
    %v140 = vrot.slane %v109, 2
    %v141 = vrot.slane %v110, 2
    %v142 = vrot.slane %v111, 2
    %v143 = vrot.slane %v112, 2
    %v144 = vrot.slane %v113, 2
    %vm145 = vcmp.lt.s32.totalorder %v123, 6
    %v146 = vsel %vm145, %v143, %v144
    %v147 = vsel %vm145, %v142, %v143
    %v148 = vsel %vm145, %v141, %v142
    %v149 = vsel %vm145, %v140, %v141
    %v150 = vsel %vm145, %v139, %v140
    %v151 = vsel %vm145, %v138, %v139
    %v152 = vsel %vm145, %v137, %v138
    %v153 = vsel %vm145, %v144, %v137
    %v154 = vpack.c.bf16 %v151, %v152
    %v155 = vpack.c.bf16 %v149, %v150
    %v156 = vpack.c.bf16 %v147, %v148
    %v157 = vpack.c.bf16 %v153, %v146
    %v158 = vld [vmem:[#allocation5] sm:$0xff]
    %v159 = vld [vmem:[#allocation5 + $0x8] sm:$0xff]
    %v160 = vld [vmem:[#allocation5 + $0x10] sm:$0xff]
    %v161 = vld [vmem:[#allocation5 + $0x18] sm:$0xff]
    %v162 = vld [vmem:[#allocation5 + $0x20] sm:$0xff]
    %v163 = vld [vmem:[#allocation5 + $0x28] sm:$0xff]
    %v164 = vld [vmem:[#allocation5 + $0x30] sm:$0xff]
    %v165 = vld [vmem:[#allocation5 + $0x38] sm:$0xff]
    %v166 = vld [vmem:[#allocation5 + $0x40] sm:$0xff]
    %v167 = vld [vmem:[#allocation5 + $0x48] sm:$0xff]
    %v168 = vld [vmem:[#allocation5 + $0x50] sm:$0xff]
    %v169 = vld [vmem:[#allocation5 + $0x58] sm:$0xff]
    %v170 = vld [vmem:[#allocation5 + $0x60] sm:$0xff]
    %v171 = vld [vmem:[#allocation5 + $0x68] sm:$0xff]
    %v172 = vld [vmem:[#allocation5 + $0x70] sm:$0xff]
    %v173 = vld [vmem:[#allocation5 + $0x78] sm:$0xff]
    %v174 = vld [vmem:[#allocation5 + $0x80] sm:$0xff]
    %v175 = vld [vmem:[#allocation5 + $0x88] sm:$0xff]
    %v176 = vld [vmem:[#allocation5 + $0x90] sm:$0xff]
    %v177 = vld [vmem:[#allocation5 + $0x98] sm:$0xff]
    %v178 = vld [vmem:[#allocation5 + $0xa0] sm:$0xff]
    %v179 = vld [vmem:[#allocation5 + $0xa8] sm:$0xff]
    %v180 = vld [vmem:[#allocation5 + $0xb0] sm:$0xff]
    %v181 = vld [vmem:[#allocation5 + $0xb8] sm:$0xff]
    %v182 = vld [vmem:[#allocation5 + $0xc0] sm:$0xff]
    %v183 = vld [vmem:[#allocation5 + $0xc8] sm:$0xff]
    %v184 = vld [vmem:[#allocation5 + $0xd0] sm:$0xff]
    %v185 = vld [vmem:[#allocation5 + $0xd8] sm:$0xff]
    %v186 = vld [vmem:[#allocation5 + $0xe0] sm:$0xff]
    %v187 = vld [vmem:[#allocation5 + $0xe8] sm:$0xff]
    %v188 = vld [vmem:[#allocation5 + $0xf0] sm:$0xff]
    %v189 = vld [vmem:[#allocation5 + $0xf8] sm:$0xff]
    %v190 = vld [vmem:[#allocation5 + $0x100] sm:$0xff]
    %v191 = vld [vmem:[#allocation5 + $0x108] sm:$0xff]
    %v192 = vld [vmem:[#allocation5 + $0x110] sm:$0xff]
    %v193 = vld [vmem:[#allocation5 + $0x118] sm:$0xff]
    %v194 = vld [vmem:[#allocation5 + $0x120] sm:$0xff]
    %v195 = vld [vmem:[#allocation5 + $0x128] sm:$0xff]
    %v196 = vld [vmem:[#allocation5 + $0x130] sm:$0xff]
    %v197 = vld [vmem:[#allocation5 + $0x138] sm:$0xff]
    %v198 = vld [vmem:[#allocation5 + $0x140] sm:$0xff]
    %v199 = vld [vmem:[#allocation5 + $0x148] sm:$0xff]
    %v200 = vld [vmem:[#allocation5 + $0x150] sm:$0xff]
    %v201 = vld [vmem:[#allocation5 + $0x158] sm:$0xff]
    %v202 = vld [vmem:[#allocation5 + $0x160] sm:$0xff]
    %v203 = vld [vmem:[#allocation5 + $0x168] sm:$0xff]
    %v204 = vld [vmem:[#allocation5 + $0x170] sm:$0xff]
    %v205 = vld [vmem:[#allocation5 + $0x178] sm:$0xff]
    %v206 = vld [vmem:[#allocation5 + $0x180] sm:$0xff]
    %v207 = vld [vmem:[#allocation5 + $0x188] sm:$0xff]
    %v208 = vld [vmem:[#allocation5 + $0x190] sm:$0xff]
    %v209 = vld [vmem:[#allocation5 + $0x198] sm:$0xff]
    %v210 = vld [vmem:[#allocation5 + $0x1a0] sm:$0xff]
    %v211 = vld [vmem:[#allocation5 + $0x1a8] sm:$0xff]
    %v212 = vld [vmem:[#allocation5 + $0x1b0] sm:$0xff]
    %v213 = vld [vmem:[#allocation5 + $0x1b8] sm:$0xff]
    %v214 = vld [vmem:[#allocation5 + $0x1c0] sm:$0xff]
    %v215 = vld [vmem:[#allocation5 + $0x1c8] sm:$0xff]
    %v216 = vld [vmem:[#allocation5 + $0x1d0] sm:$0xff]
    %v217 = vld [vmem:[#allocation5 + $0x1d8] sm:$0xff]
    %v218 = vld [vmem:[#allocation5 + $0x1e0] sm:$0xff]
    %v219 = vld [vmem:[#allocation5 + $0x1e8] sm:$0xff]
    %v220 = vld [vmem:[#allocation5 + $0x1f0] sm:$0xff]
    %v221 = vld [vmem:[#allocation5 + $0x1f8] sm:$0xff]
    %v222 = vld [vmem:[#allocation5 + $0x200] sm:$0xff]
    %v223 = vld [vmem:[#allocation5 + $0x208] sm:$0xff]
    %v224 = vld [vmem:[#allocation5 + $0x210] sm:$0xff]
    %v225 = vld [vmem:[#allocation5 + $0x218] sm:$0xff]
    %v226 = vld [vmem:[#allocation5 + $0x220] sm:$0xff]
    %v227 = vld [vmem:[#allocation5 + $0x228] sm:$0xff]
    %v228 = vld [vmem:[#allocation5 + $0x230] sm:$0xff]
    %v229 = vld [vmem:[#allocation5 + $0x238] sm:$0xff]
    %v230 = vld [vmem:[#allocation5 + $0x240] sm:$0xff]
    %v231 = vld [vmem:[#allocation5 + $0x248] sm:$0xff]
    %v232 = vld [vmem:[#allocation5 + $0x250] sm:$0xff]
    %v233 = vld [vmem:[#allocation5 + $0x258] sm:$0xff]
    %v234 = vld [vmem:[#allocation5 + $0x260] sm:$0xff]
    %v235 = vld [vmem:[#allocation5 + $0x268] sm:$0xff]
    %v236 = vld [vmem:[#allocation5 + $0x270] sm:$0xff]
    %v237 = vld [vmem:[#allocation5 + $0x278] sm:$0xff]
    %v238 = vld [vmem:[#allocation5 + $0x280] sm:$0xff]
    %v239 = vld [vmem:[#allocation5 + $0x288] sm:$0xff]
    %v240 = vld [vmem:[#allocation5 + $0x290] sm:$0xff]
    %v241 = vld [vmem:[#allocation5 + $0x298] sm:$0xff]
    %v242 = vld [vmem:[#allocation5 + $0x2a0] sm:$0xff]
    %v243 = vld [vmem:[#allocation5 + $0x2a8] sm:$0xff]
    %v244 = vld [vmem:[#allocation5 + $0x2b0] sm:$0xff]
    %v245 = vld [vmem:[#allocation5 + $0x2b8] sm:$0xff]
    %v246 = vld [vmem:[#allocation5 + $0x2c0] sm:$0xff]
    %v247 = vld [vmem:[#allocation5 + $0x2c8] sm:$0xff]
    %v248 = vld [vmem:[#allocation5 + $0x2d0] sm:$0xff]
    %v249 = vld [vmem:[#allocation5 + $0x2d8] sm:$0xff]
    %v250 = vld [vmem:[#allocation5 + $0x2e0] sm:$0xff]
    %v251 = vld [vmem:[#allocation5 + $0x2e8] sm:$0xff]
    %v252 = vld [vmem:[#allocation5 + $0x2f0] sm:$0xff]
    %v253 = vld [vmem:[#allocation5 + $0x2f8] sm:$0xff]
    %v254 = vld [vmem:[#allocation5 + $0x300] sm:$0xff]
    %v255 = vld [vmem:[#allocation5 + $0x308] sm:$0xff]
    %v256 = vld [vmem:[#allocation5 + $0x310] sm:$0xff]
    %v257 = vld [vmem:[#allocation5 + $0x318] sm:$0xff]
    %v258 = vld [vmem:[#allocation5 + $0x320] sm:$0xff]
    %v259 = vld [vmem:[#allocation5 + $0x328] sm:$0xff]
    %v260 = vld [vmem:[#allocation5 + $0x330] sm:$0xff]
    %v261 = vld [vmem:[#allocation5 + $0x338] sm:$0xff]
    %v262 = vld [vmem:[#allocation5 + $0x340] sm:$0xff]
    %v263 = vld [vmem:[#allocation5 + $0x348] sm:$0xff]
    %v264 = vld [vmem:[#allocation5 + $0x350] sm:$0xff]
    %v265 = vld [vmem:[#allocation5 + $0x358] sm:$0xff]
    %v266 = vld [vmem:[#allocation5 + $0x360] sm:$0xff]
    %v267 = vld [vmem:[#allocation5 + $0x368] sm:$0xff]
    %v268 = vld [vmem:[#allocation5 + $0x370] sm:$0xff]
    %v269 = vld [vmem:[#allocation5 + $0x378] sm:$0xff]
    %v270 = vld [vmem:[#allocation5 + $0x380] sm:$0xff]
    %v271 = vld [vmem:[#allocation5 + $0x388] sm:$0xff]
    %v272 = vld [vmem:[#allocation5 + $0x390] sm:$0xff]
    %v273 = vld [vmem:[#allocation5 + $0x398] sm:$0xff]
    %v274 = vld [vmem:[#allocation5 + $0x3a0] sm:$0xff]
    %v275 = vld [vmem:[#allocation5 + $0x3a8] sm:$0xff]
    %v276 = vld [vmem:[#allocation5 + $0x3b0] sm:$0xff]
    %v277 = vld [vmem:[#allocation5 + $0x3b8] sm:$0xff]
    %v278 = vld [vmem:[#allocation5 + $0x3c0] sm:$0xff]
    %v279 = vld [vmem:[#allocation5 + $0x3c8] sm:$0xff]
    %v280 = vld [vmem:[#allocation5 + $0x3d0] sm:$0xff]
    %v281 = vld [vmem:[#allocation5 + $0x3d8] sm:$0xff]
    %v282 = vld [vmem:[#allocation5 + $0x3e0] sm:$0xff]
    %v283 = vld [vmem:[#allocation5 + $0x3e8] sm:$0xff]
    %v284 = vld [vmem:[#allocation5 + $0x3f0] sm:$0xff]
    %v285 = vld [vmem:[#allocation5 + $0x3f8] sm:$0xff]
    %v286 = vld [vmem:[#allocation5 + $0x400] sm:$0xff]
    %v287 = vld [vmem:[#allocation5 + $0x408] sm:$0xff]
    %v288 = vld [vmem:[#allocation5 + $0x410] sm:$0xff]
    %v289 = vld [vmem:[#allocation5 + $0x418] sm:$0xff]
    %v290 = vld [vmem:[#allocation5 + $0x420] sm:$0xff]
    %v291 = vld [vmem:[#allocation5 + $0x428] sm:$0xff]
    %v292 = vld [vmem:[#allocation5 + $0x430] sm:$0xff]
    %v293 = vld [vmem:[#allocation5 + $0x438] sm:$0xff]
    %v294 = vld [vmem:[#allocation5 + $0x440] sm:$0xff]
    %v295 = vld [vmem:[#allocation5 + $0x448] sm:$0xff]
    %v296 = vld [vmem:[#allocation5 + $0x450] sm:$0xff]
    %v297 = vld [vmem:[#allocation5 + $0x458] sm:$0xff]
    %v298 = vld [vmem:[#allocation5 + $0x460] sm:$0xff]
    %v299 = vld [vmem:[#allocation5 + $0x468] sm:$0xff]
    %v300 = vld [vmem:[#allocation5 + $0x470] sm:$0xff]
    %v301 = vld [vmem:[#allocation5 + $0x478] sm:$0xff]
    %v302 = vld [vmem:[#allocation5 + $0x480] sm:$0xff]
    %v303 = vld [vmem:[#allocation5 + $0x488] sm:$0xff]
    %v304 = vld [vmem:[#allocation5 + $0x490] sm:$0xff]
    %v305 = vld [vmem:[#allocation5 + $0x498] sm:$0xff]
    %v306 = vld [vmem:[#allocation5 + $0x4a0] sm:$0xff]
    %v307 = vld [vmem:[#allocation5 + $0x4a8] sm:$0xff]
    %v308 = vld [vmem:[#allocation5 + $0x4b0] sm:$0xff]
    %v309 = vld [vmem:[#allocation5 + $0x4b8] sm:$0xff]
    %v310 = vld [vmem:[#allocation5 + $0x4c0] sm:$0xff]
    %v311 = vld [vmem:[#allocation5 + $0x4c8] sm:$0xff]
    %v312 = vld [vmem:[#allocation5 + $0x4d0] sm:$0xff]
    %v313 = vld [vmem:[#allocation5 + $0x4d8] sm:$0xff]
    %v314 = vld [vmem:[#allocation5 + $0x4e0] sm:$0xff]
    %v315 = vld [vmem:[#allocation5 + $0x4e8] sm:$0xff]
    %v316 = vld [vmem:[#allocation5 + $0x4f0] sm:$0xff]
    %v317 = vld [vmem:[#allocation5 + $0x4f8] sm:$0xff]
    %v318 = vld [vmem:[#allocation5 + $0x500] sm:$0xff]
    %v319 = vld [vmem:[#allocation5 + $0x508] sm:$0xff]
    %v320 = vld [vmem:[#allocation5 + $0x510] sm:$0xff]
    %v321 = vld [vmem:[#allocation5 + $0x518] sm:$0xff]
    %v322 = vld [vmem:[#allocation5 + $0x520] sm:$0xff]
    %v323 = vld [vmem:[#allocation5 + $0x528] sm:$0xff]
    %v324 = vld [vmem:[#allocation5 + $0x530] sm:$0xff]
    %v325 = vld [vmem:[#allocation5 + $0x538] sm:$0xff]
    %v326 = vld [vmem:[#allocation5 + $0x540] sm:$0xff]
    %v327 = vld [vmem:[#allocation5 + $0x548] sm:$0xff]
    %v328 = vld [vmem:[#allocation5 + $0x550] sm:$0xff]
    %v329 = vld [vmem:[#allocation5 + $0x558] sm:$0xff]
    %v330 = vld [vmem:[#allocation5 + $0x560] sm:$0xff]
    %v331 = vld [vmem:[#allocation5 + $0x568] sm:$0xff]
    %v332 = vld [vmem:[#allocation5 + $0x570] sm:$0xff]
    %v333 = vld [vmem:[#allocation5 + $0x578] sm:$0xff]
    %v334 = vld [vmem:[#allocation5 + $0x580] sm:$0xff]
    %v335 = vld [vmem:[#allocation5 + $0x588] sm:$0xff]
    %v336 = vld [vmem:[#allocation5 + $0x590] sm:$0xff]
    %v337 = vld [vmem:[#allocation5 + $0x598] sm:$0xff]
    %v338 = vld [vmem:[#allocation5 + $0x5a0] sm:$0xff]
    %v339 = vld [vmem:[#allocation5 + $0x5a8] sm:$0xff]
    %v340 = vld [vmem:[#allocation5 + $0x5b0] sm:$0xff]
    %v341 = vld [vmem:[#allocation5 + $0x5b8] sm:$0xff]
    %v342 = vld [vmem:[#allocation5 + $0x5c0] sm:$0xff]
    %v343 = vld [vmem:[#allocation5 + $0x5c8] sm:$0xff]
    %v344 = vld [vmem:[#allocation5 + $0x5d0] sm:$0xff]
    %v345 = vld [vmem:[#allocation5 + $0x5d8] sm:$0xff]
    %v346 = vld [vmem:[#allocation5 + $0x5e0] sm:$0xff]
    %v347 = vld [vmem:[#allocation5 + $0x5e8] sm:$0xff]
    %v348 = vld [vmem:[#allocation5 + $0x5f0] sm:$0xff]
    %v349 = vld [vmem:[#allocation5 + $0x5f8] sm:$0xff]
    %v414 = vunpack.c.l.b16 %v222
    %v415 = vunpack.c.h.b16 %v222
    %v416 = vunpack.c.l.b16 %v223
    %v417 = vunpack.c.h.b16 %v223
    %v418 = vunpack.c.l.b16 %v224
    %v419 = vunpack.c.h.b16 %v224
    %v420 = vunpack.c.l.b16 %v225
    %v421 = vunpack.c.h.b16 %v225
    %v422 = vunpack.c.l.b16 %v226
    %v423 = vunpack.c.h.b16 %v226
    %v424 = vunpack.c.l.b16 %v227
    %v425 = vunpack.c.h.b16 %v227
    %v426 = vunpack.c.l.b16 %v228
    %v427 = vunpack.c.h.b16 %v228
    %v428 = vunpack.c.l.b16 %v229
    %v429 = vunpack.c.h.b16 %v229
    %v430 = vunpack.c.l.b16 %v230
    %v431 = vunpack.c.h.b16 %v230
    %v432 = vunpack.c.l.b16 %v231
    %v433 = vunpack.c.h.b16 %v231
    %v434 = vunpack.c.l.b16 %v232
    %v435 = vunpack.c.h.b16 %v232
    %v436 = vunpack.c.l.b16 %v233
    %v437 = vunpack.c.h.b16 %v233
    %v438 = vunpack.c.l.b16 %v234
    %v439 = vunpack.c.h.b16 %v234
    %v440 = vunpack.c.l.b16 %v235
    %v441 = vunpack.c.h.b16 %v235
    %v442 = vunpack.c.l.b16 %v236
    %v443 = vunpack.c.h.b16 %v236
    %v444 = vunpack.c.l.b16 %v237
    %v445 = vunpack.c.h.b16 %v237
    %v446 = vunpack.c.l.b16 %v238
    %v447 = vunpack.c.h.b16 %v238
    %v448 = vunpack.c.l.b16 %v239
    %v449 = vunpack.c.h.b16 %v239
    %v450 = vunpack.c.l.b16 %v240
    %v451 = vunpack.c.h.b16 %v240
    %v452 = vunpack.c.l.b16 %v241
    %v453 = vunpack.c.h.b16 %v241
    %v454 = vunpack.c.l.b16 %v242
    %v455 = vunpack.c.h.b16 %v242
    %v456 = vunpack.c.l.b16 %v243
    %v457 = vunpack.c.h.b16 %v243
    %v458 = vunpack.c.l.b16 %v244
    %v459 = vunpack.c.h.b16 %v244
    %v460 = vunpack.c.l.b16 %v245
    %v461 = vunpack.c.h.b16 %v245
    %v462 = vunpack.c.l.b16 %v246
    %v463 = vunpack.c.h.b16 %v246
    %v464 = vunpack.c.l.b16 %v247
    %v465 = vunpack.c.h.b16 %v247
    %v466 = vunpack.c.l.b16 %v248
    %v467 = vunpack.c.h.b16 %v248
    %v468 = vunpack.c.l.b16 %v249
    %v469 = vunpack.c.h.b16 %v249
    %v470 = vunpack.c.l.b16 %v250
    %v471 = vunpack.c.h.b16 %v250
    %v472 = vunpack.c.l.b16 %v251
    %v473 = vunpack.c.h.b16 %v251
    %v474 = vunpack.c.l.b16 %v252
    %v475 = vunpack.c.h.b16 %v252
    %v476 = vunpack.c.l.b16 %v253
    %v477 = vunpack.c.h.b16 %v253
    %v478 = vunpack.c.l.b16 %v254
    %v479 = vunpack.c.h.b16 %v254
    %v480 = vunpack.c.l.b16 %v255
    %v481 = vunpack.c.h.b16 %v255
    %v482 = vunpack.c.l.b16 %v256
    %v483 = vunpack.c.h.b16 %v256
    %v484 = vunpack.c.l.b16 %v257
    %v485 = vunpack.c.h.b16 %v257
    %v486 = vunpack.c.l.b16 %v258
    %v487 = vunpack.c.h.b16 %v258
    %v488 = vunpack.c.l.b16 %v259
    %v489 = vunpack.c.h.b16 %v259
    %v490 = vunpack.c.l.b16 %v260
    %v491 = vunpack.c.h.b16 %v260
    %v492 = vunpack.c.l.b16 %v261
    %v493 = vunpack.c.h.b16 %v261
    %v494 = vunpack.c.l.b16 %v262
    %v495 = vunpack.c.h.b16 %v262
    %v496 = vunpack.c.l.b16 %v263
    %v497 = vunpack.c.h.b16 %v263
    %v498 = vunpack.c.l.b16 %v264
    %v499 = vunpack.c.h.b16 %v264
    %v500 = vunpack.c.l.b16 %v265
    %v501 = vunpack.c.h.b16 %v265
    %v502 = vunpack.c.l.b16 %v266
    %v503 = vunpack.c.h.b16 %v266
    %v504 = vunpack.c.l.b16 %v267
    %v505 = vunpack.c.h.b16 %v267
    %v506 = vunpack.c.l.b16 %v268
    %v507 = vunpack.c.h.b16 %v268
    %v508 = vunpack.c.l.b16 %v269
    %v509 = vunpack.c.h.b16 %v269
    %v510 = vunpack.c.l.b16 %v270
    %v511 = vunpack.c.h.b16 %v270
    %v512 = vunpack.c.l.b16 %v271
    %v513 = vunpack.c.h.b16 %v271
    %v514 = vunpack.c.l.b16 %v272
    %v515 = vunpack.c.h.b16 %v272
    %v516 = vunpack.c.l.b16 %v273
    %v517 = vunpack.c.h.b16 %v273
    %v518 = vunpack.c.l.b16 %v274
    %v519 = vunpack.c.h.b16 %v274
    %v520 = vunpack.c.l.b16 %v275
    %v521 = vunpack.c.h.b16 %v275
    %v522 = vunpack.c.l.b16 %v276
    %v523 = vunpack.c.h.b16 %v276
    %v524 = vunpack.c.l.b16 %v277
    %v525 = vunpack.c.h.b16 %v277
    %v526 = vunpack.c.l.b16 %v278
    %v527 = vunpack.c.h.b16 %v278
    %v528 = vunpack.c.l.b16 %v279
    %v529 = vunpack.c.h.b16 %v279
    %v530 = vunpack.c.l.b16 %v280
    %v531 = vunpack.c.h.b16 %v280
    %v532 = vunpack.c.l.b16 %v281
    %v533 = vunpack.c.h.b16 %v281
    %v534 = vunpack.c.l.b16 %v282
    %v535 = vunpack.c.h.b16 %v282
    %v536 = vunpack.c.l.b16 %v283
    %v537 = vunpack.c.h.b16 %v283
    %v538 = vunpack.c.l.b16 %v284
    %v539 = vunpack.c.h.b16 %v284
    %v540 = vunpack.c.l.b16 %v285
    %v541 = vunpack.c.h.b16 %v285
    %v542 = vpack.c.b16 %v422, %v414
    %v543 = vpack.c.b16 %v423, %v415
    %v544 = vpack.c.b16 %v424, %v416
    %v545 = vpack.c.b16 %v425, %v417
    %v546 = vpack.c.b16 %v426, %v418
    %v547 = vpack.c.b16 %v427, %v419
    %v548 = vpack.c.b16 %v428, %v420
    %v549 = vpack.c.b16 %v429, %v421
    %v550 = vpack.c.b16 %v438, %v430
    %v551 = vpack.c.b16 %v439, %v431
    %v552 = vpack.c.b16 %v440, %v432
    %v553 = vpack.c.b16 %v441, %v433
    %v554 = vpack.c.b16 %v442, %v434
    %v555 = vpack.c.b16 %v443, %v435
    %v556 = vpack.c.b16 %v444, %v436
    %v557 = vpack.c.b16 %v445, %v437
    %v558 = vpack.c.b16 %v454, %v446
    %v559 = vpack.c.b16 %v455, %v447
    %v560 = vpack.c.b16 %v456, %v448
    %v561 = vpack.c.b16 %v457, %v449
    %v562 = vpack.c.b16 %v458, %v450
    %v563 = vpack.c.b16 %v459, %v451
    %v564 = vpack.c.b16 %v460, %v452
    %v565 = vpack.c.b16 %v461, %v453
    %v566 = vpack.c.b16 %v470, %v462
    %v567 = vpack.c.b16 %v471, %v463
    %v568 = vpack.c.b16 %v472, %v464
    %v569 = vpack.c.b16 %v473, %v465
    %v570 = vpack.c.b16 %v474, %v466
    %v571 = vpack.c.b16 %v475, %v467
    %v572 = vpack.c.b16 %v476, %v468
    %v573 = vpack.c.b16 %v477, %v469
    %v574 = vpack.c.b16 %v486, %v478
    %v575 = vpack.c.b16 %v487, %v479
    %v576 = vpack.c.b16 %v488, %v480
    %v577 = vpack.c.b16 %v489, %v481
    %v578 = vpack.c.b16 %v490, %v482
    %v579 = vpack.c.b16 %v491, %v483
    %v580 = vpack.c.b16 %v492, %v484
    %v581 = vpack.c.b16 %v493, %v485
    %v582 = vpack.c.b16 %v502, %v494
    %v583 = vpack.c.b16 %v503, %v495
    %v584 = vpack.c.b16 %v504, %v496
    %v585 = vpack.c.b16 %v505, %v497
    %v586 = vpack.c.b16 %v506, %v498
    %v587 = vpack.c.b16 %v507, %v499
    %v588 = vpack.c.b16 %v508, %v500
    %v589 = vpack.c.b16 %v509, %v501
    %v590 = vpack.c.b16 %v518, %v510
    %v591 = vpack.c.b16 %v519, %v511
    %v592 = vpack.c.b16 %v520, %v512
    %v593 = vpack.c.b16 %v521, %v513
    %v594 = vpack.c.b16 %v522, %v514
    %v595 = vpack.c.b16 %v523, %v515
    %v596 = vpack.c.b16 %v524, %v516
    %v597 = vpack.c.b16 %v525, %v517
    %v598 = vpack.c.b16 %v534, %v526
    %v599 = vpack.c.b16 %v535, %v527
    %v600 = vpack.c.b16 %v536, %v528
    %v601 = vpack.c.b16 %v537, %v529
    %v602 = vpack.c.b16 %v538, %v530
    %v603 = vpack.c.b16 %v539, %v531
    %v604 = vpack.c.b16 %v540, %v532
    %v605 = vpack.c.b16 %v541, %v533
    %670 = vmatpush.bf16.msra.mxu0 %v598
    %671 = vmatpush.bf16.msra.mxu0 %v590
    %672 = vmatpush.bf16.msra.mxu0 %v582
    %673 = vmatpush.bf16.msra.mxu0 %v574
    %674 = vmatpush.bf16.msra.mxu0 %v566
    %675 = vmatpush.bf16.msra.mxu0 %v558
    %676 = vmatpush.bf16.msra.mxu0 %v550
    %677 = vmatpush.bf16.msra.mxu0 %v542
    %678 = vmatmul.bf16.gmra.mxu0 %v133
    %v679 = vpop.f32.mrf.mxu0
    %v680 = vadd.f32 0.0, %v679
    %v681 = vpop.f32.mrf.mxu0
    %v682 = vadd.f32 0.0, %v681
    %683 = vmatmul.bf16.gmra.mxu0 %v134
    %v684 = vpop.f32.mrf.mxu0
    %v685 = vadd.f32 0.0, %v684
    %v686 = vpop.f32.mrf.mxu0
    %v687 = vadd.f32 0.0, %v686
    %688 = vmatmul.bf16.gmra.mxu0 %v135
    %v689 = vpop.f32.mrf.mxu0
    %v690 = vadd.f32 0.0, %v689
    %v691 = vpop.f32.mrf.mxu0
    %v692 = vadd.f32 0.0, %v691
    %693 = vmatmul.bf16.gmra.mxu0 %v136
    %v694 = vpop.f32.mrf.mxu0
    %v695 = vadd.f32 0.0, %v694
    %v696 = vpop.f32.mrf.mxu0
    %v697 = vadd.f32 0.0, %v696
    %698 = vdwg.mxu0
    %699 = vmatpush.bf16.msra.mxu0 %v599
    %700 = vmatpush.bf16.msra.mxu0 %v591
    %701 = vmatpush.bf16.msra.mxu0 %v583
    %702 = vmatpush.bf16.msra.mxu0 %v575
    %703 = vmatpush.bf16.msra.mxu0 %v567
    %704 = vmatpush.bf16.msra.mxu0 %v559
    %705 = vmatpush.bf16.msra.mxu0 %v551
    %706 = vmatpush.bf16.msra.mxu0 %v543
    %707 = vmatmul.bf16.gmra.mxu0 %v133
    %v708 = vpop.f32.mrf.mxu0
    %v709 = vadd.f32 0.0, %v708
    %v710 = vpop.f32.mrf.mxu0
    %v711 = vadd.f32 0.0, %v710
    %712 = vmatmul.bf16.gmra.mxu0 %v134
    %v713 = vpop.f32.mrf.mxu0
    %v714 = vadd.f32 0.0, %v713
    %v715 = vpop.f32.mrf.mxu0
    %v716 = vadd.f32 0.0, %v715
    %717 = vmatmul.bf16.gmra.mxu0 %v135
    %v718 = vpop.f32.mrf.mxu0
    %v719 = vadd.f32 0.0, %v718
    %v720 = vpop.f32.mrf.mxu0
    %v721 = vadd.f32 0.0, %v720
    %722 = vmatmul.bf16.gmra.mxu0 %v136
    %v723 = vpop.f32.mrf.mxu0
    %v724 = vadd.f32 0.0, %v723
    %v725 = vpop.f32.mrf.mxu0
    %v726 = vadd.f32 0.0, %v725
    %727 = vdwg.mxu0
    %728 = vmatpush.bf16.msra.mxu0 %v600
    %729 = vmatpush.bf16.msra.mxu0 %v592
    %730 = vmatpush.bf16.msra.mxu0 %v584
    %731 = vmatpush.bf16.msra.mxu0 %v576
    %732 = vmatpush.bf16.msra.mxu0 %v568
    %733 = vmatpush.bf16.msra.mxu0 %v560
    %734 = vmatpush.bf16.msra.mxu0 %v552
    %735 = vmatpush.bf16.msra.mxu0 %v544
    %736 = vmatmul.bf16.gmra.mxu0 %v133
    %v737 = vpop.f32.mrf.mxu0
    %v738 = vadd.f32 0.0, %v737
    %v739 = vpop.f32.mrf.mxu0
    %v740 = vadd.f32 0.0, %v739
    %741 = vmatmul.bf16.gmra.mxu0 %v134
    %v742 = vpop.f32.mrf.mxu0
    %v743 = vadd.f32 0.0, %v742
    %v744 = vpop.f32.mrf.mxu0
    %v745 = vadd.f32 0.0, %v744
    %746 = vmatmul.bf16.gmra.mxu0 %v135
    %v747 = vpop.f32.mrf.mxu0
    %v748 = vadd.f32 0.0, %v747
    %v749 = vpop.f32.mrf.mxu0
    %v750 = vadd.f32 0.0, %v749
    %751 = vmatmul.bf16.gmra.mxu0 %v136
    %v752 = vpop.f32.mrf.mxu0
    %v753 = vadd.f32 0.0, %v752
    %v754 = vpop.f32.mrf.mxu0
    %v755 = vadd.f32 0.0, %v754
    %756 = vdwg.mxu0
    %757 = vmatpush.bf16.msra.mxu0 %v601
    %758 = vmatpush.bf16.msra.mxu0 %v593
    %759 = vmatpush.bf16.msra.mxu0 %v585
    %760 = vmatpush.bf16.msra.mxu0 %v577
    %761 = vmatpush.bf16.msra.mxu0 %v569
    %762 = vmatpush.bf16.msra.mxu0 %v561
    %763 = vmatpush.bf16.msra.mxu0 %v553
    %764 = vmatpush.bf16.msra.mxu0 %v545
    %765 = vmatmul.bf16.gmra.mxu0 %v133
    %v766 = vpop.f32.mrf.mxu0
    %v767 = vadd.f32 0.0, %v766
    %v768 = vpop.f32.mrf.mxu0
    %v769 = vadd.f32 0.0, %v768
    %770 = vmatmul.bf16.gmra.mxu0 %v134
    %v771 = vpop.f32.mrf.mxu0
    %v772 = vadd.f32 0.0, %v771
    %v773 = vpop.f32.mrf.mxu0
    %v774 = vadd.f32 0.0, %v773
    %775 = vmatmul.bf16.gmra.mxu0 %v135
    %v776 = vpop.f32.mrf.mxu0
    %v777 = vadd.f32 0.0, %v776
    %v778 = vpop.f32.mrf.mxu0
    %v779 = vadd.f32 0.0, %v778
    %780 = vmatmul.bf16.gmra.mxu0 %v136
    %v781 = vpop.f32.mrf.mxu0
    %v782 = vadd.f32 0.0, %v781
    %v783 = vpop.f32.mrf.mxu0
    %v784 = vadd.f32 0.0, %v783
    %785 = vdwg.mxu0
    %786 = vmatpush.bf16.msra.mxu0 %v602
    %787 = vmatpush.bf16.msra.mxu0 %v594
    %788 = vmatpush.bf16.msra.mxu0 %v586
    %789 = vmatpush.bf16.msra.mxu0 %v578
    %790 = vmatpush.bf16.msra.mxu0 %v570
    %791 = vmatpush.bf16.msra.mxu0 %v562
    %792 = vmatpush.bf16.msra.mxu0 %v554
    %793 = vmatpush.bf16.msra.mxu0 %v546
    %794 = vmatmul.bf16.gmra.mxu0 %v133
    %v795 = vpop.f32.mrf.mxu0
    %v796 = vadd.f32 0.0, %v795
    %v797 = vpop.f32.mrf.mxu0
    %v798 = vadd.f32 0.0, %v797
    %799 = vmatmul.bf16.gmra.mxu0 %v134
    %v800 = vpop.f32.mrf.mxu0
    %v801 = vadd.f32 0.0, %v800
    %v802 = vpop.f32.mrf.mxu0
    %v803 = vadd.f32 0.0, %v802
    %804 = vmatmul.bf16.gmra.mxu0 %v135
    %v805 = vpop.f32.mrf.mxu0
    %v806 = vadd.f32 0.0, %v805
    %v807 = vpop.f32.mrf.mxu0
    %v808 = vadd.f32 0.0, %v807
    %809 = vmatmul.bf16.gmra.mxu0 %v136
    %v810 = vpop.f32.mrf.mxu0
    %v811 = vadd.f32 0.0, %v810
    %v812 = vpop.f32.mrf.mxu0
    %v813 = vadd.f32 0.0, %v812
    %814 = vdwg.mxu0
    %815 = vmatpush.bf16.msra.mxu0 %v603
    %816 = vmatpush.bf16.msra.mxu0 %v595
    %817 = vmatpush.bf16.msra.mxu0 %v587
    %818 = vmatpush.bf16.msra.mxu0 %v579
    %819 = vmatpush.bf16.msra.mxu0 %v571
    %820 = vmatpush.bf16.msra.mxu0 %v563
    %821 = vmatpush.bf16.msra.mxu0 %v555
    %822 = vmatpush.bf16.msra.mxu0 %v547
    %823 = vmatmul.bf16.gmra.mxu0 %v133
    %v824 = vpop.f32.mrf.mxu0
    %v825 = vadd.f32 0.0, %v824
    %v826 = vpop.f32.mrf.mxu0
    %v827 = vadd.f32 0.0, %v826
    %828 = vmatmul.bf16.gmra.mxu0 %v134
    %v829 = vpop.f32.mrf.mxu0
    %v830 = vadd.f32 0.0, %v829
    %v831 = vpop.f32.mrf.mxu0
    %v832 = vadd.f32 0.0, %v831
    %833 = vmatmul.bf16.gmra.mxu0 %v135
    %v834 = vpop.f32.mrf.mxu0
    %v835 = vadd.f32 0.0, %v834
    %v836 = vpop.f32.mrf.mxu0
    %v837 = vadd.f32 0.0, %v836
    %838 = vmatmul.bf16.gmra.mxu0 %v136
    %v839 = vpop.f32.mrf.mxu0
    %v840 = vadd.f32 0.0, %v839
    %v841 = vpop.f32.mrf.mxu0
    %v842 = vadd.f32 0.0, %v841
    %843 = vdwg.mxu0
    %844 = vmatpush.bf16.msra.mxu0 %v604
    %845 = vmatpush.bf16.msra.mxu0 %v596
    %846 = vmatpush.bf16.msra.mxu0 %v588
    %847 = vmatpush.bf16.msra.mxu0 %v580
    %848 = vmatpush.bf16.msra.mxu0 %v572
    %849 = vmatpush.bf16.msra.mxu0 %v564
    %850 = vmatpush.bf16.msra.mxu0 %v556
    %851 = vmatpush.bf16.msra.mxu0 %v548
    %852 = vmatmul.bf16.gmra.mxu0 %v133
    %v853 = vpop.f32.mrf.mxu0
    %v854 = vadd.f32 0.0, %v853
    %v855 = vpop.f32.mrf.mxu0
    %v856 = vadd.f32 0.0, %v855
    %857 = vmatmul.bf16.gmra.mxu0 %v134
    %v858 = vpop.f32.mrf.mxu0
    %v859 = vadd.f32 0.0, %v858
    %v860 = vpop.f32.mrf.mxu0
    %v861 = vadd.f32 0.0, %v860
    %862 = vmatmul.bf16.gmra.mxu0 %v135
    %v863 = vpop.f32.mrf.mxu0
    %v864 = vadd.f32 0.0, %v863
    %v865 = vpop.f32.mrf.mxu0
    %v866 = vadd.f32 0.0, %v865
    %867 = vmatmul.bf16.gmra.mxu0 %v136
    %v868 = vpop.f32.mrf.mxu0
    %v869 = vadd.f32 0.0, %v868
    %v870 = vpop.f32.mrf.mxu0
    %v871 = vadd.f32 0.0, %v870
    %872 = vdwg.mxu0
    %873 = vmatpush.bf16.msra.mxu0 %v605
    %874 = vmatpush.bf16.msra.mxu0 %v597
    %875 = vmatpush.bf16.msra.mxu0 %v589
    %876 = vmatpush.bf16.msra.mxu0 %v581
    %877 = vmatpush.bf16.msra.mxu0 %v573
    %878 = vmatpush.bf16.msra.mxu0 %v565
    %879 = vmatpush.bf16.msra.mxu0 %v557
    %880 = vmatpush.bf16.msra.mxu0 %v549
    %881 = vmatmul.bf16.gmra.mxu0 %v133
    %v882 = vpop.f32.mrf.mxu0
    %v883 = vadd.f32 0.0, %v882
    %v884 = vpop.f32.mrf.mxu0
    %v885 = vadd.f32 0.0, %v884
    %886 = vmatmul.bf16.gmra.mxu0 %v134
    %v887 = vpop.f32.mrf.mxu0
    %v888 = vadd.f32 0.0, %v887
    %v889 = vpop.f32.mrf.mxu0
    %v890 = vadd.f32 0.0, %v889
    %891 = vmatmul.bf16.gmra.mxu0 %v135
    %v892 = vpop.f32.mrf.mxu0
    %v893 = vadd.f32 0.0, %v892
    %v894 = vpop.f32.mrf.mxu0
    %v895 = vadd.f32 0.0, %v894
    %896 = vmatmul.bf16.gmra.mxu0 %v136
    %v897 = vpop.f32.mrf.mxu0
    %v898 = vadd.f32 0.0, %v897
    %v899 = vpop.f32.mrf.mxu0
    %v900 = vadd.f32 0.0, %v899
    %901 = vdwg.mxu0
    %v910 = vunpack.c.l.b16 %v98
    %v911 = vunpack.c.l.b16 %v99
    %v912 = vunpack.c.l.b16 %v100
    %v913 = vunpack.c.l.b16 %v101
    %v914 = vunpack.c.l.b16 %v102
    %v915 = vunpack.c.l.b16 %v103
    %v916 = vunpack.c.l.b16 %v104
    %v917 = vunpack.c.l.b16 %v105
    %v918 = vpack.c.b16 %v911, %v910
    %v919 = vpack.c.b16 %v913, %v912
    %v920 = vpack.c.b16 %v915, %v914
    %v921 = vpack.c.b16 %v917, %v916
    %v990 = vunpack.c.l.b16 %v158
    %v991 = vunpack.c.h.b16 %v158
    %v992 = vunpack.c.l.b16 %v159
    %v993 = vunpack.c.h.b16 %v159
    %v994 = vunpack.c.l.b16 %v160
    %v995 = vunpack.c.h.b16 %v160
    %v996 = vunpack.c.l.b16 %v161
    %v997 = vunpack.c.h.b16 %v161
    %v998 = vunpack.c.l.b16 %v162
    %v999 = vunpack.c.h.b16 %v162
    %v1000 = vunpack.c.l.b16 %v163
    %v1001 = vunpack.c.h.b16 %v163
    %v1002 = vunpack.c.l.b16 %v164
    %v1003 = vunpack.c.h.b16 %v164
    %v1004 = vunpack.c.l.b16 %v165
    %v1005 = vunpack.c.h.b16 %v165
    %v1006 = vunpack.c.l.b16 %v166
    %v1007 = vunpack.c.h.b16 %v166
    %v1008 = vunpack.c.l.b16 %v167
    %v1009 = vunpack.c.h.b16 %v167
    %v1010 = vunpack.c.l.b16 %v168
    %v1011 = vunpack.c.h.b16 %v168
    %v1012 = vunpack.c.l.b16 %v169
    %v1013 = vunpack.c.h.b16 %v169
    %v1014 = vunpack.c.l.b16 %v170
    %v1015 = vunpack.c.h.b16 %v170
    %v1016 = vunpack.c.l.b16 %v171
    %v1017 = vunpack.c.h.b16 %v171
    %v1018 = vunpack.c.l.b16 %v172
    %v1019 = vunpack.c.h.b16 %v172
    %v1020 = vunpack.c.l.b16 %v173
    %v1021 = vunpack.c.h.b16 %v173
    %v1022 = vunpack.c.l.b16 %v174
    %v1023 = vunpack.c.h.b16 %v174
    %v1024 = vunpack.c.l.b16 %v175
    %v1025 = vunpack.c.h.b16 %v175
    %v1026 = vunpack.c.l.b16 %v176
    %v1027 = vunpack.c.h.b16 %v176
    %v1028 = vunpack.c.l.b16 %v177
    %v1029 = vunpack.c.h.b16 %v177
    %v1030 = vunpack.c.l.b16 %v178
    %v1031 = vunpack.c.h.b16 %v178
    %v1032 = vunpack.c.l.b16 %v179
    %v1033 = vunpack.c.h.b16 %v179
    %v1034 = vunpack.c.l.b16 %v180
    %v1035 = vunpack.c.h.b16 %v180
    %v1036 = vunpack.c.l.b16 %v181
    %v1037 = vunpack.c.h.b16 %v181
    %v1038 = vunpack.c.l.b16 %v182
    %v1039 = vunpack.c.h.b16 %v182
    %v1040 = vunpack.c.l.b16 %v183
    %v1041 = vunpack.c.h.b16 %v183
    %v1042 = vunpack.c.l.b16 %v184
    %v1043 = vunpack.c.h.b16 %v184
    %v1044 = vunpack.c.l.b16 %v185
    %v1045 = vunpack.c.h.b16 %v185
    %v1046 = vunpack.c.l.b16 %v186
    %v1047 = vunpack.c.h.b16 %v186
    %v1048 = vunpack.c.l.b16 %v187
    %v1049 = vunpack.c.h.b16 %v187
    %v1050 = vunpack.c.l.b16 %v188
    %v1051 = vunpack.c.h.b16 %v188
    %v1052 = vunpack.c.l.b16 %v189
    %v1053 = vunpack.c.h.b16 %v189
    %v1054 = vunpack.c.l.b16 %v190
    %v1055 = vunpack.c.h.b16 %v190
    %v1056 = vunpack.c.l.b16 %v191
    %v1057 = vunpack.c.h.b16 %v191
    %v1058 = vunpack.c.l.b16 %v192
    %v1059 = vunpack.c.h.b16 %v192
    %v1060 = vunpack.c.l.b16 %v193
    %v1061 = vunpack.c.h.b16 %v193
    %v1062 = vunpack.c.l.b16 %v194
    %v1063 = vunpack.c.h.b16 %v194
    %v1064 = vunpack.c.l.b16 %v195
    %v1065 = vunpack.c.h.b16 %v195
    %v1066 = vunpack.c.l.b16 %v196
    %v1067 = vunpack.c.h.b16 %v196
    %v1068 = vunpack.c.l.b16 %v197
    %v1069 = vunpack.c.h.b16 %v197
    %v1070 = vunpack.c.l.b16 %v198
    %v1071 = vunpack.c.h.b16 %v198
    %v1072 = vunpack.c.l.b16 %v199
    %v1073 = vunpack.c.h.b16 %v199
    %v1074 = vunpack.c.l.b16 %v200
    %v1075 = vunpack.c.h.b16 %v200
    %v1076 = vunpack.c.l.b16 %v201
    %v1077 = vunpack.c.h.b16 %v201
    %v1078 = vunpack.c.l.b16 %v202
    %v1079 = vunpack.c.h.b16 %v202
    %v1080 = vunpack.c.l.b16 %v203
    %v1081 = vunpack.c.h.b16 %v203
    %v1082 = vunpack.c.l.b16 %v204
    %v1083 = vunpack.c.h.b16 %v204
    %v1084 = vunpack.c.l.b16 %v205
    %v1085 = vunpack.c.h.b16 %v205
    %v1086 = vunpack.c.l.b16 %v206
    %v1087 = vunpack.c.h.b16 %v206
    %v1088 = vunpack.c.l.b16 %v207
    %v1089 = vunpack.c.h.b16 %v207
    %v1090 = vunpack.c.l.b16 %v208
    %v1091 = vunpack.c.h.b16 %v208
    %v1092 = vunpack.c.l.b16 %v209
    %v1093 = vunpack.c.h.b16 %v209
    %v1094 = vunpack.c.l.b16 %v210
    %v1095 = vunpack.c.h.b16 %v210
    %v1096 = vunpack.c.l.b16 %v211
    %v1097 = vunpack.c.h.b16 %v211
    %v1098 = vunpack.c.l.b16 %v212
    %v1099 = vunpack.c.h.b16 %v212
    %v1100 = vunpack.c.l.b16 %v213
    %v1101 = vunpack.c.h.b16 %v213
    %v1102 = vunpack.c.l.b16 %v214
    %v1103 = vunpack.c.h.b16 %v214
    %v1104 = vunpack.c.l.b16 %v215
    %v1105 = vunpack.c.h.b16 %v215
    %v1106 = vunpack.c.l.b16 %v216
    %v1107 = vunpack.c.h.b16 %v216
    %v1108 = vunpack.c.l.b16 %v217
    %v1109 = vunpack.c.h.b16 %v217
    %v1110 = vunpack.c.l.b16 %v218
    %v1111 = vunpack.c.h.b16 %v218
    %v1112 = vunpack.c.l.b16 %v219
    %v1113 = vunpack.c.h.b16 %v219
    %v1114 = vunpack.c.l.b16 %v220
    %v1115 = vunpack.c.h.b16 %v220
    %v1116 = vunpack.c.l.b16 %v221
    %v1117 = vunpack.c.h.b16 %v221
    %v1118 = vpack.c.b16 %v998, %v990
    %v1119 = vpack.c.b16 %v999, %v991
    %v1120 = vpack.c.b16 %v1000, %v992
    %v1121 = vpack.c.b16 %v1001, %v993
    %v1122 = vpack.c.b16 %v1002, %v994
    %v1123 = vpack.c.b16 %v1003, %v995
    %v1124 = vpack.c.b16 %v1004, %v996
    %v1125 = vpack.c.b16 %v1005, %v997
    %v1126 = vpack.c.b16 %v1014, %v1006
    %v1127 = vpack.c.b16 %v1015, %v1007
    %v1128 = vpack.c.b16 %v1016, %v1008
    %v1129 = vpack.c.b16 %v1017, %v1009
    %v1130 = vpack.c.b16 %v1018, %v1010
    %v1131 = vpack.c.b16 %v1019, %v1011
    %v1132 = vpack.c.b16 %v1020, %v1012
    %v1133 = vpack.c.b16 %v1021, %v1013
    %v1134 = vpack.c.b16 %v1030, %v1022
    %v1135 = vpack.c.b16 %v1031, %v1023
    %v1136 = vpack.c.b16 %v1032, %v1024
    %v1137 = vpack.c.b16 %v1033, %v1025
    %v1138 = vpack.c.b16 %v1034, %v1026
    %v1139 = vpack.c.b16 %v1035, %v1027
    %v1140 = vpack.c.b16 %v1036, %v1028
    %v1141 = vpack.c.b16 %v1037, %v1029
    %v1142 = vpack.c.b16 %v1046, %v1038
    %v1143 = vpack.c.b16 %v1047, %v1039
    %v1144 = vpack.c.b16 %v1048, %v1040
    %v1145 = vpack.c.b16 %v1049, %v1041
    %v1146 = vpack.c.b16 %v1050, %v1042
    %v1147 = vpack.c.b16 %v1051, %v1043
    %v1148 = vpack.c.b16 %v1052, %v1044
    %v1149 = vpack.c.b16 %v1053, %v1045
    %v1150 = vpack.c.b16 %v1062, %v1054
    %v1151 = vpack.c.b16 %v1063, %v1055
    %v1152 = vpack.c.b16 %v1064, %v1056
    %v1153 = vpack.c.b16 %v1065, %v1057
    %v1154 = vpack.c.b16 %v1066, %v1058
    %v1155 = vpack.c.b16 %v1067, %v1059
    %v1156 = vpack.c.b16 %v1068, %v1060
    %v1157 = vpack.c.b16 %v1069, %v1061
    %v1158 = vpack.c.b16 %v1078, %v1070
    %v1159 = vpack.c.b16 %v1079, %v1071
    %v1160 = vpack.c.b16 %v1080, %v1072
    %v1161 = vpack.c.b16 %v1081, %v1073
    %v1162 = vpack.c.b16 %v1082, %v1074
    %v1163 = vpack.c.b16 %v1083, %v1075
    %v1164 = vpack.c.b16 %v1084, %v1076
    %v1165 = vpack.c.b16 %v1085, %v1077
    %v1166 = vpack.c.b16 %v1094, %v1086
    %v1167 = vpack.c.b16 %v1095, %v1087
    %v1168 = vpack.c.b16 %v1096, %v1088
    %v1169 = vpack.c.b16 %v1097, %v1089
    %v1170 = vpack.c.b16 %v1098, %v1090
    %v1171 = vpack.c.b16 %v1099, %v1091
    %v1172 = vpack.c.b16 %v1100, %v1092
    %v1173 = vpack.c.b16 %v1101, %v1093
    %v1174 = vpack.c.b16 %v1110, %v1102
    %v1175 = vpack.c.b16 %v1111, %v1103
    %v1176 = vpack.c.b16 %v1112, %v1104
    %v1177 = vpack.c.b16 %v1113, %v1105
    %v1178 = vpack.c.b16 %v1114, %v1106
    %v1179 = vpack.c.b16 %v1115, %v1107
    %v1180 = vpack.c.b16 %v1116, %v1108
    %v1181 = vpack.c.b16 %v1117, %v1109
    %1246 = vmatpush.bf16.msra.mxu0 %v1174
    %1247 = vmatpush.bf16.msra.mxu0 %v1166
    %1248 = vmatpush.bf16.msra.mxu0 %v1158
    %1249 = vmatpush.bf16.msra.mxu0 %v1150
    %1250 = vmatpush.bf16.msra.mxu0 %v1142
    %1251 = vmatpush.bf16.msra.mxu0 %v1134
    %1252 = vmatpush.bf16.msra.mxu0 %v1126
    %1253 = vmatpush.bf16.msra.mxu0 %v1118
    %1254 = vmatmul.bf16.gmra.mxu0 %v918
    %v1255 = vpop.f32.mrf.mxu0
    %v1256 = vadd.f32 %v680, %v1255
    %v1257 = vpop.f32.mrf.mxu0
    %v1258 = vadd.f32 %v682, %v1257
    %1259 = vmatmul.bf16.gmra.mxu0 %v919
    %v1260 = vpop.f32.mrf.mxu0
    %v1261 = vadd.f32 %v685, %v1260
    %v1262 = vpop.f32.mrf.mxu0
    %v1263 = vadd.f32 %v687, %v1262
    %1264 = vmatmul.bf16.gmra.mxu0 %v920
    %v1265 = vpop.f32.mrf.mxu0
    %v1266 = vadd.f32 %v690, %v1265
    %v1267 = vpop.f32.mrf.mxu0
    %v1268 = vadd.f32 %v692, %v1267
    %1269 = vmatmul.bf16.gmra.mxu0 %v921
    %v1270 = vpop.f32.mrf.mxu0
    %v1271 = vadd.f32 %v695, %v1270
    %v1272 = vpop.f32.mrf.mxu0
    %v1273 = vadd.f32 %v697, %v1272
    %1274 = vdwg.mxu0
    %1275 = vmatpush.bf16.msra.mxu0 %v1175
    %1276 = vmatpush.bf16.msra.mxu0 %v1167
    %1277 = vmatpush.bf16.msra.mxu0 %v1159
    %1278 = vmatpush.bf16.msra.mxu0 %v1151
    %1279 = vmatpush.bf16.msra.mxu0 %v1143
    %1280 = vmatpush.bf16.msra.mxu0 %v1135
    %1281 = vmatpush.bf16.msra.mxu0 %v1127
    %1282 = vmatpush.bf16.msra.mxu0 %v1119
    %1283 = vmatmul.bf16.gmra.mxu0 %v918
    %v1284 = vpop.f32.mrf.mxu0
    %v1285 = vadd.f32 %v709, %v1284
    %v1286 = vpop.f32.mrf.mxu0
    %v1287 = vadd.f32 %v711, %v1286
    %1288 = vmatmul.bf16.gmra.mxu0 %v919
    %v1289 = vpop.f32.mrf.mxu0
    %v1290 = vadd.f32 %v714, %v1289
    %v1291 = vpop.f32.mrf.mxu0
    %v1292 = vadd.f32 %v716, %v1291
    %1293 = vmatmul.bf16.gmra.mxu0 %v920
    %v1294 = vpop.f32.mrf.mxu0
    %v1295 = vadd.f32 %v719, %v1294
    %v1296 = vpop.f32.mrf.mxu0
    %v1297 = vadd.f32 %v721, %v1296
    %1298 = vmatmul.bf16.gmra.mxu0 %v921
    %v1299 = vpop.f32.mrf.mxu0
    %v1300 = vadd.f32 %v724, %v1299
    %v1301 = vpop.f32.mrf.mxu0
    %v1302 = vadd.f32 %v726, %v1301
    %1303 = vdwg.mxu0
    %1304 = vmatpush.bf16.msra.mxu0 %v1176
    %1305 = vmatpush.bf16.msra.mxu0 %v1168
    %1306 = vmatpush.bf16.msra.mxu0 %v1160
    %1307 = vmatpush.bf16.msra.mxu0 %v1152
    %1308 = vmatpush.bf16.msra.mxu0 %v1144
    %1309 = vmatpush.bf16.msra.mxu0 %v1136
    %1310 = vmatpush.bf16.msra.mxu0 %v1128
    %1311 = vmatpush.bf16.msra.mxu0 %v1120
    %1312 = vmatmul.bf16.gmra.mxu0 %v918
    %v1313 = vpop.f32.mrf.mxu0
    %v1314 = vadd.f32 %v738, %v1313
    %v1315 = vpop.f32.mrf.mxu0
    %v1316 = vadd.f32 %v740, %v1315
    %1317 = vmatmul.bf16.gmra.mxu0 %v919
    %v1318 = vpop.f32.mrf.mxu0
    %v1319 = vadd.f32 %v743, %v1318
    %v1320 = vpop.f32.mrf.mxu0
    %v1321 = vadd.f32 %v745, %v1320
    %1322 = vmatmul.bf16.gmra.mxu0 %v920
    %v1323 = vpop.f32.mrf.mxu0
    %v1324 = vadd.f32 %v748, %v1323
    %v1325 = vpop.f32.mrf.mxu0
    %v1326 = vadd.f32 %v750, %v1325
    %1327 = vmatmul.bf16.gmra.mxu0 %v921
    %v1328 = vpop.f32.mrf.mxu0
    %v1329 = vadd.f32 %v753, %v1328
    %v1330 = vpop.f32.mrf.mxu0
    %v1331 = vadd.f32 %v755, %v1330
    %1332 = vdwg.mxu0
    %1333 = vmatpush.bf16.msra.mxu0 %v1177
    %1334 = vmatpush.bf16.msra.mxu0 %v1169
    %1335 = vmatpush.bf16.msra.mxu0 %v1161
    %1336 = vmatpush.bf16.msra.mxu0 %v1153
    %1337 = vmatpush.bf16.msra.mxu0 %v1145
    %1338 = vmatpush.bf16.msra.mxu0 %v1137
    %1339 = vmatpush.bf16.msra.mxu0 %v1129
    %1340 = vmatpush.bf16.msra.mxu0 %v1121
    %1341 = vmatmul.bf16.gmra.mxu0 %v918
    %v1342 = vpop.f32.mrf.mxu0
    %v1343 = vadd.f32 %v767, %v1342
    %v1344 = vpop.f32.mrf.mxu0
    %v1345 = vadd.f32 %v769, %v1344
    %1346 = vmatmul.bf16.gmra.mxu0 %v919
    %v1347 = vpop.f32.mrf.mxu0
    %v1348 = vadd.f32 %v772, %v1347
    %v1349 = vpop.f32.mrf.mxu0
    %v1350 = vadd.f32 %v774, %v1349
    %1351 = vmatmul.bf16.gmra.mxu0 %v920
    %v1352 = vpop.f32.mrf.mxu0
    %v1353 = vadd.f32 %v777, %v1352
    %v1354 = vpop.f32.mrf.mxu0
    %v1355 = vadd.f32 %v779, %v1354
    %1356 = vmatmul.bf16.gmra.mxu0 %v921
    %v1357 = vpop.f32.mrf.mxu0
    %v1358 = vadd.f32 %v782, %v1357
    %v1359 = vpop.f32.mrf.mxu0
    %v1360 = vadd.f32 %v784, %v1359
    %1361 = vdwg.mxu0
    %1362 = vmatpush.bf16.msra.mxu0 %v1178
    %1363 = vmatpush.bf16.msra.mxu0 %v1170
    %1364 = vmatpush.bf16.msra.mxu0 %v1162
    %1365 = vmatpush.bf16.msra.mxu0 %v1154
    %1366 = vmatpush.bf16.msra.mxu0 %v1146
    %1367 = vmatpush.bf16.msra.mxu0 %v1138
    %1368 = vmatpush.bf16.msra.mxu0 %v1130
    %1369 = vmatpush.bf16.msra.mxu0 %v1122
    %1370 = vmatmul.bf16.gmra.mxu0 %v918
    %v1371 = vpop.f32.mrf.mxu0
    %v1372 = vadd.f32 %v796, %v1371
    %v1373 = vpop.f32.mrf.mxu0
    %v1374 = vadd.f32 %v798, %v1373
    %1375 = vmatmul.bf16.gmra.mxu0 %v919
    %v1376 = vpop.f32.mrf.mxu0
    %v1377 = vadd.f32 %v801, %v1376
    %v1378 = vpop.f32.mrf.mxu0
    %v1379 = vadd.f32 %v803, %v1378
    %1380 = vmatmul.bf16.gmra.mxu0 %v920
    %v1381 = vpop.f32.mrf.mxu0
    %v1382 = vadd.f32 %v806, %v1381
    %v1383 = vpop.f32.mrf.mxu0
    %v1384 = vadd.f32 %v808, %v1383
    %1385 = vmatmul.bf16.gmra.mxu0 %v921
    %v1386 = vpop.f32.mrf.mxu0
    %v1387 = vadd.f32 %v811, %v1386
    %v1388 = vpop.f32.mrf.mxu0
    %v1389 = vadd.f32 %v813, %v1388
    %1390 = vdwg.mxu0
    %1391 = vmatpush.bf16.msra.mxu0 %v1179
    %1392 = vmatpush.bf16.msra.mxu0 %v1171
    %1393 = vmatpush.bf16.msra.mxu0 %v1163
    %1394 = vmatpush.bf16.msra.mxu0 %v1155
    %1395 = vmatpush.bf16.msra.mxu0 %v1147
    %1396 = vmatpush.bf16.msra.mxu0 %v1139
    %1397 = vmatpush.bf16.msra.mxu0 %v1131
    %1398 = vmatpush.bf16.msra.mxu0 %v1123
    %1399 = vmatmul.bf16.gmra.mxu0 %v918
    %v1400 = vpop.f32.mrf.mxu0
    %v1401 = vadd.f32 %v825, %v1400
    %v1402 = vpop.f32.mrf.mxu0
    %v1403 = vadd.f32 %v827, %v1402
    %1404 = vmatmul.bf16.gmra.mxu0 %v919
    %v1405 = vpop.f32.mrf.mxu0
    %v1406 = vadd.f32 %v830, %v1405
    %v1407 = vpop.f32.mrf.mxu0
    %v1408 = vadd.f32 %v832, %v1407
    %1409 = vmatmul.bf16.gmra.mxu0 %v920
    %v1410 = vpop.f32.mrf.mxu0
    %v1411 = vadd.f32 %v835, %v1410
    %v1412 = vpop.f32.mrf.mxu0
    %v1413 = vadd.f32 %v837, %v1412
    %1414 = vmatmul.bf16.gmra.mxu0 %v921
    %v1415 = vpop.f32.mrf.mxu0
    %v1416 = vadd.f32 %v840, %v1415
    %v1417 = vpop.f32.mrf.mxu0
    %v1418 = vadd.f32 %v842, %v1417
    %1419 = vdwg.mxu0
    %1420 = vmatpush.bf16.msra.mxu0 %v1180
    %1421 = vmatpush.bf16.msra.mxu0 %v1172
    %1422 = vmatpush.bf16.msra.mxu0 %v1164
    %1423 = vmatpush.bf16.msra.mxu0 %v1156
    %1424 = vmatpush.bf16.msra.mxu0 %v1148
    %1425 = vmatpush.bf16.msra.mxu0 %v1140
    %1426 = vmatpush.bf16.msra.mxu0 %v1132
    %1427 = vmatpush.bf16.msra.mxu0 %v1124
    %1428 = vmatmul.bf16.gmra.mxu0 %v918
    %v1429 = vpop.f32.mrf.mxu0
    %v1430 = vadd.f32 %v854, %v1429
    %v1431 = vpop.f32.mrf.mxu0
    %v1432 = vadd.f32 %v856, %v1431
    %1433 = vmatmul.bf16.gmra.mxu0 %v919
    %v1434 = vpop.f32.mrf.mxu0
    %v1435 = vadd.f32 %v859, %v1434
    %v1436 = vpop.f32.mrf.mxu0
    %v1437 = vadd.f32 %v861, %v1436
    %1438 = vmatmul.bf16.gmra.mxu0 %v920
    %v1439 = vpop.f32.mrf.mxu0
    %v1440 = vadd.f32 %v864, %v1439
    %v1441 = vpop.f32.mrf.mxu0
    %v1442 = vadd.f32 %v866, %v1441
    %1443 = vmatmul.bf16.gmra.mxu0 %v921
    %v1444 = vpop.f32.mrf.mxu0
    %v1445 = vadd.f32 %v869, %v1444
    %v1446 = vpop.f32.mrf.mxu0
    %v1447 = vadd.f32 %v871, %v1446
    %1448 = vdwg.mxu0
    %1449 = vmatpush.bf16.msra.mxu0 %v1181
    %1450 = vmatpush.bf16.msra.mxu0 %v1173
    %1451 = vmatpush.bf16.msra.mxu0 %v1165
    %1452 = vmatpush.bf16.msra.mxu0 %v1157
    %1453 = vmatpush.bf16.msra.mxu0 %v1149
    %1454 = vmatpush.bf16.msra.mxu0 %v1141
    %1455 = vmatpush.bf16.msra.mxu0 %v1133
    %1456 = vmatpush.bf16.msra.mxu0 %v1125
    %1457 = vmatmul.bf16.gmra.mxu0 %v918
    %v1458 = vpop.f32.mrf.mxu0
    %v1459 = vadd.f32 %v883, %v1458
    %v1460 = vpop.f32.mrf.mxu0
    %v1461 = vadd.f32 %v885, %v1460
    %1462 = vmatmul.bf16.gmra.mxu0 %v919
    %v1463 = vpop.f32.mrf.mxu0
    %v1464 = vadd.f32 %v888, %v1463
    %v1465 = vpop.f32.mrf.mxu0
    %v1466 = vadd.f32 %v890, %v1465
    %1467 = vmatmul.bf16.gmra.mxu0 %v920
    %v1468 = vpop.f32.mrf.mxu0
    %v1469 = vadd.f32 %v893, %v1468
    %v1470 = vpop.f32.mrf.mxu0
    %v1471 = vadd.f32 %v895, %v1470
    %1472 = vmatmul.bf16.gmra.mxu0 %v921
    %v1473 = vpop.f32.mrf.mxu0
    %v1474 = vadd.f32 %v898, %v1473
    %v1475 = vpop.f32.mrf.mxu0
    %v1476 = vadd.f32 %v900, %v1475
    %1477 = vdwg.mxu0
    %v1542 = vunpack.c.l.b16 %v286
    %v1543 = vunpack.c.h.b16 %v286
    %v1544 = vunpack.c.l.b16 %v287
    %v1545 = vunpack.c.h.b16 %v287
    %v1546 = vunpack.c.l.b16 %v288
    %v1547 = vunpack.c.h.b16 %v288
    %v1548 = vunpack.c.l.b16 %v289
    %v1549 = vunpack.c.h.b16 %v289
    %v1550 = vunpack.c.l.b16 %v290
    %v1551 = vunpack.c.h.b16 %v290
    %v1552 = vunpack.c.l.b16 %v291
    %v1553 = vunpack.c.h.b16 %v291
    %v1554 = vunpack.c.l.b16 %v292
    %v1555 = vunpack.c.h.b16 %v292
    %v1556 = vunpack.c.l.b16 %v293
    %v1557 = vunpack.c.h.b16 %v293
    %v1558 = vunpack.c.l.b16 %v294
    %v1559 = vunpack.c.h.b16 %v294
    %v1560 = vunpack.c.l.b16 %v295
    %v1561 = vunpack.c.h.b16 %v295
    %v1562 = vunpack.c.l.b16 %v296
    %v1563 = vunpack.c.h.b16 %v296
    %v1564 = vunpack.c.l.b16 %v297
    %v1565 = vunpack.c.h.b16 %v297
    %v1566 = vunpack.c.l.b16 %v298
    %v1567 = vunpack.c.h.b16 %v298
    %v1568 = vunpack.c.l.b16 %v299
    %v1569 = vunpack.c.h.b16 %v299
    %v1570 = vunpack.c.l.b16 %v300
    %v1571 = vunpack.c.h.b16 %v300
    %v1572 = vunpack.c.l.b16 %v301
    %v1573 = vunpack.c.h.b16 %v301
    %v1574 = vunpack.c.l.b16 %v302
    %v1575 = vunpack.c.h.b16 %v302
    %v1576 = vunpack.c.l.b16 %v303
    %v1577 = vunpack.c.h.b16 %v303
    %v1578 = vunpack.c.l.b16 %v304
    %v1579 = vunpack.c.h.b16 %v304
    %v1580 = vunpack.c.l.b16 %v305
    %v1581 = vunpack.c.h.b16 %v305
    %v1582 = vunpack.c.l.b16 %v306
    %v1583 = vunpack.c.h.b16 %v306
    %v1584 = vunpack.c.l.b16 %v307
    %v1585 = vunpack.c.h.b16 %v307
    %v1586 = vunpack.c.l.b16 %v308
    %v1587 = vunpack.c.h.b16 %v308
    %v1588 = vunpack.c.l.b16 %v309
    %v1589 = vunpack.c.h.b16 %v309
    %v1590 = vunpack.c.l.b16 %v310
    %v1591 = vunpack.c.h.b16 %v310
    %v1592 = vunpack.c.l.b16 %v311
    %v1593 = vunpack.c.h.b16 %v311
    %v1594 = vunpack.c.l.b16 %v312
    %v1595 = vunpack.c.h.b16 %v312
    %v1596 = vunpack.c.l.b16 %v313
    %v1597 = vunpack.c.h.b16 %v313
    %v1598 = vunpack.c.l.b16 %v314
    %v1599 = vunpack.c.h.b16 %v314
    %v1600 = vunpack.c.l.b16 %v315
    %v1601 = vunpack.c.h.b16 %v315
    %v1602 = vunpack.c.l.b16 %v316
    %v1603 = vunpack.c.h.b16 %v316
    %v1604 = vunpack.c.l.b16 %v317
    %v1605 = vunpack.c.h.b16 %v317
    %v1606 = vunpack.c.l.b16 %v318
    %v1607 = vunpack.c.h.b16 %v318
    %v1608 = vunpack.c.l.b16 %v319
    %v1609 = vunpack.c.h.b16 %v319
    %v1610 = vunpack.c.l.b16 %v320
    %v1611 = vunpack.c.h.b16 %v320
    %v1612 = vunpack.c.l.b16 %v321
    %v1613 = vunpack.c.h.b16 %v321
    %v1614 = vunpack.c.l.b16 %v322
    %v1615 = vunpack.c.h.b16 %v322
    %v1616 = vunpack.c.l.b16 %v323
    %v1617 = vunpack.c.h.b16 %v323
    %v1618 = vunpack.c.l.b16 %v324
    %v1619 = vunpack.c.h.b16 %v324
    %v1620 = vunpack.c.l.b16 %v325
    %v1621 = vunpack.c.h.b16 %v325
    %v1622 = vunpack.c.l.b16 %v326
    %v1623 = vunpack.c.h.b16 %v326
    %v1624 = vunpack.c.l.b16 %v327
    %v1625 = vunpack.c.h.b16 %v327
    %v1626 = vunpack.c.l.b16 %v328
    %v1627 = vunpack.c.h.b16 %v328
    %v1628 = vunpack.c.l.b16 %v329
    %v1629 = vunpack.c.h.b16 %v329
    %v1630 = vunpack.c.l.b16 %v330
    %v1631 = vunpack.c.h.b16 %v330
    %v1632 = vunpack.c.l.b16 %v331
    %v1633 = vunpack.c.h.b16 %v331
    %v1634 = vunpack.c.l.b16 %v332
    %v1635 = vunpack.c.h.b16 %v332
    %v1636 = vunpack.c.l.b16 %v333
    %v1637 = vunpack.c.h.b16 %v333
    %v1638 = vunpack.c.l.b16 %v334
    %v1639 = vunpack.c.h.b16 %v334
    %v1640 = vunpack.c.l.b16 %v335
    %v1641 = vunpack.c.h.b16 %v335
    %v1642 = vunpack.c.l.b16 %v336
    %v1643 = vunpack.c.h.b16 %v336
    %v1644 = vunpack.c.l.b16 %v337
    %v1645 = vunpack.c.h.b16 %v337
    %v1646 = vunpack.c.l.b16 %v338
    %v1647 = vunpack.c.h.b16 %v338
    %v1648 = vunpack.c.l.b16 %v339
    %v1649 = vunpack.c.h.b16 %v339
    %v1650 = vunpack.c.l.b16 %v340
    %v1651 = vunpack.c.h.b16 %v340
    %v1652 = vunpack.c.l.b16 %v341
    %v1653 = vunpack.c.h.b16 %v341
    %v1654 = vunpack.c.l.b16 %v342
    %v1655 = vunpack.c.h.b16 %v342
    %v1656 = vunpack.c.l.b16 %v343
    %v1657 = vunpack.c.h.b16 %v343
    %v1658 = vunpack.c.l.b16 %v344
    %v1659 = vunpack.c.h.b16 %v344
    %v1660 = vunpack.c.l.b16 %v345
    %v1661 = vunpack.c.h.b16 %v345
    %v1662 = vunpack.c.l.b16 %v346
    %v1663 = vunpack.c.h.b16 %v346
    %v1664 = vunpack.c.l.b16 %v347
    %v1665 = vunpack.c.h.b16 %v347
    %v1666 = vunpack.c.l.b16 %v348
    %v1667 = vunpack.c.h.b16 %v348
    %v1668 = vunpack.c.l.b16 %v349
    %v1669 = vunpack.c.h.b16 %v349
    %v1670 = vpack.c.b16 %v1550, %v1542
    %v1671 = vpack.c.b16 %v1551, %v1543
    %v1672 = vpack.c.b16 %v1552, %v1544
    %v1673 = vpack.c.b16 %v1553, %v1545
    %v1674 = vpack.c.b16 %v1554, %v1546
    %v1675 = vpack.c.b16 %v1555, %v1547
    %v1676 = vpack.c.b16 %v1556, %v1548
    %v1677 = vpack.c.b16 %v1557, %v1549
    %v1678 = vpack.c.b16 %v1566, %v1558
    %v1679 = vpack.c.b16 %v1567, %v1559
    %v1680 = vpack.c.b16 %v1568, %v1560
    %v1681 = vpack.c.b16 %v1569, %v1561
    %v1682 = vpack.c.b16 %v1570, %v1562
    %v1683 = vpack.c.b16 %v1571, %v1563
    %v1684 = vpack.c.b16 %v1572, %v1564
    %v1685 = vpack.c.b16 %v1573, %v1565
    %v1686 = vpack.c.b16 %v1582, %v1574
    %v1687 = vpack.c.b16 %v1583, %v1575
    %v1688 = vpack.c.b16 %v1584, %v1576
    %v1689 = vpack.c.b16 %v1585, %v1577
    %v1690 = vpack.c.b16 %v1586, %v1578
    %v1691 = vpack.c.b16 %v1587, %v1579
    %v1692 = vpack.c.b16 %v1588, %v1580
    %v1693 = vpack.c.b16 %v1589, %v1581
    %v1694 = vpack.c.b16 %v1598, %v1590
    %v1695 = vpack.c.b16 %v1599, %v1591
    %v1696 = vpack.c.b16 %v1600, %v1592
    %v1697 = vpack.c.b16 %v1601, %v1593
    %v1698 = vpack.c.b16 %v1602, %v1594
    %v1699 = vpack.c.b16 %v1603, %v1595
    %v1700 = vpack.c.b16 %v1604, %v1596
    %v1701 = vpack.c.b16 %v1605, %v1597
    %v1702 = vpack.c.b16 %v1614, %v1606
    %v1703 = vpack.c.b16 %v1615, %v1607
    %v1704 = vpack.c.b16 %v1616, %v1608
    %v1705 = vpack.c.b16 %v1617, %v1609
    %v1706 = vpack.c.b16 %v1618, %v1610
    %v1707 = vpack.c.b16 %v1619, %v1611
    %v1708 = vpack.c.b16 %v1620, %v1612
    %v1709 = vpack.c.b16 %v1621, %v1613
    %v1710 = vpack.c.b16 %v1630, %v1622
    %v1711 = vpack.c.b16 %v1631, %v1623
    %v1712 = vpack.c.b16 %v1632, %v1624
    %v1713 = vpack.c.b16 %v1633, %v1625
    %v1714 = vpack.c.b16 %v1634, %v1626
    %v1715 = vpack.c.b16 %v1635, %v1627
    %v1716 = vpack.c.b16 %v1636, %v1628
    %v1717 = vpack.c.b16 %v1637, %v1629
    %v1718 = vpack.c.b16 %v1646, %v1638
    %v1719 = vpack.c.b16 %v1647, %v1639
    %v1720 = vpack.c.b16 %v1648, %v1640
    %v1721 = vpack.c.b16 %v1649, %v1641
    %v1722 = vpack.c.b16 %v1650, %v1642
    %v1723 = vpack.c.b16 %v1651, %v1643
    %v1724 = vpack.c.b16 %v1652, %v1644
    %v1725 = vpack.c.b16 %v1653, %v1645
    %v1726 = vpack.c.b16 %v1662, %v1654
    %v1727 = vpack.c.b16 %v1663, %v1655
    %v1728 = vpack.c.b16 %v1664, %v1656
    %v1729 = vpack.c.b16 %v1665, %v1657
    %v1730 = vpack.c.b16 %v1666, %v1658
    %v1731 = vpack.c.b16 %v1667, %v1659
    %v1732 = vpack.c.b16 %v1668, %v1660
    %v1733 = vpack.c.b16 %v1669, %v1661
    %1798 = vmatpush.bf16.msra.mxu0 %v1726
    %1799 = vmatpush.bf16.msra.mxu0 %v1718
    %1800 = vmatpush.bf16.msra.mxu0 %v1710
    %1801 = vmatpush.bf16.msra.mxu0 %v1702
    %1802 = vmatpush.bf16.msra.mxu0 %v1694
    %1803 = vmatpush.bf16.msra.mxu0 %v1686
    %1804 = vmatpush.bf16.msra.mxu0 %v1678
    %1805 = vmatpush.bf16.msra.mxu0 %v1670
    %1806 = vmatmul.bf16.gmra.mxu0 %v154
    %v1807 = vpop.f32.mrf.mxu0
    %v1808 = vadd.f32 0.0, %v1807
    %v1809 = vpop.f32.mrf.mxu0
    %v1810 = vadd.f32 0.0, %v1809
    %1811 = vmatmul.bf16.gmra.mxu0 %v155
    %v1812 = vpop.f32.mrf.mxu0
    %v1813 = vadd.f32 0.0, %v1812
    %v1814 = vpop.f32.mrf.mxu0
    %v1815 = vadd.f32 0.0, %v1814
    %1816 = vmatmul.bf16.gmra.mxu0 %v156
    %v1817 = vpop.f32.mrf.mxu0
    %v1818 = vadd.f32 0.0, %v1817
    %v1819 = vpop.f32.mrf.mxu0
    %v1820 = vadd.f32 0.0, %v1819
    %1821 = vmatmul.bf16.gmra.mxu0 %v157
    %v1822 = vpop.f32.mrf.mxu0
    %v1823 = vadd.f32 0.0, %v1822
    %v1824 = vpop.f32.mrf.mxu0
    %v1825 = vadd.f32 0.0, %v1824
    %1826 = vdwg.mxu0
    %1827 = vmatpush.bf16.msra.mxu0 %v1727
    %1828 = vmatpush.bf16.msra.mxu0 %v1719
    %1829 = vmatpush.bf16.msra.mxu0 %v1711
    %1830 = vmatpush.bf16.msra.mxu0 %v1703
    %1831 = vmatpush.bf16.msra.mxu0 %v1695
    %1832 = vmatpush.bf16.msra.mxu0 %v1687
    %1833 = vmatpush.bf16.msra.mxu0 %v1679
    %1834 = vmatpush.bf16.msra.mxu0 %v1671
    %1835 = vmatmul.bf16.gmra.mxu0 %v154
    %v1836 = vpop.f32.mrf.mxu0
    %v1837 = vadd.f32 0.0, %v1836
    %v1838 = vpop.f32.mrf.mxu0
    %v1839 = vadd.f32 0.0, %v1838
    %1840 = vmatmul.bf16.gmra.mxu0 %v155
    %v1841 = vpop.f32.mrf.mxu0
    %v1842 = vadd.f32 0.0, %v1841
    %v1843 = vpop.f32.mrf.mxu0
    %v1844 = vadd.f32 0.0, %v1843
    %1845 = vmatmul.bf16.gmra.mxu0 %v156
    %v1846 = vpop.f32.mrf.mxu0
    %v1847 = vadd.f32 0.0, %v1846
    %v1848 = vpop.f32.mrf.mxu0
    %v1849 = vadd.f32 0.0, %v1848
    %1850 = vmatmul.bf16.gmra.mxu0 %v157
    %v1851 = vpop.f32.mrf.mxu0
    %v1852 = vadd.f32 0.0, %v1851
    %v1853 = vpop.f32.mrf.mxu0
    %v1854 = vadd.f32 0.0, %v1853
    %1855 = vdwg.mxu0
    %1856 = vmatpush.bf16.msra.mxu0 %v1728
    %1857 = vmatpush.bf16.msra.mxu0 %v1720
    %1858 = vmatpush.bf16.msra.mxu0 %v1712
    %1859 = vmatpush.bf16.msra.mxu0 %v1704
    %1860 = vmatpush.bf16.msra.mxu0 %v1696
    %1861 = vmatpush.bf16.msra.mxu0 %v1688
    %1862 = vmatpush.bf16.msra.mxu0 %v1680
    %1863 = vmatpush.bf16.msra.mxu0 %v1672
    %1864 = vmatmul.bf16.gmra.mxu0 %v154
    %v1865 = vpop.f32.mrf.mxu0
    %v1866 = vadd.f32 0.0, %v1865
    %v1867 = vpop.f32.mrf.mxu0
    %v1868 = vadd.f32 0.0, %v1867
    %1869 = vmatmul.bf16.gmra.mxu0 %v155
    %v1870 = vpop.f32.mrf.mxu0
    %v1871 = vadd.f32 0.0, %v1870
    %v1872 = vpop.f32.mrf.mxu0
    %v1873 = vadd.f32 0.0, %v1872
    %1874 = vmatmul.bf16.gmra.mxu0 %v156
    %v1875 = vpop.f32.mrf.mxu0
    %v1876 = vadd.f32 0.0, %v1875
    %v1877 = vpop.f32.mrf.mxu0
    %v1878 = vadd.f32 0.0, %v1877
    %1879 = vmatmul.bf16.gmra.mxu0 %v157
    %v1880 = vpop.f32.mrf.mxu0
    %v1881 = vadd.f32 0.0, %v1880
    %v1882 = vpop.f32.mrf.mxu0
    %v1883 = vadd.f32 0.0, %v1882
    %1884 = vdwg.mxu0
    %1885 = vmatpush.bf16.msra.mxu0 %v1729
    %1886 = vmatpush.bf16.msra.mxu0 %v1721
    %1887 = vmatpush.bf16.msra.mxu0 %v1713
    %1888 = vmatpush.bf16.msra.mxu0 %v1705
    %1889 = vmatpush.bf16.msra.mxu0 %v1697
    %1890 = vmatpush.bf16.msra.mxu0 %v1689
    %1891 = vmatpush.bf16.msra.mxu0 %v1681
    %1892 = vmatpush.bf16.msra.mxu0 %v1673
    %1893 = vmatmul.bf16.gmra.mxu0 %v154
    %v1894 = vpop.f32.mrf.mxu0
    %v1895 = vadd.f32 0.0, %v1894
    %v1896 = vpop.f32.mrf.mxu0
    %v1897 = vadd.f32 0.0, %v1896
    %1898 = vmatmul.bf16.gmra.mxu0 %v155
    %v1899 = vpop.f32.mrf.mxu0
    %v1900 = vadd.f32 0.0, %v1899
    %v1901 = vpop.f32.mrf.mxu0
    %v1902 = vadd.f32 0.0, %v1901
    %1903 = vmatmul.bf16.gmra.mxu0 %v156
    %v1904 = vpop.f32.mrf.mxu0
    %v1905 = vadd.f32 0.0, %v1904
    %v1906 = vpop.f32.mrf.mxu0
    %v1907 = vadd.f32 0.0, %v1906
    %1908 = vmatmul.bf16.gmra.mxu0 %v157
    %v1909 = vpop.f32.mrf.mxu0
    %v1910 = vadd.f32 0.0, %v1909
    %v1911 = vpop.f32.mrf.mxu0
    %v1912 = vadd.f32 0.0, %v1911
    %1913 = vdwg.mxu0
    %1914 = vmatpush.bf16.msra.mxu0 %v1730
    %1915 = vmatpush.bf16.msra.mxu0 %v1722
    %1916 = vmatpush.bf16.msra.mxu0 %v1714
    %1917 = vmatpush.bf16.msra.mxu0 %v1706
    %1918 = vmatpush.bf16.msra.mxu0 %v1698
    %1919 = vmatpush.bf16.msra.mxu0 %v1690
    %1920 = vmatpush.bf16.msra.mxu0 %v1682
    %1921 = vmatpush.bf16.msra.mxu0 %v1674
    %1922 = vmatmul.bf16.gmra.mxu0 %v154
    %v1923 = vpop.f32.mrf.mxu0
    %v1924 = vadd.f32 0.0, %v1923
    %v1925 = vpop.f32.mrf.mxu0
    %v1926 = vadd.f32 0.0, %v1925
    %1927 = vmatmul.bf16.gmra.mxu0 %v155
    %v1928 = vpop.f32.mrf.mxu0
    %v1929 = vadd.f32 0.0, %v1928
    %v1930 = vpop.f32.mrf.mxu0
    %v1931 = vadd.f32 0.0, %v1930
    %1932 = vmatmul.bf16.gmra.mxu0 %v156
    %v1933 = vpop.f32.mrf.mxu0
    %v1934 = vadd.f32 0.0, %v1933
    %v1935 = vpop.f32.mrf.mxu0
    %v1936 = vadd.f32 0.0, %v1935
    %1937 = vmatmul.bf16.gmra.mxu0 %v157
    %v1938 = vpop.f32.mrf.mxu0
    %v1939 = vadd.f32 0.0, %v1938
    %v1940 = vpop.f32.mrf.mxu0
    %v1941 = vadd.f32 0.0, %v1940
    %1942 = vdwg.mxu0
    %1943 = vmatpush.bf16.msra.mxu0 %v1731
    %1944 = vmatpush.bf16.msra.mxu0 %v1723
    %1945 = vmatpush.bf16.msra.mxu0 %v1715
    %1946 = vmatpush.bf16.msra.mxu0 %v1707
    %1947 = vmatpush.bf16.msra.mxu0 %v1699
    %1948 = vmatpush.bf16.msra.mxu0 %v1691
    %1949 = vmatpush.bf16.msra.mxu0 %v1683
    %1950 = vmatpush.bf16.msra.mxu0 %v1675
    %1951 = vmatmul.bf16.gmra.mxu0 %v154
    %v1952 = vpop.f32.mrf.mxu0
    %v1953 = vadd.f32 0.0, %v1952
    %v1954 = vpop.f32.mrf.mxu0
    %v1955 = vadd.f32 0.0, %v1954
    %1956 = vmatmul.bf16.gmra.mxu0 %v155
    %v1957 = vpop.f32.mrf.mxu0
    %v1958 = vadd.f32 0.0, %v1957
    %v1959 = vpop.f32.mrf.mxu0
    %v1960 = vadd.f32 0.0, %v1959
    %1961 = vmatmul.bf16.gmra.mxu0 %v156
    %v1962 = vpop.f32.mrf.mxu0
    %v1963 = vadd.f32 0.0, %v1962
    %v1964 = vpop.f32.mrf.mxu0
    %v1965 = vadd.f32 0.0, %v1964
    %1966 = vmatmul.bf16.gmra.mxu0 %v157
    %v1967 = vpop.f32.mrf.mxu0
    %v1968 = vadd.f32 0.0, %v1967
    %v1969 = vpop.f32.mrf.mxu0
    %v1970 = vadd.f32 0.0, %v1969
    %1971 = vdwg.mxu0
    %1972 = vmatpush.bf16.msra.mxu0 %v1732
    %1973 = vmatpush.bf16.msra.mxu0 %v1724
    %1974 = vmatpush.bf16.msra.mxu0 %v1716
    %1975 = vmatpush.bf16.msra.mxu0 %v1708
    %1976 = vmatpush.bf16.msra.mxu0 %v1700
    %1977 = vmatpush.bf16.msra.mxu0 %v1692
    %1978 = vmatpush.bf16.msra.mxu0 %v1684
    %1979 = vmatpush.bf16.msra.mxu0 %v1676
    %1980 = vmatmul.bf16.gmra.mxu0 %v154
    %v1981 = vpop.f32.mrf.mxu0
    %v1982 = vadd.f32 0.0, %v1981
    %v1983 = vpop.f32.mrf.mxu0
    %v1984 = vadd.f32 0.0, %v1983
    %1985 = vmatmul.bf16.gmra.mxu0 %v155
    %v1986 = vpop.f32.mrf.mxu0
    %v1987 = vadd.f32 0.0, %v1986
    %v1988 = vpop.f32.mrf.mxu0
    %v1989 = vadd.f32 0.0, %v1988
    %1990 = vmatmul.bf16.gmra.mxu0 %v156
    %v1991 = vpop.f32.mrf.mxu0
    %v1992 = vadd.f32 0.0, %v1991
    %v1993 = vpop.f32.mrf.mxu0
    %v1994 = vadd.f32 0.0, %v1993
    %1995 = vmatmul.bf16.gmra.mxu0 %v157
    %v1996 = vpop.f32.mrf.mxu0
    %v1997 = vadd.f32 0.0, %v1996
    %v1998 = vpop.f32.mrf.mxu0
    %v1999 = vadd.f32 0.0, %v1998
    %2000 = vdwg.mxu0
    %2001 = vmatpush.bf16.msra.mxu0 %v1733
    %2002 = vmatpush.bf16.msra.mxu0 %v1725
    %2003 = vmatpush.bf16.msra.mxu0 %v1717
    %2004 = vmatpush.bf16.msra.mxu0 %v1709
    %2005 = vmatpush.bf16.msra.mxu0 %v1701
    %2006 = vmatpush.bf16.msra.mxu0 %v1693
    %2007 = vmatpush.bf16.msra.mxu0 %v1685
    %2008 = vmatpush.bf16.msra.mxu0 %v1677
    %2009 = vmatmul.bf16.gmra.mxu0 %v154
    %v2010 = vpop.f32.mrf.mxu0
    %v2011 = vadd.f32 0.0, %v2010
    %v2012 = vpop.f32.mrf.mxu0
    %v2013 = vadd.f32 0.0, %v2012
    %2014 = vmatmul.bf16.gmra.mxu0 %v155
    %v2015 = vpop.f32.mrf.mxu0
    %v2016 = vadd.f32 0.0, %v2015
    %v2017 = vpop.f32.mrf.mxu0
    %v2018 = vadd.f32 0.0, %v2017
    %2019 = vmatmul.bf16.gmra.mxu0 %v156
    %v2020 = vpop.f32.mrf.mxu0
    %v2021 = vadd.f32 0.0, %v2020
    %v2022 = vpop.f32.mrf.mxu0
    %v2023 = vadd.f32 0.0, %v2022
    %2024 = vmatmul.bf16.gmra.mxu0 %v157
    %v2025 = vpop.f32.mrf.mxu0
    %v2026 = vadd.f32 0.0, %v2025
    %v2027 = vpop.f32.mrf.mxu0
    %v2028 = vadd.f32 0.0, %v2027
    %2029 = vdwg.mxu0
    %v2030 = vadd.f32 %v1256, %v1808
    %v2031 = vadd.f32 %v1285, %v1837
    %v2032 = vadd.f32 %v1314, %v1866
    %v2033 = vadd.f32 %v1343, %v1895
    %v2034 = vadd.f32 %v1372, %v1924
    %v2035 = vadd.f32 %v1401, %v1953
    %v2036 = vadd.f32 %v1430, %v1982
    %v2037 = vadd.f32 %v1459, %v2011
    %v2038 = vadd.f32 %v1258, %v1810
    %v2039 = vadd.f32 %v1287, %v1839
    %v2040 = vadd.f32 %v1316, %v1868
    %v2041 = vadd.f32 %v1345, %v1897
    %v2042 = vadd.f32 %v1374, %v1926
    %v2043 = vadd.f32 %v1403, %v1955
    %v2044 = vadd.f32 %v1432, %v1984
    %v2045 = vadd.f32 %v1461, %v2013
    %v2046 = vadd.f32 %v1261, %v1813
    %v2047 = vadd.f32 %v1290, %v1842
    %v2048 = vadd.f32 %v1319, %v1871
    %v2049 = vadd.f32 %v1348, %v1900
    %v2050 = vadd.f32 %v1377, %v1929
    %v2051 = vadd.f32 %v1406, %v1958
    %v2052 = vadd.f32 %v1435, %v1987
    %v2053 = vadd.f32 %v1464, %v2016
    %v2054 = vadd.f32 %v1263, %v1815
    %v2055 = vadd.f32 %v1292, %v1844
    %v2056 = vadd.f32 %v1321, %v1873
    %v2057 = vadd.f32 %v1350, %v1902
    %v2058 = vadd.f32 %v1379, %v1931
    %v2059 = vadd.f32 %v1408, %v1960
    %v2060 = vadd.f32 %v1437, %v1989
    %v2061 = vadd.f32 %v1466, %v2018
    %v2062 = vadd.f32 %v1266, %v1818
    %v2063 = vadd.f32 %v1295, %v1847
    %v2064 = vadd.f32 %v1324, %v1876
    %v2065 = vadd.f32 %v1353, %v1905
    %v2066 = vadd.f32 %v1382, %v1934
    %v2067 = vadd.f32 %v1411, %v1963
    %v2068 = vadd.f32 %v1440, %v1992
    %v2069 = vadd.f32 %v1469, %v2021
    %v2070 = vadd.f32 %v1268, %v1820
    %v2071 = vadd.f32 %v1297, %v1849
    %v2072 = vadd.f32 %v1326, %v1878
    %v2073 = vadd.f32 %v1355, %v1907
    %v2074 = vadd.f32 %v1384, %v1936
    %v2075 = vadd.f32 %v1413, %v1965
    %v2076 = vadd.f32 %v1442, %v1994
    %v2077 = vadd.f32 %v1471, %v2023
    %v2078 = vadd.f32 %v1271, %v1823
    %v2079 = vadd.f32 %v1300, %v1852
    %v2080 = vadd.f32 %v1329, %v1881
    %v2081 = vadd.f32 %v1358, %v1910
    %v2082 = vadd.f32 %v1387, %v1939
    %v2083 = vadd.f32 %v1416, %v1968
    %v2084 = vadd.f32 %v1445, %v1997
    %v2085 = vadd.f32 %v1474, %v2026
    %v2086 = vadd.f32 %v1273, %v1825
    %v2087 = vadd.f32 %v1302, %v1854
    %v2088 = vadd.f32 %v1331, %v1883
    %v2089 = vadd.f32 %v1360, %v1912
    %v2090 = vadd.f32 %v1389, %v1941
    %v2091 = vadd.f32 %v1418, %v1970
    %v2092 = vadd.f32 %v1447, %v1999
    %v2093 = vadd.f32 %v1476, %v2028
    %v2094 = vld [vmem:[#allocation10] sm:$0xff]
    %v2095 = vld [vmem:[#allocation10 + $0x8] sm:$0xff]
    %v2096 = vld [vmem:[#allocation10 + $0x10] sm:$0xff]
    %v2097 = vld [vmem:[#allocation10 + $0x18] sm:$0xff]
    %v2098 = vld [vmem:[#allocation10 + $0x20] sm:$0xff]
    %v2099 = vld [vmem:[#allocation10 + $0x28] sm:$0xff]
    %v2100 = vld [vmem:[#allocation10 + $0x30] sm:$0xff]
    %v2101 = vld [vmem:[#allocation10 + $0x38] sm:$0xff]
    %v2102 = vadd.f32 %v2030, %v2094
    %v2103 = vadd.f32 %v2031, %v2095
    %v2104 = vadd.f32 %v2032, %v2096
    %v2105 = vadd.f32 %v2033, %v2097
    %v2106 = vadd.f32 %v2034, %v2098
    %v2107 = vadd.f32 %v2035, %v2099
    %v2108 = vadd.f32 %v2036, %v2100
    %v2109 = vadd.f32 %v2037, %v2101
    %v2110 = vadd.f32 %v2038, %v2094
    %v2111 = vadd.f32 %v2039, %v2095
    %v2112 = vadd.f32 %v2040, %v2096
    %v2113 = vadd.f32 %v2041, %v2097
    %v2114 = vadd.f32 %v2042, %v2098
    %v2115 = vadd.f32 %v2043, %v2099
    %v2116 = vadd.f32 %v2044, %v2100
    %v2117 = vadd.f32 %v2045, %v2101
    %v2118 = vadd.f32 %v2046, %v2094
    %v2119 = vadd.f32 %v2047, %v2095
    %v2120 = vadd.f32 %v2048, %v2096
    %v2121 = vadd.f32 %v2049, %v2097
    %v2122 = vadd.f32 %v2050, %v2098
    %v2123 = vadd.f32 %v2051, %v2099
    %v2124 = vadd.f32 %v2052, %v2100
    %v2125 = vadd.f32 %v2053, %v2101
    %v2126 = vadd.f32 %v2054, %v2094
    %v2127 = vadd.f32 %v2055, %v2095
    %v2128 = vadd.f32 %v2056, %v2096
    %v2129 = vadd.f32 %v2057, %v2097
    %v2130 = vadd.f32 %v2058, %v2098
    %v2131 = vadd.f32 %v2059, %v2099
    %v2132 = vadd.f32 %v2060, %v2100
    %v2133 = vadd.f32 %v2061, %v2101
    %v2134 = vadd.f32 %v2062, %v2094
    %v2135 = vadd.f32 %v2063, %v2095
    %v2136 = vadd.f32 %v2064, %v2096
    %v2137 = vadd.f32 %v2065, %v2097
    %v2138 = vadd.f32 %v2066, %v2098
    %v2139 = vadd.f32 %v2067, %v2099
    %v2140 = vadd.f32 %v2068, %v2100
    %v2141 = vadd.f32 %v2069, %v2101
    %v2142 = vadd.f32 %v2070, %v2094
    %v2143 = vadd.f32 %v2071, %v2095
    %v2144 = vadd.f32 %v2072, %v2096
    %v2145 = vadd.f32 %v2073, %v2097
    %v2146 = vadd.f32 %v2074, %v2098
    %v2147 = vadd.f32 %v2075, %v2099
    %v2148 = vadd.f32 %v2076, %v2100
    %v2149 = vadd.f32 %v2077, %v2101
    %v2150 = vadd.f32 %v2078, %v2094
    %v2151 = vadd.f32 %v2079, %v2095
    %v2152 = vadd.f32 %v2080, %v2096
    %v2153 = vadd.f32 %v2081, %v2097
    %v2154 = vadd.f32 %v2082, %v2098
    %v2155 = vadd.f32 %v2083, %v2099
    %v2156 = vadd.f32 %v2084, %v2100
    %v2157 = vadd.f32 %v2085, %v2101
    %v2158 = vadd.f32 %v2086, %v2094
    %v2159 = vadd.f32 %v2087, %v2095
    %v2160 = vadd.f32 %v2088, %v2096
    %v2161 = vadd.f32 %v2089, %v2097
    %v2162 = vadd.f32 %v2090, %v2098
    %v2163 = vadd.f32 %v2091, %v2099
    %v2164 = vadd.f32 %v2092, %v2100
    %v2165 = vadd.f32 %v2093, %v2101
    %v2166 = vrot.slane %v2102, 4
    %v2167 = vmax.f32 %v2102, %v2166
    %v2168 = vrot.slane %v2167, 2
    %v2169 = vmax.f32 %v2167, %v2168
    %v2170 = vrot.slane %v2169, 1
    %v2171 = vmax.f32 %v2169, %v2170
    %v2172 = vrot.slane %v2103, 4
    %v2173 = vmax.f32 %v2103, %v2172
    %v2174 = vrot.slane %v2173, 2
    %v2175 = vmax.f32 %v2173, %v2174
    %v2176 = vrot.slane %v2175, 1
    %v2177 = vmax.f32 %v2175, %v2176
    %v2178 = vrot.slane %v2104, 4
    %v2179 = vmax.f32 %v2104, %v2178
    %v2180 = vrot.slane %v2179, 2
    %v2181 = vmax.f32 %v2179, %v2180
    %v2182 = vrot.slane %v2181, 1
    %v2183 = vmax.f32 %v2181, %v2182
    %v2184 = vrot.slane %v2105, 4
    %v2185 = vmax.f32 %v2105, %v2184
    %v2186 = vrot.slane %v2185, 2
    %v2187 = vmax.f32 %v2185, %v2186
    %v2188 = vrot.slane %v2187, 1
    %v2189 = vmax.f32 %v2187, %v2188
    %v2190 = vrot.slane %v2106, 4
    %v2191 = vmax.f32 %v2106, %v2190
    %v2192 = vrot.slane %v2191, 2
    %v2193 = vmax.f32 %v2191, %v2192
    %v2194 = vrot.slane %v2193, 1
    %v2195 = vmax.f32 %v2193, %v2194
    %v2196 = vrot.slane %v2107, 4
    %v2197 = vmax.f32 %v2107, %v2196
    %v2198 = vrot.slane %v2197, 2
    %v2199 = vmax.f32 %v2197, %v2198
    %v2200 = vrot.slane %v2199, 1
    %v2201 = vmax.f32 %v2199, %v2200
    %v2202 = vrot.slane %v2108, 4
    %v2203 = vmax.f32 %v2108, %v2202
    %v2204 = vrot.slane %v2203, 2
    %v2205 = vmax.f32 %v2203, %v2204
    %v2206 = vrot.slane %v2205, 1
    %v2207 = vmax.f32 %v2205, %v2206
    %v2208 = vrot.slane %v2109, 4
    %v2209 = vmax.f32 %v2109, %v2208
    %v2210 = vrot.slane %v2209, 2
    %v2211 = vmax.f32 %v2209, %v2210
    %v2212 = vrot.slane %v2211, 1
    %v2213 = vmax.f32 %v2211, %v2212
    %v2214 = vrot.slane %v2110, 4
    %v2215 = vmax.f32 %v2110, %v2214
    %v2216 = vrot.slane %v2215, 2
    %v2217 = vmax.f32 %v2215, %v2216
    %v2218 = vrot.slane %v2217, 1
    %v2219 = vmax.f32 %v2217, %v2218
    %v2220 = vrot.slane %v2111, 4
    %v2221 = vmax.f32 %v2111, %v2220
    %v2222 = vrot.slane %v2221, 2
    %v2223 = vmax.f32 %v2221, %v2222
    %v2224 = vrot.slane %v2223, 1
    %v2225 = vmax.f32 %v2223, %v2224
    %v2226 = vrot.slane %v2112, 4
    %v2227 = vmax.f32 %v2112, %v2226
    %v2228 = vrot.slane %v2227, 2
    %v2229 = vmax.f32 %v2227, %v2228
    %v2230 = vrot.slane %v2229, 1
    %v2231 = vmax.f32 %v2229, %v2230
    %v2232 = vrot.slane %v2113, 4
    %v2233 = vmax.f32 %v2113, %v2232
    %v2234 = vrot.slane %v2233, 2
    %v2235 = vmax.f32 %v2233, %v2234
    %v2236 = vrot.slane %v2235, 1
    %v2237 = vmax.f32 %v2235, %v2236
    %v2238 = vrot.slane %v2114, 4
    %v2239 = vmax.f32 %v2114, %v2238
    %v2240 = vrot.slane %v2239, 2
    %v2241 = vmax.f32 %v2239, %v2240
    %v2242 = vrot.slane %v2241, 1
    %v2243 = vmax.f32 %v2241, %v2242
    %v2244 = vrot.slane %v2115, 4
    %v2245 = vmax.f32 %v2115, %v2244
    %v2246 = vrot.slane %v2245, 2
    %v2247 = vmax.f32 %v2245, %v2246
    %v2248 = vrot.slane %v2247, 1
    %v2249 = vmax.f32 %v2247, %v2248
    %v2250 = vrot.slane %v2116, 4
    %v2251 = vmax.f32 %v2116, %v2250
    %v2252 = vrot.slane %v2251, 2
    %v2253 = vmax.f32 %v2251, %v2252
    %v2254 = vrot.slane %v2253, 1
    %v2255 = vmax.f32 %v2253, %v2254
    %v2256 = vrot.slane %v2117, 4
    %v2257 = vmax.f32 %v2117, %v2256
    %v2258 = vrot.slane %v2257, 2
    %v2259 = vmax.f32 %v2257, %v2258
    %v2260 = vrot.slane %v2259, 1
    %v2261 = vmax.f32 %v2259, %v2260
    %v2262 = vrot.slane %v2118, 4
    %v2263 = vmax.f32 %v2118, %v2262
    %v2264 = vrot.slane %v2263, 2
    %v2265 = vmax.f32 %v2263, %v2264
    %v2266 = vrot.slane %v2265, 1
    %v2267 = vmax.f32 %v2265, %v2266
    %v2268 = vrot.slane %v2119, 4
    %v2269 = vmax.f32 %v2119, %v2268
    %v2270 = vrot.slane %v2269, 2
    %v2271 = vmax.f32 %v2269, %v2270
    %v2272 = vrot.slane %v2271, 1
    %v2273 = vmax.f32 %v2271, %v2272
    %v2274 = vrot.slane %v2120, 4
    %v2275 = vmax.f32 %v2120, %v2274
    %v2276 = vrot.slane %v2275, 2
    %v2277 = vmax.f32 %v2275, %v2276
    %v2278 = vrot.slane %v2277, 1
    %v2279 = vmax.f32 %v2277, %v2278
    %v2280 = vrot.slane %v2121, 4
    %v2281 = vmax.f32 %v2121, %v2280
    %v2282 = vrot.slane %v2281, 2
    %v2283 = vmax.f32 %v2281, %v2282
    %v2284 = vrot.slane %v2283, 1
    %v2285 = vmax.f32 %v2283, %v2284
    %v2286 = vrot.slane %v2122, 4
    %v2287 = vmax.f32 %v2122, %v2286
    %v2288 = vrot.slane %v2287, 2
    %v2289 = vmax.f32 %v2287, %v2288
    %v2290 = vrot.slane %v2289, 1
    %v2291 = vmax.f32 %v2289, %v2290
    %v2292 = vrot.slane %v2123, 4
    %v2293 = vmax.f32 %v2123, %v2292
    %v2294 = vrot.slane %v2293, 2
    %v2295 = vmax.f32 %v2293, %v2294
    %v2296 = vrot.slane %v2295, 1
    %v2297 = vmax.f32 %v2295, %v2296
    %v2298 = vrot.slane %v2124, 4
    %v2299 = vmax.f32 %v2124, %v2298
    %v2300 = vrot.slane %v2299, 2
    %v2301 = vmax.f32 %v2299, %v2300
    %v2302 = vrot.slane %v2301, 1
    %v2303 = vmax.f32 %v2301, %v2302
    %v2304 = vrot.slane %v2125, 4
    %v2305 = vmax.f32 %v2125, %v2304
    %v2306 = vrot.slane %v2305, 2
    %v2307 = vmax.f32 %v2305, %v2306
    %v2308 = vrot.slane %v2307, 1
    %v2309 = vmax.f32 %v2307, %v2308
    %v2310 = vrot.slane %v2126, 4
    %v2311 = vmax.f32 %v2126, %v2310
    %v2312 = vrot.slane %v2311, 2
    %v2313 = vmax.f32 %v2311, %v2312
    %v2314 = vrot.slane %v2313, 1
    %v2315 = vmax.f32 %v2313, %v2314
    %v2316 = vrot.slane %v2127, 4
    %v2317 = vmax.f32 %v2127, %v2316
    %v2318 = vrot.slane %v2317, 2
    %v2319 = vmax.f32 %v2317, %v2318
    %v2320 = vrot.slane %v2319, 1
    %v2321 = vmax.f32 %v2319, %v2320
    %v2322 = vrot.slane %v2128, 4
    %v2323 = vmax.f32 %v2128, %v2322
    %v2324 = vrot.slane %v2323, 2
    %v2325 = vmax.f32 %v2323, %v2324
    %v2326 = vrot.slane %v2325, 1
    %v2327 = vmax.f32 %v2325, %v2326
    %v2328 = vrot.slane %v2129, 4
    %v2329 = vmax.f32 %v2129, %v2328
    %v2330 = vrot.slane %v2329, 2
    %v2331 = vmax.f32 %v2329, %v2330
    %v2332 = vrot.slane %v2331, 1
    %v2333 = vmax.f32 %v2331, %v2332
    %v2334 = vrot.slane %v2130, 4
    %v2335 = vmax.f32 %v2130, %v2334
    %v2336 = vrot.slane %v2335, 2
    %v2337 = vmax.f32 %v2335, %v2336
    %v2338 = vrot.slane %v2337, 1
    %v2339 = vmax.f32 %v2337, %v2338
    %v2340 = vrot.slane %v2131, 4
    %v2341 = vmax.f32 %v2131, %v2340
    %v2342 = vrot.slane %v2341, 2
    %v2343 = vmax.f32 %v2341, %v2342
    %v2344 = vrot.slane %v2343, 1
    %v2345 = vmax.f32 %v2343, %v2344
    %v2346 = vrot.slane %v2132, 4
    %v2347 = vmax.f32 %v2132, %v2346
    %v2348 = vrot.slane %v2347, 2
    %v2349 = vmax.f32 %v2347, %v2348
    %v2350 = vrot.slane %v2349, 1
    %v2351 = vmax.f32 %v2349, %v2350
    %v2352 = vrot.slane %v2133, 4
    %v2353 = vmax.f32 %v2133, %v2352
    %v2354 = vrot.slane %v2353, 2
    %v2355 = vmax.f32 %v2353, %v2354
    %v2356 = vrot.slane %v2355, 1
    %v2357 = vmax.f32 %v2355, %v2356
    %v2358 = vrot.slane %v2134, 4
    %v2359 = vmax.f32 %v2134, %v2358
    %v2360 = vrot.slane %v2359, 2
    %v2361 = vmax.f32 %v2359, %v2360
    %v2362 = vrot.slane %v2361, 1
    %v2363 = vmax.f32 %v2361, %v2362
    %v2364 = vrot.slane %v2135, 4
    %v2365 = vmax.f32 %v2135, %v2364
    %v2366 = vrot.slane %v2365, 2
    %v2367 = vmax.f32 %v2365, %v2366
    %v2368 = vrot.slane %v2367, 1
    %v2369 = vmax.f32 %v2367, %v2368
    %v2370 = vrot.slane %v2136, 4
    %v2371 = vmax.f32 %v2136, %v2370
    %v2372 = vrot.slane %v2371, 2
    %v2373 = vmax.f32 %v2371, %v2372
    %v2374 = vrot.slane %v2373, 1
    %v2375 = vmax.f32 %v2373, %v2374
    %v2376 = vrot.slane %v2137, 4
    %v2377 = vmax.f32 %v2137, %v2376
    %v2378 = vrot.slane %v2377, 2
    %v2379 = vmax.f32 %v2377, %v2378
    %v2380 = vrot.slane %v2379, 1
    %v2381 = vmax.f32 %v2379, %v2380
    %v2382 = vrot.slane %v2138, 4
    %v2383 = vmax.f32 %v2138, %v2382
    %v2384 = vrot.slane %v2383, 2
    %v2385 = vmax.f32 %v2383, %v2384
    %v2386 = vrot.slane %v2385, 1
    %v2387 = vmax.f32 %v2385, %v2386
    %v2388 = vrot.slane %v2139, 4
    %v2389 = vmax.f32 %v2139, %v2388
    %v2390 = vrot.slane %v2389, 2
    %v2391 = vmax.f32 %v2389, %v2390
    %v2392 = vrot.slane %v2391, 1
    %v2393 = vmax.f32 %v2391, %v2392
    %v2394 = vrot.slane %v2140, 4
    %v2395 = vmax.f32 %v2140, %v2394
    %v2396 = vrot.slane %v2395, 2
    %v2397 = vmax.f32 %v2395, %v2396
    %v2398 = vrot.slane %v2397, 1
    %v2399 = vmax.f32 %v2397, %v2398
    %v2400 = vrot.slane %v2141, 4
    %v2401 = vmax.f32 %v2141, %v2400
    %v2402 = vrot.slane %v2401, 2
    %v2403 = vmax.f32 %v2401, %v2402
    %v2404 = vrot.slane %v2403, 1
    %v2405 = vmax.f32 %v2403, %v2404
    %v2406 = vrot.slane %v2142, 4
    %v2407 = vmax.f32 %v2142, %v2406
    %v2408 = vrot.slane %v2407, 2
    %v2409 = vmax.f32 %v2407, %v2408
    %v2410 = vrot.slane %v2409, 1
    %v2411 = vmax.f32 %v2409, %v2410
    %v2412 = vrot.slane %v2143, 4
    %v2413 = vmax.f32 %v2143, %v2412
    %v2414 = vrot.slane %v2413, 2
    %v2415 = vmax.f32 %v2413, %v2414
    %v2416 = vrot.slane %v2415, 1
    %v2417 = vmax.f32 %v2415, %v2416
    %v2418 = vrot.slane %v2144, 4
    %v2419 = vmax.f32 %v2144, %v2418
    %v2420 = vrot.slane %v2419, 2
    %v2421 = vmax.f32 %v2419, %v2420
    %v2422 = vrot.slane %v2421, 1
    %v2423 = vmax.f32 %v2421, %v2422
    %v2424 = vrot.slane %v2145, 4
    %v2425 = vmax.f32 %v2145, %v2424
    %v2426 = vrot.slane %v2425, 2
    %v2427 = vmax.f32 %v2425, %v2426
    %v2428 = vrot.slane %v2427, 1
    %v2429 = vmax.f32 %v2427, %v2428
    %v2430 = vrot.slane %v2146, 4
    %v2431 = vmax.f32 %v2146, %v2430
    %v2432 = vrot.slane %v2431, 2
    %v2433 = vmax.f32 %v2431, %v2432
    %v2434 = vrot.slane %v2433, 1
    %v2435 = vmax.f32 %v2433, %v2434
    %v2436 = vrot.slane %v2147, 4
    %v2437 = vmax.f32 %v2147, %v2436
    %v2438 = vrot.slane %v2437, 2
    %v2439 = vmax.f32 %v2437, %v2438
    %v2440 = vrot.slane %v2439, 1
    %v2441 = vmax.f32 %v2439, %v2440
    %v2442 = vrot.slane %v2148, 4
    %v2443 = vmax.f32 %v2148, %v2442
    %v2444 = vrot.slane %v2443, 2
    %v2445 = vmax.f32 %v2443, %v2444
    %v2446 = vrot.slane %v2445, 1
    %v2447 = vmax.f32 %v2445, %v2446
    %v2448 = vrot.slane %v2149, 4
    %v2449 = vmax.f32 %v2149, %v2448
    %v2450 = vrot.slane %v2449, 2
    %v2451 = vmax.f32 %v2449, %v2450
    %v2452 = vrot.slane %v2451, 1
    %v2453 = vmax.f32 %v2451, %v2452
    %v2454 = vrot.slane %v2150, 4
    %v2455 = vmax.f32 %v2150, %v2454
    %v2456 = vrot.slane %v2455, 2
    %v2457 = vmax.f32 %v2455, %v2456
    %v2458 = vrot.slane %v2457, 1
    %v2459 = vmax.f32 %v2457, %v2458
    %v2460 = vrot.slane %v2151, 4
    %v2461 = vmax.f32 %v2151, %v2460
    %v2462 = vrot.slane %v2461, 2
    %v2463 = vmax.f32 %v2461, %v2462
    %v2464 = vrot.slane %v2463, 1
    %v2465 = vmax.f32 %v2463, %v2464
    %v2466 = vrot.slane %v2152, 4
    %v2467 = vmax.f32 %v2152, %v2466
    %v2468 = vrot.slane %v2467, 2
    %v2469 = vmax.f32 %v2467, %v2468
    %v2470 = vrot.slane %v2469, 1
    %v2471 = vmax.f32 %v2469, %v2470
    %v2472 = vrot.slane %v2153, 4
    %v2473 = vmax.f32 %v2153, %v2472
    %v2474 = vrot.slane %v2473, 2
    %v2475 = vmax.f32 %v2473, %v2474
    %v2476 = vrot.slane %v2475, 1
    %v2477 = vmax.f32 %v2475, %v2476
    %v2478 = vrot.slane %v2154, 4
    %v2479 = vmax.f32 %v2154, %v2478
    %v2480 = vrot.slane %v2479, 2
    %v2481 = vmax.f32 %v2479, %v2480
    %v2482 = vrot.slane %v2481, 1
    %v2483 = vmax.f32 %v2481, %v2482
    %v2484 = vrot.slane %v2155, 4
    %v2485 = vmax.f32 %v2155, %v2484
    %v2486 = vrot.slane %v2485, 2
    %v2487 = vmax.f32 %v2485, %v2486
    %v2488 = vrot.slane %v2487, 1
    %v2489 = vmax.f32 %v2487, %v2488
    %v2490 = vrot.slane %v2156, 4
    %v2491 = vmax.f32 %v2156, %v2490
    %v2492 = vrot.slane %v2491, 2
    %v2493 = vmax.f32 %v2491, %v2492
    %v2494 = vrot.slane %v2493, 1
    %v2495 = vmax.f32 %v2493, %v2494
    %v2496 = vrot.slane %v2157, 4
    %v2497 = vmax.f32 %v2157, %v2496
    %v2498 = vrot.slane %v2497, 2
    %v2499 = vmax.f32 %v2497, %v2498
    %v2500 = vrot.slane %v2499, 1
    %v2501 = vmax.f32 %v2499, %v2500
    %v2502 = vrot.slane %v2158, 4
    %v2503 = vmax.f32 %v2158, %v2502
    %v2504 = vrot.slane %v2503, 2
    %v2505 = vmax.f32 %v2503, %v2504
    %v2506 = vrot.slane %v2505, 1
    %v2507 = vmax.f32 %v2505, %v2506
    %v2508 = vrot.slane %v2159, 4
    %v2509 = vmax.f32 %v2159, %v2508
    %v2510 = vrot.slane %v2509, 2
    %v2511 = vmax.f32 %v2509, %v2510
    %v2512 = vrot.slane %v2511, 1
    %v2513 = vmax.f32 %v2511, %v2512
    %v2514 = vrot.slane %v2160, 4
    %v2515 = vmax.f32 %v2160, %v2514
    %v2516 = vrot.slane %v2515, 2
    %v2517 = vmax.f32 %v2515, %v2516
    %v2518 = vrot.slane %v2517, 1
    %v2519 = vmax.f32 %v2517, %v2518
    %v2520 = vrot.slane %v2161, 4
    %v2521 = vmax.f32 %v2161, %v2520
    %v2522 = vrot.slane %v2521, 2
    %v2523 = vmax.f32 %v2521, %v2522
    %v2524 = vrot.slane %v2523, 1
    %v2525 = vmax.f32 %v2523, %v2524
    %v2526 = vrot.slane %v2162, 4
    %v2527 = vmax.f32 %v2162, %v2526
    %v2528 = vrot.slane %v2527, 2
    %v2529 = vmax.f32 %v2527, %v2528
    %v2530 = vrot.slane %v2529, 1
    %v2531 = vmax.f32 %v2529, %v2530
    %v2532 = vrot.slane %v2163, 4
    %v2533 = vmax.f32 %v2163, %v2532
    %v2534 = vrot.slane %v2533, 2
    %v2535 = vmax.f32 %v2533, %v2534
    %v2536 = vrot.slane %v2535, 1
    %v2537 = vmax.f32 %v2535, %v2536
    %v2538 = vrot.slane %v2164, 4
    %v2539 = vmax.f32 %v2164, %v2538
    %v2540 = vrot.slane %v2539, 2
    %v2541 = vmax.f32 %v2539, %v2540
    %v2542 = vrot.slane %v2541, 1
    %v2543 = vmax.f32 %v2541, %v2542
    %v2544 = vrot.slane %v2165, 4
    %v2545 = vmax.f32 %v2165, %v2544
    %v2546 = vrot.slane %v2545, 2
    %v2547 = vmax.f32 %v2545, %v2546
    %v2548 = vrot.slane %v2547, 1
    %v2549 = vmax.f32 %v2547, %v2548
    %v2550 = vld [vmem:[#allocation7] sm:$0xff]
    %v2552 = vperm.slane %v2550, 0
    %v2553 = vperm.slane %v2550, 1
    %v2554 = vperm.slane %v2550, 2
    %v2555 = vperm.slane %v2550, 3
    %v2556 = vperm.slane %v2550, 4
    %v2557 = vperm.slane %v2550, 5
    %v2558 = vperm.slane %v2550, 6
    %v2559 = vperm.slane %v2550, 7
    %v2568 = vadd.f32 %v2171, %v2552
    %v2569 = vadd.f32 %v2177, %v2553
    %v2570 = vadd.f32 %v2183, %v2554
    %v2571 = vadd.f32 %v2189, %v2555
    %v2572 = vadd.f32 %v2195, %v2556
    %v2573 = vadd.f32 %v2201, %v2557
    %v2574 = vadd.f32 %v2207, %v2558
    %v2575 = vadd.f32 %v2213, %v2559
    %v2576 = vadd.f32 %v2219, %v2552
    %v2577 = vadd.f32 %v2225, %v2553
    %v2578 = vadd.f32 %v2231, %v2554
    %v2579 = vadd.f32 %v2237, %v2555
    %v2580 = vadd.f32 %v2243, %v2556
    %v2581 = vadd.f32 %v2249, %v2557
    %v2582 = vadd.f32 %v2255, %v2558
    %v2583 = vadd.f32 %v2261, %v2559
    %v2584 = vadd.f32 %v2267, %v2552
    %v2585 = vadd.f32 %v2273, %v2553
    %v2586 = vadd.f32 %v2279, %v2554
    %v2587 = vadd.f32 %v2285, %v2555
    %v2588 = vadd.f32 %v2291, %v2556
    %v2589 = vadd.f32 %v2297, %v2557
    %v2590 = vadd.f32 %v2303, %v2558
    %v2591 = vadd.f32 %v2309, %v2559
    %v2592 = vadd.f32 %v2315, %v2552
    %v2593 = vadd.f32 %v2321, %v2553
    %v2594 = vadd.f32 %v2327, %v2554
    %v2595 = vadd.f32 %v2333, %v2555
    %v2596 = vadd.f32 %v2339, %v2556
    %v2597 = vadd.f32 %v2345, %v2557
    %v2598 = vadd.f32 %v2351, %v2558
    %v2599 = vadd.f32 %v2357, %v2559
    %v2600 = vadd.f32 %v2363, %v2552
    %v2601 = vadd.f32 %v2369, %v2553
    %v2602 = vadd.f32 %v2375, %v2554
    %v2603 = vadd.f32 %v2381, %v2555
    %v2604 = vadd.f32 %v2387, %v2556
    %v2605 = vadd.f32 %v2393, %v2557
    %v2606 = vadd.f32 %v2399, %v2558
    %v2607 = vadd.f32 %v2405, %v2559
    %v2608 = vadd.f32 %v2411, %v2552
    %v2609 = vadd.f32 %v2417, %v2553
    %v2610 = vadd.f32 %v2423, %v2554
    %v2611 = vadd.f32 %v2429, %v2555
    %v2612 = vadd.f32 %v2435, %v2556
    %v2613 = vadd.f32 %v2441, %v2557
    %v2614 = vadd.f32 %v2447, %v2558
    %v2615 = vadd.f32 %v2453, %v2559
    %v2616 = vadd.f32 %v2459, %v2552
    %v2617 = vadd.f32 %v2465, %v2553
    %v2618 = vadd.f32 %v2471, %v2554
    %v2619 = vadd.f32 %v2477, %v2555
    %v2620 = vadd.f32 %v2483, %v2556
    %v2621 = vadd.f32 %v2489, %v2557
    %v2622 = vadd.f32 %v2495, %v2558
    %v2623 = vadd.f32 %v2501, %v2559
    %v2624 = vadd.f32 %v2507, %v2552
    %v2625 = vadd.f32 %v2513, %v2553
    %v2626 = vadd.f32 %v2519, %v2554
    %v2627 = vadd.f32 %v2525, %v2555
    %v2628 = vadd.f32 %v2531, %v2556
    %v2629 = vadd.f32 %v2537, %v2557
    %v2630 = vadd.f32 %v2543, %v2558
    %v2631 = vadd.f32 %v2549, %v2559
    %v2632 = vmax.f32 %v2568, 0.0
    %v2633 = vmax.f32 %v2569, 0.0
    %v2634 = vmax.f32 %v2570, 0.0
    %v2635 = vmax.f32 %v2571, 0.0
    %v2636 = vmax.f32 %v2572, 0.0
    %v2637 = vmax.f32 %v2573, 0.0
    %v2638 = vmax.f32 %v2574, 0.0
    %v2639 = vmax.f32 %v2575, 0.0
    %v2640 = vmax.f32 %v2576, 0.0
    %v2641 = vmax.f32 %v2577, 0.0
    %v2642 = vmax.f32 %v2578, 0.0
    %v2643 = vmax.f32 %v2579, 0.0
    %v2644 = vmax.f32 %v2580, 0.0
    %v2645 = vmax.f32 %v2581, 0.0
    %v2646 = vmax.f32 %v2582, 0.0
    %v2647 = vmax.f32 %v2583, 0.0
    %v2648 = vmax.f32 %v2584, 0.0
    %v2649 = vmax.f32 %v2585, 0.0
    %v2650 = vmax.f32 %v2586, 0.0
    %v2651 = vmax.f32 %v2587, 0.0
    %v2652 = vmax.f32 %v2588, 0.0
    %v2653 = vmax.f32 %v2589, 0.0
    %v2654 = vmax.f32 %v2590, 0.0
    %v2655 = vmax.f32 %v2591, 0.0
    %v2656 = vmax.f32 %v2592, 0.0
    %v2657 = vmax.f32 %v2593, 0.0
    %v2658 = vmax.f32 %v2594, 0.0
    %v2659 = vmax.f32 %v2595, 0.0
    %v2660 = vmax.f32 %v2596, 0.0
    %v2661 = vmax.f32 %v2597, 0.0
    %v2662 = vmax.f32 %v2598, 0.0
    %v2663 = vmax.f32 %v2599, 0.0
    %v2664 = vmax.f32 %v2600, 0.0
    %v2665 = vmax.f32 %v2601, 0.0
    %v2666 = vmax.f32 %v2602, 0.0
    %v2667 = vmax.f32 %v2603, 0.0
    %v2668 = vmax.f32 %v2604, 0.0
    %v2669 = vmax.f32 %v2605, 0.0
    %v2670 = vmax.f32 %v2606, 0.0
    %v2671 = vmax.f32 %v2607, 0.0
    %v2672 = vmax.f32 %v2608, 0.0
    %v2673 = vmax.f32 %v2609, 0.0
    %v2674 = vmax.f32 %v2610, 0.0
    %v2675 = vmax.f32 %v2611, 0.0
    %v2676 = vmax.f32 %v2612, 0.0
    %v2677 = vmax.f32 %v2613, 0.0
    %v2678 = vmax.f32 %v2614, 0.0
    %v2679 = vmax.f32 %v2615, 0.0
    %v2680 = vmax.f32 %v2616, 0.0
    %v2681 = vmax.f32 %v2617, 0.0
    %v2682 = vmax.f32 %v2618, 0.0
    %v2683 = vmax.f32 %v2619, 0.0
    %v2684 = vmax.f32 %v2620, 0.0
    %v2685 = vmax.f32 %v2621, 0.0
    %v2686 = vmax.f32 %v2622, 0.0
    %v2687 = vmax.f32 %v2623, 0.0
    %v2688 = vmax.f32 %v2624, 0.0
    %v2689 = vmax.f32 %v2625, 0.0
    %v2690 = vmax.f32 %v2626, 0.0
    %v2691 = vmax.f32 %v2627, 0.0
    %v2692 = vmax.f32 %v2628, 0.0
    %v2693 = vmax.f32 %v2629, 0.0
    %v2694 = vmax.f32 %v2630, 0.0
    %v2695 = vmax.f32 %v2631, 0.0
    %v2696 = vpack.c.bf16 %v2632, %v2632
    %v2697 = vpack.c.bf16 %v2633, %v2633
    %v2698 = vpack.c.bf16 %v2634, %v2634
    %v2699 = vpack.c.bf16 %v2635, %v2635
    %v2700 = vpack.c.bf16 %v2636, %v2636
    %v2701 = vpack.c.bf16 %v2637, %v2637
    %v2702 = vpack.c.bf16 %v2638, %v2638
    %v2703 = vpack.c.bf16 %v2639, %v2639
    %v2704 = vpack.c.bf16 %v2640, %v2640
    %v2705 = vpack.c.bf16 %v2641, %v2641
    %v2706 = vpack.c.bf16 %v2642, %v2642
    %v2707 = vpack.c.bf16 %v2643, %v2643
    %v2708 = vpack.c.bf16 %v2644, %v2644
    %v2709 = vpack.c.bf16 %v2645, %v2645
    %v2710 = vpack.c.bf16 %v2646, %v2646
    %v2711 = vpack.c.bf16 %v2647, %v2647
    %v2712 = vpack.c.bf16 %v2648, %v2648
    %v2713 = vpack.c.bf16 %v2649, %v2649
    %v2714 = vpack.c.bf16 %v2650, %v2650
    %v2715 = vpack.c.bf16 %v2651, %v2651
    %v2716 = vpack.c.bf16 %v2652, %v2652
    %v2717 = vpack.c.bf16 %v2653, %v2653
    %v2718 = vpack.c.bf16 %v2654, %v2654
    %v2719 = vpack.c.bf16 %v2655, %v2655
    %v2720 = vpack.c.bf16 %v2656, %v2656
    %v2721 = vpack.c.bf16 %v2657, %v2657
    %v2722 = vpack.c.bf16 %v2658, %v2658
    %v2723 = vpack.c.bf16 %v2659, %v2659
    %v2724 = vpack.c.bf16 %v2660, %v2660
    %v2725 = vpack.c.bf16 %v2661, %v2661
    %v2726 = vpack.c.bf16 %v2662, %v2662
    %v2727 = vpack.c.bf16 %v2663, %v2663
    %v2728 = vpack.c.bf16 %v2664, %v2664
    %v2729 = vpack.c.bf16 %v2665, %v2665
    %v2730 = vpack.c.bf16 %v2666, %v2666
    %v2731 = vpack.c.bf16 %v2667, %v2667
    %v2732 = vpack.c.bf16 %v2668, %v2668
    %v2733 = vpack.c.bf16 %v2669, %v2669
    %v2734 = vpack.c.bf16 %v2670, %v2670
    %v2735 = vpack.c.bf16 %v2671, %v2671
    %v2736 = vpack.c.bf16 %v2672, %v2672
    %v2737 = vpack.c.bf16 %v2673, %v2673
    %v2738 = vpack.c.bf16 %v2674, %v2674
    %v2739 = vpack.c.bf16 %v2675, %v2675
    %v2740 = vpack.c.bf16 %v2676, %v2676
    %v2741 = vpack.c.bf16 %v2677, %v2677
    %v2742 = vpack.c.bf16 %v2678, %v2678
    %v2743 = vpack.c.bf16 %v2679, %v2679
    %v2744 = vpack.c.bf16 %v2680, %v2680
    %v2745 = vpack.c.bf16 %v2681, %v2681
    %v2746 = vpack.c.bf16 %v2682, %v2682
    %v2747 = vpack.c.bf16 %v2683, %v2683
    %v2748 = vpack.c.bf16 %v2684, %v2684
    %v2749 = vpack.c.bf16 %v2685, %v2685
    %v2750 = vpack.c.bf16 %v2686, %v2686
    %v2751 = vpack.c.bf16 %v2687, %v2687
    %v2752 = vpack.c.bf16 %v2688, %v2688
    %v2753 = vpack.c.bf16 %v2689, %v2689
    %v2754 = vpack.c.bf16 %v2690, %v2690
    %v2755 = vpack.c.bf16 %v2691, %v2691
    %v2756 = vpack.c.bf16 %v2692, %v2692
    %v2757 = vpack.c.bf16 %v2693, %v2693
    %v2758 = vpack.c.bf16 %v2694, %v2694
    %v2759 = vpack.c.bf16 %v2695, %v2695
    %v2760 = vld [vmem:[#allocation8] sm:$0xf]
    %v2761 = vld [vmem:[#allocation8 + $0x4] sm:$0xf]
    %v2762 = vld [vmem:[#allocation8 + $0x8] sm:$0xf]
    %v2763 = vld [vmem:[#allocation8 + $0xc] sm:$0xf]
    %v2764 = vld [vmem:[#allocation8 + $0x10] sm:$0xf]
    %v2765 = vld [vmem:[#allocation8 + $0x14] sm:$0xf]
    %v2766 = vld [vmem:[#allocation8 + $0x18] sm:$0xf]
    %v2767 = vld [vmem:[#allocation8 + $0x1c] sm:$0xf]
    %v2768 = vld [vmem:[#allocation8 + $0x20] sm:$0xf]
    %v2769 = vld [vmem:[#allocation8 + $0x24] sm:$0xf]
    %v2770 = vld [vmem:[#allocation8 + $0x28] sm:$0xf]
    %v2771 = vld [vmem:[#allocation8 + $0x2c] sm:$0xf]
    %v2772 = vld [vmem:[#allocation8 + $0x30] sm:$0xf]
    %v2773 = vld [vmem:[#allocation8 + $0x34] sm:$0xf]
    %v2774 = vld [vmem:[#allocation8 + $0x38] sm:$0xf]
    %v2775 = vld [vmem:[#allocation8 + $0x3c] sm:$0xf]
    %v2776 = vld [vmem:[#allocation8 + $0x40] sm:$0xf]
    %v2777 = vld [vmem:[#allocation8 + $0x44] sm:$0xf]
    %v2778 = vld [vmem:[#allocation8 + $0x48] sm:$0xf]
    %v2779 = vld [vmem:[#allocation8 + $0x4c] sm:$0xf]
    %v2780 = vld [vmem:[#allocation8 + $0x50] sm:$0xf]
    %v2781 = vld [vmem:[#allocation8 + $0x54] sm:$0xf]
    %v2782 = vld [vmem:[#allocation8 + $0x58] sm:$0xf]
    %v2783 = vld [vmem:[#allocation8 + $0x5c] sm:$0xf]
    %v2784 = vld [vmem:[#allocation8 + $0x60] sm:$0xf]
    %v2785 = vld [vmem:[#allocation8 + $0x64] sm:$0xf]
    %v2786 = vld [vmem:[#allocation8 + $0x68] sm:$0xf]
    %v2787 = vld [vmem:[#allocation8 + $0x6c] sm:$0xf]
    %v2788 = vld [vmem:[#allocation8 + $0x70] sm:$0xf]
    %v2789 = vld [vmem:[#allocation8 + $0x74] sm:$0xf]
    %v2790 = vld [vmem:[#allocation8 + $0x78] sm:$0xf]
    %v2791 = vld [vmem:[#allocation8 + $0x7c] sm:$0xf]
    %v2792 = vld [vmem:[#allocation8 + $0x80] sm:$0xf]
    %v2793 = vld [vmem:[#allocation8 + $0x84] sm:$0xf]
    %v2794 = vld [vmem:[#allocation8 + $0x88] sm:$0xf]
    %v2795 = vld [vmem:[#allocation8 + $0x8c] sm:$0xf]
    %v2796 = vld [vmem:[#allocation8 + $0x90] sm:$0xf]
    %v2797 = vld [vmem:[#allocation8 + $0x94] sm:$0xf]
    %v2798 = vld [vmem:[#allocation8 + $0x98] sm:$0xf]
    %v2799 = vld [vmem:[#allocation8 + $0x9c] sm:$0xf]
    %v2800 = vld [vmem:[#allocation8 + $0xa0] sm:$0xf]
    %v2801 = vld [vmem:[#allocation8 + $0xa4] sm:$0xf]
    %v2802 = vld [vmem:[#allocation8 + $0xa8] sm:$0xf]
    %v2803 = vld [vmem:[#allocation8 + $0xac] sm:$0xf]
    %v2804 = vld [vmem:[#allocation8 + $0xb0] sm:$0xf]
    %v2805 = vld [vmem:[#allocation8 + $0xb4] sm:$0xf]
    %v2806 = vld [vmem:[#allocation8 + $0xb8] sm:$0xf]
    %v2807 = vld [vmem:[#allocation8 + $0xbc] sm:$0xf]
    %v2808 = vld [vmem:[#allocation8 + $0xc0] sm:$0xf]
    %v2809 = vld [vmem:[#allocation8 + $0xc4] sm:$0xf]
    %v2810 = vld [vmem:[#allocation8 + $0xc8] sm:$0xf]
    %v2811 = vld [vmem:[#allocation8 + $0xcc] sm:$0xf]
    %v2812 = vld [vmem:[#allocation8 + $0xd0] sm:$0xf]
    %v2813 = vld [vmem:[#allocation8 + $0xd4] sm:$0xf]
    %v2814 = vld [vmem:[#allocation8 + $0xd8] sm:$0xf]
    %v2815 = vld [vmem:[#allocation8 + $0xdc] sm:$0xf]
    %v2816 = vld [vmem:[#allocation8 + $0xe0] sm:$0xf]
    %v2817 = vld [vmem:[#allocation8 + $0xe4] sm:$0xf]
    %v2818 = vld [vmem:[#allocation8 + $0xe8] sm:$0xf]
    %v2819 = vld [vmem:[#allocation8 + $0xec] sm:$0xf]
    %v2820 = vld [vmem:[#allocation8 + $0xf0] sm:$0xf]
    %v2821 = vld [vmem:[#allocation8 + $0xf4] sm:$0xf]
    %v2822 = vld [vmem:[#allocation8 + $0xf8] sm:$0xf]
    %v2823 = vld [vmem:[#allocation8 + $0xfc] sm:$0xf]
    %v2824 = vld [vmem:[#allocation8 + $0x100] sm:$0xf]
    %v2825 = vld [vmem:[#allocation8 + $0x104] sm:$0xf]
    %v2826 = vld [vmem:[#allocation8 + $0x108] sm:$0xf]
    %v2827 = vld [vmem:[#allocation8 + $0x10c] sm:$0xf]
    %v2828 = vld [vmem:[#allocation8 + $0x110] sm:$0xf]
    %v2829 = vld [vmem:[#allocation8 + $0x114] sm:$0xf]
    %v2830 = vld [vmem:[#allocation8 + $0x118] sm:$0xf]
    %v2831 = vld [vmem:[#allocation8 + $0x11c] sm:$0xf]
    %v2832 = vld [vmem:[#allocation8 + $0x120] sm:$0xf]
    %v2833 = vld [vmem:[#allocation8 + $0x124] sm:$0xf]
    %v2834 = vld [vmem:[#allocation8 + $0x128] sm:$0xf]
    %v2835 = vld [vmem:[#allocation8 + $0x12c] sm:$0xf]
    %v2836 = vld [vmem:[#allocation8 + $0x130] sm:$0xf]
    %v2837 = vld [vmem:[#allocation8 + $0x134] sm:$0xf]
    %v2838 = vld [vmem:[#allocation8 + $0x138] sm:$0xf]
    %v2839 = vld [vmem:[#allocation8 + $0x13c] sm:$0xf]
    %v2840 = vld [vmem:[#allocation8 + $0x140] sm:$0xf]
    %v2841 = vld [vmem:[#allocation8 + $0x144] sm:$0xf]
    %v2842 = vld [vmem:[#allocation8 + $0x148] sm:$0xf]
    %v2843 = vld [vmem:[#allocation8 + $0x14c] sm:$0xf]
    %v2844 = vld [vmem:[#allocation8 + $0x150] sm:$0xf]
    %v2845 = vld [vmem:[#allocation8 + $0x154] sm:$0xf]
    %v2846 = vld [vmem:[#allocation8 + $0x158] sm:$0xf]
    %v2847 = vld [vmem:[#allocation8 + $0x15c] sm:$0xf]
    %v2848 = vld [vmem:[#allocation8 + $0x160] sm:$0xf]
    %v2849 = vld [vmem:[#allocation8 + $0x164] sm:$0xf]
    %v2850 = vld [vmem:[#allocation8 + $0x168] sm:$0xf]
    %v2851 = vld [vmem:[#allocation8 + $0x16c] sm:$0xf]
    %v2852 = vld [vmem:[#allocation8 + $0x170] sm:$0xf]
    %v2853 = vld [vmem:[#allocation8 + $0x174] sm:$0xf]
    %v2854 = vld [vmem:[#allocation8 + $0x178] sm:$0xf]
    %v2855 = vld [vmem:[#allocation8 + $0x17c] sm:$0xf]
    %v2856 = vld [vmem:[#allocation8 + $0x180] sm:$0xf]
    %v2857 = vld [vmem:[#allocation8 + $0x184] sm:$0xf]
    %v2858 = vld [vmem:[#allocation8 + $0x188] sm:$0xf]
    %v2859 = vld [vmem:[#allocation8 + $0x18c] sm:$0xf]
    %v2860 = vld [vmem:[#allocation8 + $0x190] sm:$0xf]
    %v2861 = vld [vmem:[#allocation8 + $0x194] sm:$0xf]
    %v2862 = vld [vmem:[#allocation8 + $0x198] sm:$0xf]
    %v2863 = vld [vmem:[#allocation8 + $0x19c] sm:$0xf]
    %v2864 = vld [vmem:[#allocation8 + $0x1a0] sm:$0xf]
    %v2865 = vld [vmem:[#allocation8 + $0x1a4] sm:$0xf]
    %v2866 = vld [vmem:[#allocation8 + $0x1a8] sm:$0xf]
    %v2867 = vld [vmem:[#allocation8 + $0x1ac] sm:$0xf]
    %v2868 = vld [vmem:[#allocation8 + $0x1b0] sm:$0xf]
    %v2869 = vld [vmem:[#allocation8 + $0x1b4] sm:$0xf]
    %v2870 = vld [vmem:[#allocation8 + $0x1b8] sm:$0xf]
    %v2871 = vld [vmem:[#allocation8 + $0x1bc] sm:$0xf]
    %v2872 = vld [vmem:[#allocation8 + $0x1c0] sm:$0xf]
    %v2873 = vld [vmem:[#allocation8 + $0x1c4] sm:$0xf]
    %v2874 = vld [vmem:[#allocation8 + $0x1c8] sm:$0xf]
    %v2875 = vld [vmem:[#allocation8 + $0x1cc] sm:$0xf]
    %v2876 = vld [vmem:[#allocation8 + $0x1d0] sm:$0xf]
    %v2877 = vld [vmem:[#allocation8 + $0x1d4] sm:$0xf]
    %v2878 = vld [vmem:[#allocation8 + $0x1d8] sm:$0xf]
    %v2879 = vld [vmem:[#allocation8 + $0x1dc] sm:$0xf]
    %v2880 = vld [vmem:[#allocation8 + $0x1e0] sm:$0xf]
    %v2881 = vld [vmem:[#allocation8 + $0x1e4] sm:$0xf]
    %v2882 = vld [vmem:[#allocation8 + $0x1e8] sm:$0xf]
    %v2883 = vld [vmem:[#allocation8 + $0x1ec] sm:$0xf]
    %v2884 = vld [vmem:[#allocation8 + $0x1f0] sm:$0xf]
    %v2885 = vld [vmem:[#allocation8 + $0x1f4] sm:$0xf]
    %v2886 = vld [vmem:[#allocation8 + $0x1f8] sm:$0xf]
    %v2887 = vld [vmem:[#allocation8 + $0x1fc] sm:$0xf]
    %v2888 = vld [vmem:[%s4] sm:$0x1]
    %v2890 = vperm.slane %v2888, 0
    %v2956 = vunpack.c.l.b16 %v2696
    %v2957 = vunpack.c.l.b16 %v2697
    %v2958 = vunpack.c.l.b16 %v2698
    %v2959 = vunpack.c.l.b16 %v2699
    %v2960 = vunpack.c.l.b16 %v2700
    %v2961 = vunpack.c.l.b16 %v2701
    %v2962 = vunpack.c.l.b16 %v2702
    %v2963 = vunpack.c.l.b16 %v2703
    %v2964 = vunpack.c.l.b16 %v2704
    %v2965 = vunpack.c.l.b16 %v2705
    %v2966 = vunpack.c.l.b16 %v2706
    %v2967 = vunpack.c.l.b16 %v2707
    %v2968 = vunpack.c.l.b16 %v2708
    %v2969 = vunpack.c.l.b16 %v2709
    %v2970 = vunpack.c.l.b16 %v2710
    %v2971 = vunpack.c.l.b16 %v2711
    %v2972 = vunpack.c.l.b16 %v2712
    %v2973 = vunpack.c.l.b16 %v2713
    %v2974 = vunpack.c.l.b16 %v2714
    %v2975 = vunpack.c.l.b16 %v2715
    %v2976 = vunpack.c.l.b16 %v2716
    %v2977 = vunpack.c.l.b16 %v2717
    %v2978 = vunpack.c.l.b16 %v2718
    %v2979 = vunpack.c.l.b16 %v2719
    %v2980 = vunpack.c.l.b16 %v2720
    %v2981 = vunpack.c.l.b16 %v2721
    %v2982 = vunpack.c.l.b16 %v2722
    %v2983 = vunpack.c.l.b16 %v2723
    %v2984 = vunpack.c.l.b16 %v2724
    %v2985 = vunpack.c.l.b16 %v2725
    %v2986 = vunpack.c.l.b16 %v2726
    %v2987 = vunpack.c.l.b16 %v2727
    %v2988 = vunpack.c.l.b16 %v2728
    %v2989 = vunpack.c.l.b16 %v2729
    %v2990 = vunpack.c.l.b16 %v2730
    %v2991 = vunpack.c.l.b16 %v2731
    %v2992 = vunpack.c.l.b16 %v2732
    %v2993 = vunpack.c.l.b16 %v2733
    %v2994 = vunpack.c.l.b16 %v2734
    %v2995 = vunpack.c.l.b16 %v2735
    %v2996 = vunpack.c.l.b16 %v2736
    %v2997 = vunpack.c.l.b16 %v2737
    %v2998 = vunpack.c.l.b16 %v2738
    %v2999 = vunpack.c.l.b16 %v2739
    %v3000 = vunpack.c.l.b16 %v2740
    %v3001 = vunpack.c.l.b16 %v2741
    %v3002 = vunpack.c.l.b16 %v2742
    %v3003 = vunpack.c.l.b16 %v2743
    %v3004 = vunpack.c.l.b16 %v2744
    %v3005 = vunpack.c.l.b16 %v2745
    %v3006 = vunpack.c.l.b16 %v2746
    %v3007 = vunpack.c.l.b16 %v2747
    %v3008 = vunpack.c.l.b16 %v2748
    %v3009 = vunpack.c.l.b16 %v2749
    %v3010 = vunpack.c.l.b16 %v2750
    %v3011 = vunpack.c.l.b16 %v2751
    %v3012 = vunpack.c.l.b16 %v2752
    %v3013 = vunpack.c.l.b16 %v2753
    %v3014 = vunpack.c.l.b16 %v2754
    %v3015 = vunpack.c.l.b16 %v2755
    %v3016 = vunpack.c.l.b16 %v2756
    %v3017 = vunpack.c.l.b16 %v2757
    %v3018 = vunpack.c.l.b16 %v2758
    %v3019 = vunpack.c.l.b16 %v2759
    %v3020 = vrot.slane %v2964, 7
    %vm3021 = vcmask 1041409
    %v3022 = vsel %vm3021, %v3020, %v2956
    %v3023 = vrot.slane %v2972, 6
    %vm3024 = vcmask 1042434
    %v3025 = vsel %vm3024, %v3023, %v3022
    %v3026 = vrot.slane %v2980, 5
    %vm3027 = vcmask 1043459
    %v3028 = vsel %vm3027, %v3026, %v3025
    %v3029 = vrot.slane %v2988, 4
    %vm3030 = vcmask 1044484
    %v3031 = vsel %vm3030, %v3029, %v3028
    %v3032 = vrot.slane %v2996, 3
    %vm3033 = vcmask 1045509
    %v3034 = vsel %vm3033, %v3032, %v3031
    %v3035 = vrot.slane %v3004, 2
    %vm3036 = vcmask 1046534
    %v3037 = vsel %vm3036, %v3035, %v3034
    %v3038 = vrot.slane %v3012, 1
    %vm3039 = vcmask 1047559
    %v3040 = vsel %vm3039, %v3038, %v3037
    %v3041 = vrot.slane %v2965, 7
    %v3042 = vsel %vm3021, %v3041, %v2957
    %v3043 = vrot.slane %v2973, 6
    %v3044 = vsel %vm3024, %v3043, %v3042
    %v3045 = vrot.slane %v2981, 5
    %v3046 = vsel %vm3027, %v3045, %v3044
    %v3047 = vrot.slane %v2989, 4
    %v3048 = vsel %vm3030, %v3047, %v3046
    %v3049 = vrot.slane %v2997, 3
    %v3050 = vsel %vm3033, %v3049, %v3048
    %v3051 = vrot.slane %v3005, 2
    %v3052 = vsel %vm3036, %v3051, %v3050
    %v3053 = vrot.slane %v3013, 1
    %v3054 = vsel %vm3039, %v3053, %v3052
    %v3055 = vrot.slane %v2966, 7
    %v3056 = vsel %vm3021, %v3055, %v2958
    %v3057 = vrot.slane %v2974, 6
    %v3058 = vsel %vm3024, %v3057, %v3056
    %v3059 = vrot.slane %v2982, 5
    %v3060 = vsel %vm3027, %v3059, %v3058
    %v3061 = vrot.slane %v2990, 4
    %v3062 = vsel %vm3030, %v3061, %v3060
    %v3063 = vrot.slane %v2998, 3
    %v3064 = vsel %vm3033, %v3063, %v3062
    %v3065 = vrot.slane %v3006, 2
    %v3066 = vsel %vm3036, %v3065, %v3064
    %v3067 = vrot.slane %v3014, 1
    %v3068 = vsel %vm3039, %v3067, %v3066
    %v3069 = vrot.slane %v2967, 7
    %v3070 = vsel %vm3021, %v3069, %v2959
    %v3071 = vrot.slane %v2975, 6
    %v3072 = vsel %vm3024, %v3071, %v3070
    %v3073 = vrot.slane %v2983, 5
    %v3074 = vsel %vm3027, %v3073, %v3072
    %v3075 = vrot.slane %v2991, 4
    %v3076 = vsel %vm3030, %v3075, %v3074
    %v3077 = vrot.slane %v2999, 3
    %v3078 = vsel %vm3033, %v3077, %v3076
    %v3079 = vrot.slane %v3007, 2
    %v3080 = vsel %vm3036, %v3079, %v3078
    %v3081 = vrot.slane %v3015, 1
    %v3082 = vsel %vm3039, %v3081, %v3080
    %v3083 = vrot.slane %v2968, 7
    %v3084 = vsel %vm3021, %v3083, %v2960
    %v3085 = vrot.slane %v2976, 6
    %v3086 = vsel %vm3024, %v3085, %v3084
    %v3087 = vrot.slane %v2984, 5
    %v3088 = vsel %vm3027, %v3087, %v3086
    %v3089 = vrot.slane %v2992, 4
    %v3090 = vsel %vm3030, %v3089, %v3088
    %v3091 = vrot.slane %v3000, 3
    %v3092 = vsel %vm3033, %v3091, %v3090
    %v3093 = vrot.slane %v3008, 2
    %v3094 = vsel %vm3036, %v3093, %v3092
    %v3095 = vrot.slane %v3016, 1
    %v3096 = vsel %vm3039, %v3095, %v3094
    %v3097 = vrot.slane %v2969, 7
    %v3098 = vsel %vm3021, %v3097, %v2961
    %v3099 = vrot.slane %v2977, 6
    %v3100 = vsel %vm3024, %v3099, %v3098
    %v3101 = vrot.slane %v2985, 5
    %v3102 = vsel %vm3027, %v3101, %v3100
    %v3103 = vrot.slane %v2993, 4
    %v3104 = vsel %vm3030, %v3103, %v3102
    %v3105 = vrot.slane %v3001, 3
    %v3106 = vsel %vm3033, %v3105, %v3104
    %v3107 = vrot.slane %v3009, 2
    %v3108 = vsel %vm3036, %v3107, %v3106
    %v3109 = vrot.slane %v3017, 1
    %v3110 = vsel %vm3039, %v3109, %v3108
    %v3111 = vrot.slane %v2970, 7
    %v3112 = vsel %vm3021, %v3111, %v2962
    %v3113 = vrot.slane %v2978, 6
    %v3114 = vsel %vm3024, %v3113, %v3112
    %v3115 = vrot.slane %v2986, 5
    %v3116 = vsel %vm3027, %v3115, %v3114
    %v3117 = vrot.slane %v2994, 4
    %v3118 = vsel %vm3030, %v3117, %v3116
    %v3119 = vrot.slane %v3002, 3
    %v3120 = vsel %vm3033, %v3119, %v3118
    %v3121 = vrot.slane %v3010, 2
    %v3122 = vsel %vm3036, %v3121, %v3120
    %v3123 = vrot.slane %v3018, 1
    %v3124 = vsel %vm3039, %v3123, %v3122
    %v3125 = vrot.slane %v2971, 7
    %v3126 = vsel %vm3021, %v3125, %v2963
    %v3127 = vrot.slane %v2979, 6
    %v3128 = vsel %vm3024, %v3127, %v3126
    %v3129 = vrot.slane %v2987, 5
    %v3130 = vsel %vm3027, %v3129, %v3128
    %v3131 = vrot.slane %v2995, 4
    %v3132 = vsel %vm3030, %v3131, %v3130
    %v3133 = vrot.slane %v3003, 3
    %v3134 = vsel %vm3033, %v3133, %v3132
    %v3135 = vrot.slane %v3011, 2
    %v3136 = vsel %vm3036, %v3135, %v3134
    %v3137 = vrot.slane %v3019, 1
    %v3138 = vsel %vm3039, %v3137, %v3136
    %v3139 = vpack.c.b16 %v3040, %v3040
    %v3140 = vpack.c.b16 %v3054, %v3054
    %v3141 = vpack.c.b16 %v3068, %v3068
    %v3142 = vpack.c.b16 %v3082, %v3082
    %v3143 = vpack.c.b16 %v3096, %v3096
    %v3144 = vpack.c.b16 %v3110, %v3110
    %v3145 = vpack.c.b16 %v3124, %v3124
    %v3146 = vpack.c.b16 %v3138, %v3138
    %v3283 = vunpack.c.l.b16 %v2760
    %v3284 = vunpack.c.l.b16 %v2761
    %v3285 = vunpack.c.l.b16 %v2762
    %v3286 = vunpack.c.l.b16 %v2763
    %v3287 = vunpack.c.l.b16 %v2764
    %v3288 = vunpack.c.l.b16 %v2765
    %v3289 = vunpack.c.l.b16 %v2766
    %v3290 = vunpack.c.l.b16 %v2767
    %v3291 = vunpack.c.l.b16 %v2768
    %v3292 = vunpack.c.l.b16 %v2769
    %v3293 = vunpack.c.l.b16 %v2770
    %v3294 = vunpack.c.l.b16 %v2771
    %v3295 = vunpack.c.l.b16 %v2772
    %v3296 = vunpack.c.l.b16 %v2773
    %v3297 = vunpack.c.l.b16 %v2774
    %v3298 = vunpack.c.l.b16 %v2775
    %v3299 = vunpack.c.l.b16 %v2776
    %v3300 = vunpack.c.l.b16 %v2777
    %v3301 = vunpack.c.l.b16 %v2778
    %v3302 = vunpack.c.l.b16 %v2779
    %v3303 = vunpack.c.l.b16 %v2780
    %v3304 = vunpack.c.l.b16 %v2781
    %v3305 = vunpack.c.l.b16 %v2782
    %v3306 = vunpack.c.l.b16 %v2783
    %v3307 = vunpack.c.l.b16 %v2784
    %v3308 = vunpack.c.l.b16 %v2785
    %v3309 = vunpack.c.l.b16 %v2786
    %v3310 = vunpack.c.l.b16 %v2787
    %v3311 = vunpack.c.l.b16 %v2788
    %v3312 = vunpack.c.l.b16 %v2789
    %v3313 = vunpack.c.l.b16 %v2790
    %v3314 = vunpack.c.l.b16 %v2791
    %v3315 = vunpack.c.l.b16 %v2792
    %v3316 = vunpack.c.l.b16 %v2793
    %v3317 = vunpack.c.l.b16 %v2794
    %v3318 = vunpack.c.l.b16 %v2795
    %v3319 = vunpack.c.l.b16 %v2796
    %v3320 = vunpack.c.l.b16 %v2797
    %v3321 = vunpack.c.l.b16 %v2798
    %v3322 = vunpack.c.l.b16 %v2799
    %v3323 = vunpack.c.l.b16 %v2800
    %v3324 = vunpack.c.l.b16 %v2801
    %v3325 = vunpack.c.l.b16 %v2802
    %v3326 = vunpack.c.l.b16 %v2803
    %v3327 = vunpack.c.l.b16 %v2804
    %v3328 = vunpack.c.l.b16 %v2805
    %v3329 = vunpack.c.l.b16 %v2806
    %v3330 = vunpack.c.l.b16 %v2807
    %v3331 = vunpack.c.l.b16 %v2808
    %v3332 = vunpack.c.l.b16 %v2809
    %v3333 = vunpack.c.l.b16 %v2810
    %v3334 = vunpack.c.l.b16 %v2811
    %v3335 = vunpack.c.l.b16 %v2812
    %v3336 = vunpack.c.l.b16 %v2813
    %v3337 = vunpack.c.l.b16 %v2814
    %v3338 = vunpack.c.l.b16 %v2815
    %v3339 = vunpack.c.l.b16 %v2816
    %v3340 = vunpack.c.l.b16 %v2817
    %v3341 = vunpack.c.l.b16 %v2818
    %v3342 = vunpack.c.l.b16 %v2819
    %v3343 = vunpack.c.l.b16 %v2820
    %v3344 = vunpack.c.l.b16 %v2821
    %v3345 = vunpack.c.l.b16 %v2822
    %v3346 = vunpack.c.l.b16 %v2823
    %v3347 = vunpack.c.l.b16 %v2824
    %v3348 = vunpack.c.l.b16 %v2825
    %v3349 = vunpack.c.l.b16 %v2826
    %v3350 = vunpack.c.l.b16 %v2827
    %v3351 = vunpack.c.l.b16 %v2828
    %v3352 = vunpack.c.l.b16 %v2829
    %v3353 = vunpack.c.l.b16 %v2830
    %v3354 = vunpack.c.l.b16 %v2831
    %v3355 = vunpack.c.l.b16 %v2832
    %v3356 = vunpack.c.l.b16 %v2833
    %v3357 = vunpack.c.l.b16 %v2834
    %v3358 = vunpack.c.l.b16 %v2835
    %v3359 = vunpack.c.l.b16 %v2836
    %v3360 = vunpack.c.l.b16 %v2837
    %v3361 = vunpack.c.l.b16 %v2838
    %v3362 = vunpack.c.l.b16 %v2839
    %v3363 = vunpack.c.l.b16 %v2840
    %v3364 = vunpack.c.l.b16 %v2841
    %v3365 = vunpack.c.l.b16 %v2842
    %v3366 = vunpack.c.l.b16 %v2843
    %v3367 = vunpack.c.l.b16 %v2844
    %v3368 = vunpack.c.l.b16 %v2845
    %v3369 = vunpack.c.l.b16 %v2846
    %v3370 = vunpack.c.l.b16 %v2847
    %v3371 = vunpack.c.l.b16 %v2848
    %v3372 = vunpack.c.l.b16 %v2849
    %v3373 = vunpack.c.l.b16 %v2850
    %v3374 = vunpack.c.l.b16 %v2851
    %v3375 = vunpack.c.l.b16 %v2852
    %v3376 = vunpack.c.l.b16 %v2853
    %v3377 = vunpack.c.l.b16 %v2854
    %v3378 = vunpack.c.l.b16 %v2855
    %v3379 = vunpack.c.l.b16 %v2856
    %v3380 = vunpack.c.l.b16 %v2857
    %v3381 = vunpack.c.l.b16 %v2858
    %v3382 = vunpack.c.l.b16 %v2859
    %v3383 = vunpack.c.l.b16 %v2860
    %v3384 = vunpack.c.l.b16 %v2861
    %v3385 = vunpack.c.l.b16 %v2862
    %v3386 = vunpack.c.l.b16 %v2863
    %v3387 = vunpack.c.l.b16 %v2864
    %v3388 = vunpack.c.l.b16 %v2865
    %v3389 = vunpack.c.l.b16 %v2866
    %v3390 = vunpack.c.l.b16 %v2867
    %v3391 = vunpack.c.l.b16 %v2868
    %v3392 = vunpack.c.l.b16 %v2869
    %v3393 = vunpack.c.l.b16 %v2870
    %v3394 = vunpack.c.l.b16 %v2871
    %v3395 = vunpack.c.l.b16 %v2872
    %v3396 = vunpack.c.l.b16 %v2873
    %v3397 = vunpack.c.l.b16 %v2874
    %v3398 = vunpack.c.l.b16 %v2875
    %v3399 = vunpack.c.l.b16 %v2876
    %v3400 = vunpack.c.l.b16 %v2877
    %v3401 = vunpack.c.l.b16 %v2878
    %v3402 = vunpack.c.l.b16 %v2879
    %v3403 = vunpack.c.l.b16 %v2880
    %v3404 = vunpack.c.l.b16 %v2881
    %v3405 = vunpack.c.l.b16 %v2882
    %v3406 = vunpack.c.l.b16 %v2883
    %v3407 = vunpack.c.l.b16 %v2884
    %v3408 = vunpack.c.l.b16 %v2885
    %v3409 = vunpack.c.l.b16 %v2886
    %v3410 = vunpack.c.l.b16 %v2887
    %v3411 = vpack.c.b16 %v3284, %v3283
    %v3412 = vpack.c.b16 %v3286, %v3285
    %v3413 = vpack.c.b16 %v3288, %v3287
    %v3414 = vpack.c.b16 %v3290, %v3289
    %v3415 = vpack.c.b16 %v3292, %v3291
    %v3416 = vpack.c.b16 %v3294, %v3293
    %v3417 = vpack.c.b16 %v3296, %v3295
    %v3418 = vpack.c.b16 %v3298, %v3297
    %v3419 = vpack.c.b16 %v3300, %v3299
    %v3420 = vpack.c.b16 %v3302, %v3301
    %v3421 = vpack.c.b16 %v3304, %v3303
    %v3422 = vpack.c.b16 %v3306, %v3305
    %v3423 = vpack.c.b16 %v3308, %v3307
    %v3424 = vpack.c.b16 %v3310, %v3309
    %v3425 = vpack.c.b16 %v3312, %v3311
    %v3426 = vpack.c.b16 %v3314, %v3313
    %v3427 = vpack.c.b16 %v3316, %v3315
    %v3428 = vpack.c.b16 %v3318, %v3317
    %v3429 = vpack.c.b16 %v3320, %v3319
    %v3430 = vpack.c.b16 %v3322, %v3321
    %v3431 = vpack.c.b16 %v3324, %v3323
    %v3432 = vpack.c.b16 %v3326, %v3325
    %v3433 = vpack.c.b16 %v3328, %v3327
    %v3434 = vpack.c.b16 %v3330, %v3329
    %v3435 = vpack.c.b16 %v3332, %v3331
    %v3436 = vpack.c.b16 %v3334, %v3333
    %v3437 = vpack.c.b16 %v3336, %v3335
    %v3438 = vpack.c.b16 %v3338, %v3337
    %v3439 = vpack.c.b16 %v3340, %v3339
    %v3440 = vpack.c.b16 %v3342, %v3341
    %v3441 = vpack.c.b16 %v3344, %v3343
    %v3442 = vpack.c.b16 %v3346, %v3345
    %v3443 = vpack.c.b16 %v3348, %v3347
    %v3444 = vpack.c.b16 %v3350, %v3349
    %v3445 = vpack.c.b16 %v3352, %v3351
    %v3446 = vpack.c.b16 %v3354, %v3353
    %v3447 = vpack.c.b16 %v3356, %v3355
    %v3448 = vpack.c.b16 %v3358, %v3357
    %v3449 = vpack.c.b16 %v3360, %v3359
    %v3450 = vpack.c.b16 %v3362, %v3361
    %v3451 = vpack.c.b16 %v3364, %v3363
    %v3452 = vpack.c.b16 %v3366, %v3365
    %v3453 = vpack.c.b16 %v3368, %v3367
    %v3454 = vpack.c.b16 %v3370, %v3369
    %v3455 = vpack.c.b16 %v3372, %v3371
    %v3456 = vpack.c.b16 %v3374, %v3373
    %v3457 = vpack.c.b16 %v3376, %v3375
    %v3458 = vpack.c.b16 %v3378, %v3377
    %v3459 = vpack.c.b16 %v3380, %v3379
    %v3460 = vpack.c.b16 %v3382, %v3381
    %v3461 = vpack.c.b16 %v3384, %v3383
    %v3462 = vpack.c.b16 %v3386, %v3385
    %v3463 = vpack.c.b16 %v3388, %v3387
    %v3464 = vpack.c.b16 %v3390, %v3389
    %v3465 = vpack.c.b16 %v3392, %v3391
    %v3466 = vpack.c.b16 %v3394, %v3393
    %v3467 = vpack.c.b16 %v3396, %v3395
    %v3468 = vpack.c.b16 %v3398, %v3397
    %v3469 = vpack.c.b16 %v3400, %v3399
    %v3470 = vpack.c.b16 %v3402, %v3401
    %v3471 = vpack.c.b16 %v3404, %v3403
    %v3472 = vpack.c.b16 %v3406, %v3405
    %v3473 = vpack.c.b16 %v3408, %v3407
    %v3474 = vpack.c.b16 %v3410, %v3409
    %3539 = vmatpush.bf16.msra.mxu0 %v3418
    %3540 = vmatpush.bf16.msra.mxu0 %v3417
    %3541 = vmatpush.bf16.msra.mxu0 %v3416
    %3542 = vmatpush.bf16.msra.mxu0 %v3415
    %3543 = vmatpush.bf16.msra.mxu0 %v3414
    %3544 = vmatpush.bf16.msra.mxu0 %v3413
    %3545 = vmatpush.bf16.msra.mxu0 %v3412
    %3546 = vmatpush.bf16.msra.mxu0 %v3411
    %3547 = vmatmul.bf16.gmra.mxu0 %v3139
    %v3548 = vpop.f32.mrf.mxu0
    %v3549 = vadd.f32 %v2890, %v3548
    %v3550 = vpop.f32.mrf.mxu0
    %3551 = vdwg.mxu0
    %3552 = vmatpush.bf16.msra.mxu0 %v3426
    %3553 = vmatpush.bf16.msra.mxu0 %v3425
    %3554 = vmatpush.bf16.msra.mxu0 %v3424
    %3555 = vmatpush.bf16.msra.mxu0 %v3423
    %3556 = vmatpush.bf16.msra.mxu0 %v3422
    %3557 = vmatpush.bf16.msra.mxu0 %v3421
    %3558 = vmatpush.bf16.msra.mxu0 %v3420
    %3559 = vmatpush.bf16.msra.mxu0 %v3419
    %3560 = vmatmul.bf16.gmra.mxu0 %v3140
    %v3561 = vpop.f32.mrf.mxu0
    %v3562 = vadd.f32 %v3549, %v3561
    %v3563 = vpop.f32.mrf.mxu0
    %3564 = vdwg.mxu0
    %3565 = vmatpush.bf16.msra.mxu0 %v3434
    %3566 = vmatpush.bf16.msra.mxu0 %v3433
    %3567 = vmatpush.bf16.msra.mxu0 %v3432
    %3568 = vmatpush.bf16.msra.mxu0 %v3431
    %3569 = vmatpush.bf16.msra.mxu0 %v3430
    %3570 = vmatpush.bf16.msra.mxu0 %v3429
    %3571 = vmatpush.bf16.msra.mxu0 %v3428
    %3572 = vmatpush.bf16.msra.mxu0 %v3427
    %3573 = vmatmul.bf16.gmra.mxu0 %v3141
    %v3574 = vpop.f32.mrf.mxu0
    %v3575 = vadd.f32 %v3562, %v3574
    %v3576 = vpop.f32.mrf.mxu0
    %3577 = vdwg.mxu0
    %3578 = vmatpush.bf16.msra.mxu0 %v3442
    %3579 = vmatpush.bf16.msra.mxu0 %v3441
    %3580 = vmatpush.bf16.msra.mxu0 %v3440
    %3581 = vmatpush.bf16.msra.mxu0 %v3439
    %3582 = vmatpush.bf16.msra.mxu0 %v3438
    %3583 = vmatpush.bf16.msra.mxu0 %v3437
    %3584 = vmatpush.bf16.msra.mxu0 %v3436
    %3585 = vmatpush.bf16.msra.mxu0 %v3435
    %3586 = vmatmul.bf16.gmra.mxu0 %v3142
    %v3587 = vpop.f32.mrf.mxu0
    %v3588 = vadd.f32 %v3575, %v3587
    %v3589 = vpop.f32.mrf.mxu0
    %3590 = vdwg.mxu0
    %3591 = vmatpush.bf16.msra.mxu0 %v3450
    %3592 = vmatpush.bf16.msra.mxu0 %v3449
    %3593 = vmatpush.bf16.msra.mxu0 %v3448
    %3594 = vmatpush.bf16.msra.mxu0 %v3447
    %3595 = vmatpush.bf16.msra.mxu0 %v3446
    %3596 = vmatpush.bf16.msra.mxu0 %v3445
    %3597 = vmatpush.bf16.msra.mxu0 %v3444
    %3598 = vmatpush.bf16.msra.mxu0 %v3443
    %3599 = vmatmul.bf16.gmra.mxu0 %v3143
    %v3600 = vpop.f32.mrf.mxu0
    %v3601 = vadd.f32 %v3588, %v3600
    %v3602 = vpop.f32.mrf.mxu0
    %3603 = vdwg.mxu0
    %3604 = vmatpush.bf16.msra.mxu0 %v3458
    %3605 = vmatpush.bf16.msra.mxu0 %v3457
    %3606 = vmatpush.bf16.msra.mxu0 %v3456
    %3607 = vmatpush.bf16.msra.mxu0 %v3455
    %3608 = vmatpush.bf16.msra.mxu0 %v3454
    %3609 = vmatpush.bf16.msra.mxu0 %v3453
    %3610 = vmatpush.bf16.msra.mxu0 %v3452
    %3611 = vmatpush.bf16.msra.mxu0 %v3451
    %3612 = vmatmul.bf16.gmra.mxu0 %v3144
    %v3613 = vpop.f32.mrf.mxu0
    %v3614 = vadd.f32 %v3601, %v3613
    %v3615 = vpop.f32.mrf.mxu0
    %3616 = vdwg.mxu0
    %3617 = vmatpush.bf16.msra.mxu0 %v3466
    %3618 = vmatpush.bf16.msra.mxu0 %v3465
    %3619 = vmatpush.bf16.msra.mxu0 %v3464
    %3620 = vmatpush.bf16.msra.mxu0 %v3463
    %3621 = vmatpush.bf16.msra.mxu0 %v3462
    %3622 = vmatpush.bf16.msra.mxu0 %v3461
    %3623 = vmatpush.bf16.msra.mxu0 %v3460
    %3624 = vmatpush.bf16.msra.mxu0 %v3459
    %3625 = vmatmul.bf16.gmra.mxu0 %v3145
    %v3626 = vpop.f32.mrf.mxu0
    %v3627 = vadd.f32 %v3614, %v3626
    %v3628 = vpop.f32.mrf.mxu0
    %3629 = vdwg.mxu0
    %3630 = vmatpush.bf16.msra.mxu0 %v3474
    %3631 = vmatpush.bf16.msra.mxu0 %v3473
    %3632 = vmatpush.bf16.msra.mxu0 %v3472
    %3633 = vmatpush.bf16.msra.mxu0 %v3471
    %3634 = vmatpush.bf16.msra.mxu0 %v3470
    %3635 = vmatpush.bf16.msra.mxu0 %v3469
    %3636 = vmatpush.bf16.msra.mxu0 %v3468
    %3637 = vmatpush.bf16.msra.mxu0 %v3467
    %3638 = vmatmul.bf16.gmra.mxu0 %v3146
    %v3639 = vpop.f32.mrf.mxu0
    %v3640 = vadd.f32 %v3627, %v3639
    %v3641 = vpop.f32.mrf.mxu0
    %3642 = vdwg.mxu0
    %v3643 = vlaneseq
    %v3644 = vand.u32 %v3643, 127
    %vm3645 = vcmp.lt.s32.totalorder %v3644, 2
    %v3646 = vsel %vm3645, %v3640, -1e+30
    %3647 = vmax.xlane.f32.xlu0 %v3646
    %v3648 = vpop.xlane.xlu0 %3647
    %v3649 = vsub.f32 %v3640, %v3648
    %v3650 = vmul.f32 %v3649, 1.442695
    %v3651 = vpow.pop %v3650
    %v3652 = vsel %vm3645, %v3651, 0.0
    %3653 = vadd.xlane.f32.xlu0 %v3652
    %v3654 = vpop.xlane.xlu0 %3653
    %v3655 = vlog2.pop %v3654
    %v3656 = vmul.f32 %v3655, 0.6931472
    %v3657 = vsub.f32 %v3649, %v3656
    %3658 = vst [vmem:[#allocation11] sm:$0xff] %v3657
    // Predicated region
    $region46: #{tpu_custom_call.1} parent=1 // pred_check
      _
    $region47: #{tpu_custom_call.1} parent=1 // pred_check_branch
      %3660 = sbr.rel (0) target = $region49
    $region48: #{tpu_custom_call.1} parent=1 // pred_region
      %3662 = vsyncadd [#allocation4], 0
      %s3664 = sshll.u32 [#allocation11], 4
      %s3665 = int_to_ptr.vmem [resolvable:$true] %s3664
      %s3666 = sshll.u32 %s6, 4
      %s3667 = int_to_ptr.hbm [resolvable:$true] %s3666
      %3669 = dma.vmem_to_hbm [thread:$0]  %s3665, 128, %s3667, [#allocation4]
    $region49: #{tpu_custom_call.1} parent=1 // pred_fallthru
      _
    // Predicated region
    $region50: #{tpu_custom_call.1} parent=1 // pred_check
      _
    $region51: #{tpu_custom_call.1} parent=1 // pred_check_branch
      %3671 = sbr.rel (0) target = $region53
    $region52: #{tpu_custom_call.1} parent=1 // pred_region
      %3673 = dma.done [#allocation4], 128
    $region53: #{tpu_custom_call.1} parent=1 // pred_fallthru
      _
    %3674 = vsyncpa [#allocation3], 1
    %3675 = vsyncpa [#allocation6], 1
    %3676 = vsyncpa [#allocation9], 1
    %3677 = vsyncpa [#allocation4], 1

</llo_original>
